<compile_context>
chip_gen: v7x
topology: tpu7x:2x2x1
jax: 0.10.0
libtpu: 0.0.40
codegen_flags: <defaults>
</compile_context>

<pallas_src>
import math

import jax
import jax.numpy as jnp
import numpy as np
from jax.experimental import pallas as pl
from jax.experimental.pallas import tpu as pltpu

# ----------------------------- module config --------------------------------
DIMS = [32, 32, 32, 32]
LATENT_IN = (2,)
XYZ_IN_ALL = None          # not used in this config
ACTIVATION = "None"        # use_activation == False
OUTPUT_DIM = 1
XYZ = 3                    # latent_size = 0 -> input channels = 3
XPAD = 8                   # xyz feed padded to one sublane group; row XYZ carries the ones

TN_MAX = 2048              # max points per grid step (lane-aligned); safe on v5e too
MIN_TILES = 4              # keep >= 4 grid steps so v7x's two TCs both get work
MAXC = ((max(DIMS + [OUTPUT_DIM]) + 7) // 8) * 8    # padded hidden channel width (=32)
OUT_PAD = ((OUTPUT_DIM + 7) // 8) * 8               # padded final-layer width (=8)


def layer_shapes():
    """Replicates the shape logic of Decoder.__init__ (latent_size = 0)."""
    dims = [XYZ] + DIMS + [OUTPUT_DIM]
    num_layers = len(dims)
    shapes = []
    for l in range(num_layers - 1):
        if l + 1 in LATENT_IN:
            out_dim = dims[l + 1] - dims[0]
        else:
            out_dim = dims[l + 1]
            if XYZ_IN_ALL and l != num_layers - 2:
                out_dim -= 3
        shapes.append((dims[l], out_dim))   # Conv1d(dims[l], out_dim, 1)
    return shapes, num_layers


def init_params(key):
    """Deterministic init matching the PyTorch __init__ distributions.

    Weights kept in Conv1d orientation (out_dim, in_dim); biases (out_dim,).
    """
    shapes, num_layers = layer_shapes()
    params = []
    for l, (in_dim, out_dim) in enumerate(shapes):
        key, kw = jax.random.split(key)
        if l == num_layers - 2:
            mean = 2.0 * math.sqrt(math.pi) / math.sqrt(in_dim)
            w = mean + 1e-4 * jax.random.normal(kw, (out_dim, in_dim), jnp.float32)
            b = jnp.full((out_dim,), -1.0, jnp.float32)
        else:
            std = math.sqrt(2.0) / math.sqrt(out_dim)
            w = std * jax.random.normal(kw, (out_dim, in_dim), jnp.float32)
            b = jnp.zeros((out_dim,), jnp.float32)
        params.append((w, b))
    return params


def _pack_layer(l, in_dim, out_dim, w, b, row_pad):
    """Split one Conv1d layer into (wh, wxb).

    wh  (row_pad, MAXC) or None : weight acting on the hidden activations.
    wxb (row_pad, XPAD)         : columns 0..2 act on raw xyz (zero if the layer
        does not consume xyz); column XYZ (the constant-ones channel) carries
        the bias, so bias addition happens inside the MXU accumulation.
    torch.cat([x, input], 1) order (hidden first, xyz second) -> split
    w[:, :in_dim-3] onto h and w[:, in_dim-3:] onto xyz for latent_in layers.
    """
    w = np.asarray(w, np.float32)
    b = np.asarray(b, np.float32)
    wh = None
    wxb = np.zeros((row_pad, XPAD), np.float32)
    if l == 0:
        wxb[:out_dim, :XYZ] = w
    elif l in LATENT_IN:
        h_in = in_dim - XYZ
        wh = np.zeros((row_pad, MAXC), np.float32)
        wh[:out_dim, :h_in] = w[:, :h_in]
        wxb[:out_dim, :XYZ] = w[:, h_in:]
    else:
        wh = np.zeros((row_pad, MAXC), np.float32)
        wh[:out_dim, :in_dim] = w
    wxb[:out_dim, XYZ] = b
    return wh, wxb


def pack_params(params):
    """Pack weights into zero-padded, VMEM-resident slabs.

    wx_slab (n_fc-1, MAXC, XPAD): xyz+bias slab for every non-final layer.
    w_slab  (n_h,    MAXC, MAXC): hidden-side weights for non-final layers.
    w_last  (OUT_PAD, MAXC), wx_last (OUT_PAD, XPAD): final layer (only 8 rows,
        not MAXC, so the last matmul emits an (8, TN) result).
    meta[l] = w_slab index (or None) for non-final layer l.
    Zero padding keeps unused channels exactly 0 through ReLU.
    """
    shapes, _ = layer_shapes()
    n_fc = len(shapes)
    wx_list, w_list, meta = [], [], []
    for l in range(n_fc - 1):
        (in_dim, out_dim) = shapes[l]
        w, b = params[l]
        wh, wxb = _pack_layer(l, in_dim, out_dim, w, b, MAXC)
        w_idx = None
        if wh is not None:
            w_idx = len(w_list)
            w_list.append(wh)
        wx_list.append(wxb)
        meta.append(w_idx)
    # final layer: padded only to OUT_PAD rows
    (in_dim, out_dim) = shapes[-1]
    w, b = params[-1]
    wl, wxl = _pack_layer(n_fc - 1, in_dim, out_dim, w, b, OUT_PAD)
    if wl is None:   # degenerate single-layer config; not hit here
        wl = np.zeros((OUT_PAD, MAXC), np.float32)
    return (jnp.asarray(np.stack(wx_list, 0)),
            jnp.asarray(np.stack(w_list, 0)),
            jnp.asarray(wl),
            jnp.asarray(wxl),
            tuple(meta))


# ------------------------------- kernel --------------------------------------
def make_decoder_kernel(meta, output_dim):
    def kernel(x_ref, wx_ref, w_ref, wl_ref, wxl_ref, o_ref):
        x8 = x_ref[...]                          # (XPAD, TN) channels-first; row XYZ == 1
        h = None                                 # hidden activations, (MAXC, TN)
        for l, w_idx in enumerate(meta):
            # bias rides the ones channel of x8, so every layer is pure MXU:
            xz = jnp.dot(wx_ref[l], x8, preferred_element_type=jnp.float32)
            if w_idx is None:
                acc = xz
            else:
                # matmul-first chain (MRB-accumulate friendly on v7x)
                acc = jnp.dot(w_ref[w_idx], h,
                              preferred_element_type=jnp.float32) + xz
            h = jnp.maximum(acc, 0.0)            # ReLU on all but the last layer
        out = (jnp.dot(wl_ref[...], h, preferred_element_type=jnp.float32)
               + jnp.dot(wxl_ref[...], x8, preferred_element_type=jnp.float32))
        # use_activation is False for activation == 'None'
        o_ref[...] = out[:output_dim, :].astype(o_ref.dtype)

    return kernel


def decoder_forward(points, packed, *, tn_max=TN_MAX):
    """points: (N, XYZ) f32 -> (N, OUTPUT_DIM) f32 (N arbitrary; padded to tiles)."""
    wx_slab, w_slab, w_last, wx_last, meta = packed
    shapes, _ = layer_shapes()
    N = points.shape[0]

    # Tile size: large to amortize the ~0.35us/step grid overhead, but keep
    # >= MIN_TILES steps so the "parallel" axis can shard across both v7x TCs.
    tn = min(tn_max, max(128, ((pl.cdiv(N, MIN_TILES) + 127) // 128) * 128))
    n_tiles = pl.cdiv(N, tn)
    n_pad = n_tiles * tn

    # Channels-first xyz feed (XPAD, n_pad): contiguous lane-dense DMA tiles.
    # Row XYZ is the constant-ones channel carrying the biases through the MXU.
    xT = points.T.astype(jnp.float32)                               # (3, N)
    x8 = jnp.concatenate(
        [xT,
         jnp.ones((1, N), jnp.float32),
         jnp.zeros((XPAD - XYZ - 1, N), jnp.float32)], axis=0)      # (XPAD, N)
    if n_pad != N:
        x8 = jnp.pad(x8, ((0, 0), (0, n_pad - N)))

    kernel = make_decoder_kernel(meta, OUTPUT_DIM)

    flops_per_pt = 2 * sum(i * o for i, o in shapes)
    cost = pl.CostEstimate(
        flops=flops_per_pt * n_pad,
        transcendentals=0,
        bytes_accessed=4 * n_pad * (XPAD + OUTPUT_DIM)
        + 4 * (wx_slab.size + w_slab.size + w_last.size + wx_last.size),
    )

    out = pl.pallas_call(
        kernel,
        out_shape=jax.ShapeDtypeStruct((OUTPUT_DIM, n_pad), jnp.float32),
        grid_spec=pltpu.PrefetchScalarGridSpec(
            num_scalar_prefetch=0,
            grid=(n_tiles,),
            in_specs=[
                # points tile: channels-first, (8, TN), contiguous + lane dense
                pl.BlockSpec((XPAD, tn), lambda i: (0, i)),
                # weight slabs: constant index_map -> DMA'd once, VMEM-resident
                pl.BlockSpec(wx_slab.shape, lambda i: (0, 0, 0)),
                pl.BlockSpec(w_slab.shape, lambda i: (0, 0, 0)),
                pl.BlockSpec(w_last.shape, lambda i: (0, 0)),
                pl.BlockSpec(wx_last.shape, lambda i: (0, 0)),
            ],
            # lane-dense output blocks: (OUTPUT_DIM, TN), not (TN, 1)
            out_specs=pl.BlockSpec((OUTPUT_DIM, tn), lambda i: (0, i)),
        ),
        compiler_params=pltpu.CompilerParams(
            dimension_semantics=("parallel",),
        ),
        cost_estimate=cost,
    )(x8, wx_slab, w_slab, w_last, wx_last)

    # (OUTPUT_DIM, n_pad) -> (N, OUTPUT_DIM); metadata-only for OUTPUT_DIM == 1.
    return out[:, :N].T


# ----------------------------- pure-JAX reference ----------------------------
def decoder_ref(points, params):
    _, num_layers = layer_shapes()
    xyz = points
    h = xyz
    for l, (w, b) in enumerate(params):
        if l in LATENT_IN:
            h = jnp.concatenate([h, xyz], axis=-1)   # torch.cat([x, input], 1)
        h = h @ w.T + b
        if l < num_layers - 2:
            h = jnp.maximum(h, 0.0)
    return h


# ---------------------------------- main --------------------------------------
if __name__ == "__main__":
    key = jax.random.PRNGKey(0)
    kp, kx = jax.random.split(key)

    params = init_params(kp)
    packed = pack_params(params)

    # Non-multiple of the tile size exercises the pad path; N=4000 -> tn=1024,
    # 4 grid steps (megacore-shardable on v7x).
    N = 4000
    points = jax.random.normal(kx, (N, XYZ), jnp.float32)   # module input: (N, 3)

    out = decoder_forward(points, packed)
    out = jax.block_until_ready(out)

    ref = decoder_ref(points, params)
    np.testing.assert_allclose(np.asarray(out), np.asarray(ref), rtol=1e-4, atol=1e-4)
    assert out.shape == (N, OUTPUT_DIM)

    print("KERNEL_OK")
</pallas_src>

<mosaic_0001>
module attributes {stable_mosaic.version = 11 : i64} {
  func.func @kernel(%arg0: i32, %arg1: memref<8x1024xf32, #tpu.memory_space<vmem>>, %arg2: memref<4x32x8xf32, #tpu.memory_space<vmem>>, %arg3: memref<3x32x32xf32, #tpu.memory_space<vmem>>, %arg4: memref<8x32xf32, #tpu.memory_space<vmem>>, %arg5: memref<8x8xf32, #tpu.memory_space<vmem>>, %arg6: memref<1x1024xf32, #tpu.memory_space<vmem>>) attributes {dimension_semantics = [#tpu.dimension_semantics<parallel>], iteration_bounds = array<i64: 4>, scalar_prefetch = 0 : i64, scratch_operands = 0 : i64, tpu.core_type = #tpu.core_type<tc>, window_params = [{transform_indices = @transform_0, window_bounds = array<i64: 8, 1024>}, {pipeline_mode = #tpu.pipeline_mode<synchronous>, transform_indices = @transform_1, window_bounds = array<i64: 4, 32, 8>}, {pipeline_mode = #tpu.pipeline_mode<synchronous>, transform_indices = @transform_2, window_bounds = array<i64: 3, 32, 32>}, {pipeline_mode = #tpu.pipeline_mode<synchronous>, transform_indices = @transform_3, window_bounds = array<i64: 8, 32>}, {pipeline_mode = #tpu.pipeline_mode<synchronous>, transform_indices = @transform_4, window_bounds = array<i64: 8, 8>}, {transform_indices = @transform_5, window_bounds = array<i64: 1, 1024>}]} {
    %c0 = arith.constant 0 : index
    %c0_0 = arith.constant 0 : index
    %0 = vector.load %arg1[%c0, %c0_0] : memref<8x1024xf32, #tpu.memory_space<vmem>>, vector<8x1024xf32>
    %c0_1 = arith.constant 0 : index
    %c0_2 = arith.constant 0 : index
    %c0_3 = arith.constant 0 : index
    %1 = vector.load %arg2[%c0_1, %c0_2, %c0_3] : memref<4x32x8xf32, #tpu.memory_space<vmem>>, vector<1x32x8xf32>
    %2 = vector.shape_cast %1 : vector<1x32x8xf32> to vector<32x8xf32>
    %cst = arith.constant dense<0.000000e+00> : vector<32x1024xf32>
    %3 = tpu.matmul %2, %0, %cst {dimension_numbers = #tpu.dot_dimension_numbers<[1], [0], [0], [1], [0, 0, 1, 1], [], []>} : vector<32x8xf32>, vector<8x1024xf32>, vector<32x1024xf32> -> vector<32x1024xf32>
    %cst_4 = arith.constant 0.000000e+00 : f32
    %4 = vector.broadcast %cst_4 : f32 to vector<32x1024xf32>
    %5 = arith.maximumf %3, %4 : vector<32x1024xf32>
    %c1 = arith.constant 1 : index
    %c0_5 = arith.constant 0 : index
    %c0_6 = arith.constant 0 : index
    %6 = vector.load %arg2[%c1, %c0_5, %c0_6] : memref<4x32x8xf32, #tpu.memory_space<vmem>>, vector<1x32x8xf32>
    %7 = vector.shape_cast %6 : vector<1x32x8xf32> to vector<32x8xf32>
    %cst_7 = arith.constant dense<0.000000e+00> : vector<32x1024xf32>
    %8 = tpu.matmul %7, %0, %cst_7 {dimension_numbers = #tpu.dot_dimension_numbers<[1], [0], [0], [1], [0, 0, 1, 1], [], []>} : vector<32x8xf32>, vector<8x1024xf32>, vector<32x1024xf32> -> vector<32x1024xf32>
    %c0_8 = arith.constant 0 : index
    %c0_9 = arith.constant 0 : index
    %c0_10 = arith.constant 0 : index
    %9 = vector.load %arg3[%c0_8, %c0_9, %c0_10] : memref<3x32x32xf32, #tpu.memory_space<vmem>>, vector<1x32x32xf32>
    %10 = vector.shape_cast %9 : vector<1x32x32xf32> to vector<32x32xf32>
    %cst_11 = arith.constant dense<0.000000e+00> : vector<32x1024xf32>
    %11 = tpu.matmul %10, %5, %cst_11 {dimension_numbers = #tpu.dot_dimension_numbers<[1], [0], [0], [1], [0, 0, 1, 1], [], []>} : vector<32x32xf32>, vector<32x1024xf32>, vector<32x1024xf32> -> vector<32x1024xf32>
    %12 = arith.addf %11, %8 : vector<32x1024xf32>
    %cst_12 = arith.constant 0.000000e+00 : f32
    %13 = vector.broadcast %cst_12 : f32 to vector<32x1024xf32>
    %14 = arith.maximumf %12, %13 : vector<32x1024xf32>
    %c2 = arith.constant 2 : index
    %c0_13 = arith.constant 0 : index
    %c0_14 = arith.constant 0 : index
    %15 = vector.load %arg2[%c2, %c0_13, %c0_14] : memref<4x32x8xf32, #tpu.memory_space<vmem>>, vector<1x32x8xf32>
    %16 = vector.shape_cast %15 : vector<1x32x8xf32> to vector<32x8xf32>
    %cst_15 = arith.constant dense<0.000000e+00> : vector<32x1024xf32>
    %17 = tpu.matmul %16, %0, %cst_15 {dimension_numbers = #tpu.dot_dimension_numbers<[1], [0], [0], [1], [0, 0, 1, 1], [], []>} : vector<32x8xf32>, vector<8x1024xf32>, vector<32x1024xf32> -> vector<32x1024xf32>
    %c1_16 = arith.constant 1 : index
    %c0_17 = arith.constant 0 : index
    %c0_18 = arith.constant 0 : index
    %18 = vector.load %arg3[%c1_16, %c0_17, %c0_18] : memref<3x32x32xf32, #tpu.memory_space<vmem>>, vector<1x32x32xf32>
    %19 = vector.shape_cast %18 : vector<1x32x32xf32> to vector<32x32xf32>
    %cst_19 = arith.constant dense<0.000000e+00> : vector<32x1024xf32>
    %20 = tpu.matmul %19, %14, %cst_19 {dimension_numbers = #tpu.dot_dimension_numbers<[1], [0], [0], [1], [0, 0, 1, 1], [], []>} : vector<32x32xf32>, vector<32x1024xf32>, vector<32x1024xf32> -> vector<32x1024xf32>
    %21 = arith.addf %20, %17 : vector<32x1024xf32>
    %cst_20 = arith.constant 0.000000e+00 : f32
    %22 = vector.broadcast %cst_20 : f32 to vector<32x1024xf32>
    %23 = arith.maximumf %21, %22 : vector<32x1024xf32>
    %c3 = arith.constant 3 : index
    %c0_21 = arith.constant 0 : index
    %c0_22 = arith.constant 0 : index
    %24 = vector.load %arg2[%c3, %c0_21, %c0_22] : memref<4x32x8xf32, #tpu.memory_space<vmem>>, vector<1x32x8xf32>
    %25 = vector.shape_cast %24 : vector<1x32x8xf32> to vector<32x8xf32>
    %cst_23 = arith.constant dense<0.000000e+00> : vector<32x1024xf32>
    %26 = tpu.matmul %25, %0, %cst_23 {dimension_numbers = #tpu.dot_dimension_numbers<[1], [0], [0], [1], [0, 0, 1, 1], [], []>} : vector<32x8xf32>, vector<8x1024xf32>, vector<32x1024xf32> -> vector<32x1024xf32>
    %c2_24 = arith.constant 2 : index
    %c0_25 = arith.constant 0 : index
    %c0_26 = arith.constant 0 : index
    %27 = vector.load %arg3[%c2_24, %c0_25, %c0_26] : memref<3x32x32xf32, #tpu.memory_space<vmem>>, vector<1x32x32xf32>
    %28 = vector.shape_cast %27 : vector<1x32x32xf32> to vector<32x32xf32>
    %cst_27 = arith.constant dense<0.000000e+00> : vector<32x1024xf32>
    %29 = tpu.matmul %28, %23, %cst_27 {dimension_numbers = #tpu.dot_dimension_numbers<[1], [0], [0], [1], [0, 0, 1, 1], [], []>} : vector<32x32xf32>, vector<32x1024xf32>, vector<32x1024xf32> -> vector<32x1024xf32>
    %30 = arith.addf %29, %26 : vector<32x1024xf32>
    %cst_28 = arith.constant 0.000000e+00 : f32
    %31 = vector.broadcast %cst_28 : f32 to vector<32x1024xf32>
    %32 = arith.maximumf %30, %31 : vector<32x1024xf32>
    %c0_29 = arith.constant 0 : index
    %c0_30 = arith.constant 0 : index
    %33 = vector.load %arg4[%c0_29, %c0_30] : memref<8x32xf32, #tpu.memory_space<vmem>>, vector<8x32xf32>
    %cst_31 = arith.constant dense<0.000000e+00> : vector<8x1024xf32>
    %34 = tpu.matmul %33, %32, %cst_31 {dimension_numbers = #tpu.dot_dimension_numbers<[1], [0], [0], [1], [0, 0, 1, 1], [], []>} : vector<8x32xf32>, vector<32x1024xf32>, vector<8x1024xf32> -> vector<8x1024xf32>
    %c0_32 = arith.constant 0 : index
    %c0_33 = arith.constant 0 : index
    %35 = vector.load %arg5[%c0_32, %c0_33] : memref<8x8xf32, #tpu.memory_space<vmem>>, vector<8x8xf32>
    %cst_34 = arith.constant dense<0.000000e+00> : vector<8x1024xf32>
    %36 = tpu.matmul %35, %0, %cst_34 {dimension_numbers = #tpu.dot_dimension_numbers<[1], [0], [0], [1], [0, 0, 1, 1], [], []>} : vector<8x8xf32>, vector<8x1024xf32>, vector<8x1024xf32> -> vector<8x1024xf32>
    %37 = arith.addf %34, %36 : vector<8x1024xf32>
    %38 = vector.extract_strided_slice %37 {offsets = [0, 0], sizes = [1, 1024], strides = [1, 1]} : vector<8x1024xf32> to vector<1x1024xf32>
    %c0_35 = arith.constant 0 : index
    %c0_36 = arith.constant 0 : index
    %39 = vector.load %arg6[%c0_35, %c0_36] : memref<1x1024xf32, #tpu.memory_space<vmem>>, vector<1x1024xf32>
    tpu.vector_store %arg6[%c0_35, %c0_36], %38 {strides = array<i32>} : memref<1x1024xf32, #tpu.memory_space<vmem>>, vector<1x1024xf32>,
    return
  }
  func.func @transform_0(%arg0: i32) -> (i32, i32) {
    %c0_i32 = arith.constant 0 : i32
    %c0_i32_0 = arith.constant 0 : i32
    return %c0_i32, %arg0 : i32, i32
  }
  func.func @transform_1(%arg0: i32) -> (i32, i32, i32) {
    %c0_i32 = arith.constant 0 : i32
    %c0_i32_0 = arith.constant 0 : i32
    %c0_i32_1 = arith.constant 0 : i32
    %c0_i32_2 = arith.constant 0 : i32
    return %c0_i32, %c0_i32_0, %c0_i32_1 : i32, i32, i32
  }
  func.func @transform_2(%arg0: i32) -> (i32, i32, i32) {
    %c0_i32 = arith.constant 0 : i32
    %c0_i32_0 = arith.constant 0 : i32
    %c0_i32_1 = arith.constant 0 : i32
    %c0_i32_2 = arith.constant 0 : i32
    return %c0_i32, %c0_i32_0, %c0_i32_1 : i32, i32, i32
  }
  func.func @transform_3(%arg0: i32) -> (i32, i32) {
    %c0_i32 = arith.constant 0 : i32
    %c0_i32_0 = arith.constant 0 : i32
    %c0_i32_1 = arith.constant 0 : i32
    return %c0_i32, %c0_i32_0 : i32, i32
  }
  func.func @transform_4(%arg0: i32) -> (i32, i32) {
    %c0_i32 = arith.constant 0 : i32
    %c0_i32_0 = arith.constant 0 : i32
    %c0_i32_1 = arith.constant 0 : i32
    return %c0_i32, %c0_i32_0 : i32, i32
  }
  func.func @transform_5(%arg0: i32) -> (i32, i32) {
    %c0_i32 = arith.constant 0 : i32
    %c0_i32_0 = arith.constant 0 : i32
    return %c0_i32, %arg0 : i32, i32
  }
}

</mosaic_0001>

<llo_original>
// kernel: tpu_custom_call.1
$region0: #{tpu_custom_call.1}
  #allocation0 [shape = 'u32[]', space=smem, size = 0x4, offset = 0x4, fixed_abs, tag = 'smem constant byte address 0x4 - core index']
  #allocation1 [shape = 'u32[144,128]{1,0:T(1,128)}', space=vmem, size = 0x12000, scoped, tag = 'internal scratch']
  %s0 = inlined_call_operand.hbm [shape: f32[8,4096], index: 0, kind: input, shape index: {}]
  %s1 = inlined_call_operand.vmem [shape: f32[4,32,8], index: 1, kind: input, shape index: {}]
  %s2 = inlined_call_operand.vmem [shape: f32[3,32,32], index: 2, kind: input, shape index: {}]
  %s3 = inlined_call_operand.vmem [shape: f32[8,32], index: 3, kind: input, shape index: {}]
  %s4 = inlined_call_operand.vmem [shape: f32[8,8], index: 4, kind: input, shape index: {}]
  %s5 = inlined_call_operand.hbm [shape: f32[1,4096], index: 5, kind: output, shape index: {}]
  %s6 = sld [smem:[#allocation0]]
  $region57: #{tpu_custom_call.1} parent=0
    _
  %s8 = ssub.s32 1, %s6
  %s9 = scalar_select 0, %s8, %s6
  $region1: #{tpu_custom_call.1} parent=0
    #allocation2 [shape = 'u8[65536]{0}', space=vmem, size = 0x10000, scoped, tag = 'input window, operand 0']
    #allocation3 [shape = 's32[2]{0}', space=sflag, size = 0x8, scoped, tag = 'scoped memory for tpu_custom_call.1']
    #allocation4 [shape = 's32[2]{0}', space=sflag, size = 0x8, scoped, tag = 'scoped memory for tpu_custom_call.1']
    #allocation5 [shape = 'u8[8192]{0}', space=vmem, size = 0x2000, scoped, tag = 'output window, operand 0']
    %10 = vsyncpa [#allocation3], 0
    %s11 = scalar_lea.sflag [#allocation3], 1
    %12 = vsyncpa %s11, 0
    %13 = vsyncpa [#allocation4], 0
    %s14 = scalar_lea.sflag [#allocation4], 1
    %15 = vsyncpa %s14, 0
    loop: start=0, step=1, limit=6
    $region2: #{tpu_custom_call.1} parent=1 // loop_pre_header
      _
    $region3: #{tpu_custom_call.1} parent=1 // loop_header
      %s17 = sphi 0, %s21
      %p18 = scmp.ge.s32.totalorder %s17, 6
      %s27 = sphi 0, %s29
      %s30 = sphi 0, %s27
      %s31 = sphi 0, %s30
      %s47 = sphi 0, %s31
      %s51 = sphi 0, %s51
      %s53 = sphi 0, %s51
      %s54 = sphi 0, %s53
      %s68 = sphi 0, %s54
      %s72 = sphi 0, %s72
      %s74 = sphi 0, %s72
      %s75 = sphi 0, %s74
      %s89 = sphi 0, %s75
      %s93 = sphi 0, %s93
      %s95 = sphi 0, %s93
      %s96 = sphi 0, %s95
      %s110 = sphi 0, %s96
      %s114 = sphi 0, %s114
      %s116 = sphi 0, %s114
      %s117 = sphi 0, %s116
      %s131 = sphi 0, %s117
      %s137 = sphi 0, %s139
      %s140 = sphi 0, %s137
      %s141 = sphi 0, %s140
      %s157 = sphi 0, %s141
    $region4: #{tpu_custom_call.1} parent=1 // loop_header_branch
      %20 = sbr.rel (%p18) target = $region8
    $region5: #{tpu_custom_call.1} parent=1 // loop_body
      %s22 = ssub.s32 %s17, 1
      %s23 = ssub.s32 %s17, 2
      %s24 = sadd.s32 %s17, 1
      %s25 = ssub.s32 %s17, %s24
      %p26 = scmp.eq.s32.totalorder %s25, 0
      %s28 = sadd.s32 %s27, 1
      %s29 = scalar_select %p26, %s27, %s28
      %p32 = pneg %p26
      %p33 = scmp.eq.s32.totalorder %s17, 3
      %p34 = por %p32, %p33
      %p35 = scmp.ne.s32.totalorder %s27, %s30
      %p36 = scmp.eq.s32.totalorder %s17, 0
      %p37 = por %p35, %p36
      %p38 = scmp.ne.s32.totalorder %s27, %s30
      %p39 = scmp.eq.s32.totalorder %s22, 3
      %p40 = por %p38, %p39
      %p41 = scmp.ne.s32.totalorder %s30, %s31
      %p42 = scmp.eq.s32.totalorder %s22, 0
      %p43 = por %p41, %p42
      %p44 = scmp.ne.s32.totalorder %s30, %s31
      %p45 = scmp.eq.s32.totalorder %s23, 3
      %p46 = por %p44, %p45
      %p48 = scmp.ne.s32.totalorder %s31, %s47
      %p49 = scmp.eq.s32.totalorder %s23, 0
      %p50 = por %p48, %p49
      %s52 = sadd.s32 %s51, 1
      %p55 = scmp.eq.s32.totalorder %s17, 3
      %p56 = scmp.ne.s32.totalorder %s51, %s53
      %p57 = scmp.eq.s32.totalorder %s17, 0
      %p58 = por %p56, %p57
      %p59 = scmp.ne.s32.totalorder %s51, %s53
      %p60 = scmp.eq.s32.totalorder %s22, 3
      %p61 = por %p59, %p60
      %p62 = scmp.ne.s32.totalorder %s53, %s54
      %p63 = scmp.eq.s32.totalorder %s22, 0
      %p64 = por %p62, %p63
      %p65 = scmp.ne.s32.totalorder %s53, %s54
      %p66 = scmp.eq.s32.totalorder %s23, 3
      %p67 = por %p65, %p66
      %p69 = scmp.ne.s32.totalorder %s54, %s68
      %p70 = scmp.eq.s32.totalorder %s23, 0
      %p71 = por %p69, %p70
      %s73 = sadd.s32 %s72, 1
      %p76 = scmp.eq.s32.totalorder %s17, 3
      %p77 = scmp.ne.s32.totalorder %s72, %s74
      %p78 = scmp.eq.s32.totalorder %s17, 0
      %p79 = por %p77, %p78
      %p80 = scmp.ne.s32.totalorder %s72, %s74
      %p81 = scmp.eq.s32.totalorder %s22, 3
      %p82 = por %p80, %p81
      %p83 = scmp.ne.s32.totalorder %s74, %s75
      %p84 = scmp.eq.s32.totalorder %s22, 0
      %p85 = por %p83, %p84
      %p86 = scmp.ne.s32.totalorder %s74, %s75
      %p87 = scmp.eq.s32.totalorder %s23, 3
      %p88 = por %p86, %p87
      %p90 = scmp.ne.s32.totalorder %s75, %s89
      %p91 = scmp.eq.s32.totalorder %s23, 0
      %p92 = por %p90, %p91
      %s94 = sadd.s32 %s93, 1
      %p97 = scmp.eq.s32.totalorder %s17, 3
      %p98 = scmp.ne.s32.totalorder %s93, %s95
      %p99 = scmp.eq.s32.totalorder %s17, 0
      %p100 = por %p98, %p99
      %p101 = scmp.ne.s32.totalorder %s93, %s95
      %p102 = scmp.eq.s32.totalorder %s22, 3
      %p103 = por %p101, %p102
      %p104 = scmp.ne.s32.totalorder %s95, %s96
      %p105 = scmp.eq.s32.totalorder %s22, 0
      %p106 = por %p104, %p105
      %p107 = scmp.ne.s32.totalorder %s95, %s96
      %p108 = scmp.eq.s32.totalorder %s23, 3
      %p109 = por %p107, %p108
      %p111 = scmp.ne.s32.totalorder %s96, %s110
      %p112 = scmp.eq.s32.totalorder %s23, 0
      %p113 = por %p111, %p112
      %s115 = sadd.s32 %s114, 1
      %p118 = scmp.eq.s32.totalorder %s17, 3
      %p119 = scmp.ne.s32.totalorder %s114, %s116
      %p120 = scmp.eq.s32.totalorder %s17, 0
      %p121 = por %p119, %p120
      %p122 = scmp.ne.s32.totalorder %s114, %s116
      %p123 = scmp.eq.s32.totalorder %s22, 3
      %p124 = por %p122, %p123
      %p125 = scmp.ne.s32.totalorder %s116, %s117
      %p126 = scmp.eq.s32.totalorder %s22, 0
      %p127 = por %p125, %p126
      %p128 = scmp.ne.s32.totalorder %s116, %s117
      %p129 = scmp.eq.s32.totalorder %s23, 3
      %p130 = por %p128, %p129
      %p132 = scmp.ne.s32.totalorder %s117, %s131
      %p133 = scmp.eq.s32.totalorder %s23, 0
      %p134 = por %p132, %p133
      %s135 = ssub.s32 %s17, %s24
      %p136 = scmp.eq.s32.totalorder %s135, 0
      %s138 = sadd.s32 %s137, 1
      %s139 = scalar_select %p136, %s137, %s138
      %p142 = pneg %p136
      %p143 = scmp.eq.s32.totalorder %s17, 3
      %p144 = por %p142, %p143
      %p145 = scmp.ne.s32.totalorder %s137, %s140
      %p146 = scmp.eq.s32.totalorder %s17, 0
      %p147 = por %p145, %p146
      %p148 = scmp.ne.s32.totalorder %s137, %s140
      %p149 = scmp.eq.s32.totalorder %s22, 3
      %p150 = por %p148, %p149
      %p151 = scmp.ne.s32.totalorder %s140, %s141
      %p152 = scmp.eq.s32.totalorder %s22, 0
      %p153 = por %p151, %p152
      %p154 = scmp.ne.s32.totalorder %s140, %s141
      %p155 = scmp.eq.s32.totalorder %s23, 3
      %p156 = por %p154, %p155
      %p158 = scmp.ne.s32.totalorder %s141, %s157
      %p159 = scmp.eq.s32.totalorder %s23, 0
      %p160 = por %p158, %p159
      %p161 = scmp.le.s32.totalorder 1, %s17
      %p162 = scmp.lt.s32.totalorder %s17, 5
      %p163 = pnand %p161, %p162
      %p164 = pneg %p163
      // Predicated region
      $region9: #{tpu_custom_call.1} parent=5 // pred_check
        _
      $region10: #{tpu_custom_call.1} parent=5 // pred_check_branch
        %166 = sbr.rel (%p163) target = $region12
      $region11: #{tpu_custom_call.1} parent=5 // pred_region
        %s167 = ssub.s32 %s17, 1
        // Predicated region
        $region13: #{tpu_custom_call.1} parent=11 // pred_check
          %p168 = pneg %p64
        $region14: #{tpu_custom_call.1} parent=11 // pred_check_branch
          %170 = sbr.rel (%p168) target = $region16
        $region15: #{tpu_custom_call.1} parent=11 // pred_region
          _
        $region16: #{tpu_custom_call.1} parent=11 // pred_fallthru
          _
        // Predicated region
        $region17: #{tpu_custom_call.1} parent=11 // pred_check
          %p171 = pneg %p85
        $region18: #{tpu_custom_call.1} parent=11 // pred_check_branch
          %173 = sbr.rel (%p171) target = $region20
        $region19: #{tpu_custom_call.1} parent=11 // pred_region
          _
        $region20: #{tpu_custom_call.1} parent=11 // pred_fallthru
          _
        // Predicated region
        $region21: #{tpu_custom_call.1} parent=11 // pred_check
          %p174 = pneg %p106
        $region22: #{tpu_custom_call.1} parent=11 // pred_check_branch
          %176 = sbr.rel (%p174) target = $region24
        $region23: #{tpu_custom_call.1} parent=11 // pred_region
          _
        $region24: #{tpu_custom_call.1} parent=11 // pred_fallthru
          _
        // Predicated region
        $region25: #{tpu_custom_call.1} parent=11 // pred_check
          %p177 = pneg %p127
        $region26: #{tpu_custom_call.1} parent=11 // pred_check_branch
          %179 = sbr.rel (%p177) target = $region28
        $region27: #{tpu_custom_call.1} parent=11 // pred_region
          _
        $region28: #{tpu_custom_call.1} parent=11 // pred_fallthru
          _
      $region12: #{tpu_custom_call.1} parent=5 // pred_fallthru
        _
      %p180 = scmp.lt.s32.totalorder %s17, 4
      // Predicated region
      $region29: #{tpu_custom_call.1} parent=5 // pred_check
        %p181 = pneg %p180
      $region30: #{tpu_custom_call.1} parent=5 // pred_check_branch
        %183 = sbr.rel (%p181) target = $region32
      $region31: #{tpu_custom_call.1} parent=5 // pred_region
        // Predicated region
        $region33: #{tpu_custom_call.1} parent=31 // pred_check
          %p184 = pneg %p37
        $region34: #{tpu_custom_call.1} parent=31 // pred_check_branch
          %186 = sbr.rel (%p184) target = $region36
        $region35: #{tpu_custom_call.1} parent=31 // pred_region
          %s187 = sand.u32 %s27, 1
          %s188 = scalar_lea.sflag [#allocation3], %s187
          %s189 = sand.u32 %s27, 1
          %s190 = smul.addr %s189, 64
          %s191 = scalar_lea.vmem [#allocation2], %s190
          %s192 = smul.u32 8, %s17
          %s194 = ssub.s32 1024, 1024
          %195 = vsyncadd %s188, %s194
          %s196 = smul.addr %s192, 128
          %s197 = scalar_lea.hbm %s0, %s196
          %s199 = sshll.u32 %s191, 4
          %s200 = int_to_ptr.vmem [resolvable:$true] %s199
          %202 = dma.hbm_to_vmem [thread:$0]  %s197, 1024, %s200, %s188
        $region36: #{tpu_custom_call.1} parent=31 // pred_fallthru
          _
      $region32: #{tpu_custom_call.1} parent=5 // pred_fallthru
        _
      %p203 = scmp.le.s32.totalorder 1, %s17
      %p204 = scmp.lt.s32.totalorder %s17, 5
      %p205 = pnand %p203, %p204
      %p206 = pneg %p205
      // Predicated region
      $region37: #{tpu_custom_call.1} parent=5 // pred_check
        _
      $region38: #{tpu_custom_call.1} parent=5 // pred_check_branch
        %208 = sbr.rel (%p205) target = $region40
      $region39: #{tpu_custom_call.1} parent=5 // pred_region
        %s209 = ssub.s32 %s17, 1
        %s210 = sand.u32 %s30, 1
        %s211 = scalar_lea.sflag [#allocation3], %s210
        %s212 = sand.u32 %s30, 1
        %s213 = smul.addr %s212, 64
        %s214 = scalar_lea.vmem [#allocation2], %s213
        // Predicated region
        $region41: #{tpu_custom_call.1} parent=39 // pred_check
          %p215 = pneg %p43
        $region42: #{tpu_custom_call.1} parent=39 // pred_check_branch
          %217 = sbr.rel (%p215) target = $region44
        $region43: #{tpu_custom_call.1} parent=39 // pred_region
          %218 = dma.done %s211, 1024
        $region44: #{tpu_custom_call.1} parent=39 // pred_fallthru
          _
        %s219 = sand.u32 %s30, 1
        %s220 = scalar_lea.sflag [#allocation3], %s219
        %s221 = sand.u32 %s30, 1
        %s222 = smul.addr %s221, 64
        %s223 = scalar_lea.vmem [#allocation2], %s222
        %p224 = pneg %p43
        %p225 = pneg %p40
        %p226 = pneg %p64
        %p227 = pneg %p61
        %p228 = pneg %p85
        %p229 = pneg %p82
        %p230 = pneg %p106
        %p231 = pneg %p103
        %p232 = pneg %p127
        %p233 = pneg %p124
        %p234 = pneg %p153
        %p235 = pneg %p150
        %s236 = sand.u32 %s140, 1
        %s237 = scalar_lea.sflag [#allocation4], %s236
        %s238 = sand.u32 %s140, 1
        %s239 = smul.addr %s238, 8
        %s240 = scalar_lea.vmem [#allocation5], %s239
        %s241 = smul.u32 8, %s22
        %s242 = smul.u32 8, %s22
        %v243 = vld [vmem:[%s214] sm:$0xff]
        %v244 = vld [vmem:[%s214 + $0x8] sm:$0xff]
        %v245 = vld [vmem:[%s214 + $0x10] sm:$0xff]
        %v246 = vld [vmem:[%s214 + $0x18] sm:$0xff]
        %v247 = vld [vmem:[%s214 + $0x20] sm:$0xff]
        %v248 = vld [vmem:[%s214 + $0x28] sm:$0xff]
        %v249 = vld [vmem:[%s214 + $0x30] sm:$0xff]
        %v250 = vld [vmem:[%s214 + $0x38] sm:$0xff]
        %v251 = vld [vmem:[%s1] sm:$0xff]
        %v252 = vld [vmem:[%s1 + $0x8] sm:$0xff]
        %v253 = vld [vmem:[%s1 + $0x10] sm:$0xff]
        %v254 = vld [vmem:[%s1 + $0x18] sm:$0xff]
        %vm255 = vcmask 64512
        %v257 = vsel %vm255, %v251, 0
        %v260 = vsel %vm255, %v252, 0
        %v263 = vsel %vm255, %v253, 0
        %v266 = vsel %vm255, %v254, 0
        %268 = vmatprep.subr.mxu0 %v244
        %269 = vmatpush1.msra.mxu0 %v243
        %270 = vmatprep.subr.mxu0 0.0
        %271 = vmatpush1.msra.mxu0 0.0
        %272 = vmatprep.subr.mxu0 0.0
        %273 = vmatpush1.msra.mxu0 0.0
        %274 = vmatprep.subr.mxu0 0.0
        %275 = vmatpush1.msra.mxu0 0.0
        %276 = vmatprep.subr.mxu0 0.0
        %277 = vmatpush1.msra.mxu0 0.0
        %278 = vmatprep.subr.mxu0 0.0
        %279 = vmatpush1.msra.mxu0 0.0
        %280 = vmatprep.subr.mxu0 0.0
        %281 = vmatpush1.msra.mxu0 0.0
        %282 = vmatprep.subr.mxu0 0.0
        %283 = vmatpush1.msra.mxu0 0.0
        %284 = vmatprep.subr.mxu0 0.0
        %285 = vmatpush1.msra.mxu0 0.0
        %286 = vmatprep.subr.mxu0 0.0
        %287 = vmatpush1.msra.mxu0 0.0
        %288 = vmatprep.subr.mxu0 0.0
        %289 = vmatpush1.msra.mxu0 0.0
        %290 = vmatprep.subr.mxu0 0.0
        %291 = vmatpush1.msra.mxu0 0.0
        %292 = vmatprep.subr.mxu0 0.0
        %293 = vmatpush1.msra.mxu0 0.0
        %294 = vmatprep.subr.mxu0 0.0
        %295 = vmatpush1.msra.mxu0 0.0
        %296 = vmatprep.subr.mxu0 0.0
        %297 = vmatpush1.msra.mxu0 0.0
        %298 = vmatprep.subr.mxu0 0.0
        %299 = vmatpush1.msra.mxu0 0.0
        %300 = vmatprep.subr.mxu0 0.0
        %301 = vmatpush1.msra.mxu0 0.0
        %302 = vmatprep.subr.mxu0 0.0
        %303 = vmatpush1.msra.mxu0 0.0
        %304 = vmatprep.subr.mxu0 0.0
        %305 = vmatpush1.msra.mxu0 0.0
        %306 = vmatprep.subr.mxu0 0.0
        %307 = vmatpush1.msra.mxu0 0.0
        %308 = vmatprep.subr.mxu0 0.0
        %309 = vmatpush1.msra.mxu0 0.0
        %310 = vmatprep.subr.mxu0 0.0
        %311 = vmatpush1.msra.mxu0 0.0
        %312 = vmatprep.subr.mxu0 0.0
        %313 = vmatpush1.msra.mxu0 0.0
        %314 = vmatprep.subr.mxu0 0.0
        %315 = vmatpush1.msra.mxu0 0.0
        %316 = vmatprep.subr.mxu0 0.0
        %317 = vmatpush1.msra.mxu0 0.0
        %318 = vmatprep.subr.mxu0 0.0
        %319 = vmatpush1.msra.mxu0 0.0
        %320 = vmatprep.subr.mxu0 0.0
        %321 = vmatpush1.msra.mxu0 0.0
        %322 = vmatprep.subr.mxu0 0.0
        %323 = vmatpush1.msra.mxu0 0.0
        %324 = vmatprep.subr.mxu0 0.0
        %325 = vmatpush1.msra.mxu0 0.0
        %326 = vmatprep.subr.mxu0 0.0
        %327 = vmatpush1.msra.mxu0 0.0
        %328 = vmatprep.subr.mxu0 0.0
        %329 = vmatpush1.msra.mxu0 0.0
        %330 = vmatprep.subr.mxu0 0.0
        %331 = vmatpush1.msra.mxu0 0.0
        %332 = vmatprep.mubr.f32.mxu0 0.0
        %333 = vmatmul.mubr.f32.gmra.mrb[0].mxu0 %v257
        %v334 = vpop.f32.mrb[0].mxu0
        %v335 = vadd.f32 0.0, %v334
        %v336 = vpop.f32.mrb[0].mxu0
        %v337 = vadd.f32 0.0, %v336
        %338 = vmatprep.mubr.f32.mxu0 0.0
        %339 = vmatmul.mubr.f32.gmra.mrb[0].mxu0 %v260
        %v340 = vpop.f32.mrb[0].mxu0
        %v341 = vadd.f32 0.0, %v340
        %v342 = vpop.f32.mrb[0].mxu0
        %v343 = vadd.f32 0.0, %v342
        %344 = vmatprep.mubr.f32.mxu0 0.0
        %345 = vmatmul.mubr.f32.gmra.mrb[0].mxu0 %v263
        %v346 = vpop.f32.mrb[0].mxu0
        %v347 = vadd.f32 0.0, %v346
        %v348 = vpop.f32.mrb[0].mxu0
        %v349 = vadd.f32 0.0, %v348
        %350 = vmatprep.mubr.f32.mxu0 0.0
        %351 = vmatmul.mubr.f32.gmra.mrb[0].mxu0 %v266
        %v352 = vpop.f32.mrb[0].mxu0
        %v353 = vadd.f32 0.0, %v352
        %v354 = vpop.f32.mrb[0].mxu0
        %v355 = vadd.f32 0.0, %v354
        %356 = vdwg.mxu0
        %357 = vmatprep.subr.mxu0 %v246
        %358 = vmatpush1.msra.mxu0 %v245
        %359 = vmatprep.subr.mxu0 0.0
        %360 = vmatpush1.msra.mxu0 0.0
        %361 = vmatprep.subr.mxu0 0.0
        %362 = vmatpush1.msra.mxu0 0.0
        %363 = vmatprep.subr.mxu0 0.0
        %364 = vmatpush1.msra.mxu0 0.0
        %365 = vmatprep.subr.mxu0 0.0
        %366 = vmatpush1.msra.mxu0 0.0
        %367 = vmatprep.subr.mxu0 0.0
        %368 = vmatpush1.msra.mxu0 0.0
        %369 = vmatprep.subr.mxu0 0.0
        %370 = vmatpush1.msra.mxu0 0.0
        %371 = vmatprep.subr.mxu0 0.0
        %372 = vmatpush1.msra.mxu0 0.0
        %373 = vmatprep.subr.mxu0 0.0
        %374 = vmatpush1.msra.mxu0 0.0
        %375 = vmatprep.subr.mxu0 0.0
        %376 = vmatpush1.msra.mxu0 0.0
        %377 = vmatprep.subr.mxu0 0.0
        %378 = vmatpush1.msra.mxu0 0.0
        %379 = vmatprep.subr.mxu0 0.0
        %380 = vmatpush1.msra.mxu0 0.0
        %381 = vmatprep.subr.mxu0 0.0
        %382 = vmatpush1.msra.mxu0 0.0
        %383 = vmatprep.subr.mxu0 0.0
        %384 = vmatpush1.msra.mxu0 0.0
        %385 = vmatprep.subr.mxu0 0.0
        %386 = vmatpush1.msra.mxu0 0.0
        %387 = vmatprep.subr.mxu0 0.0
        %388 = vmatpush1.msra.mxu0 0.0
        %389 = vmatprep.subr.mxu0 0.0
        %390 = vmatpush1.msra.mxu0 0.0
        %391 = vmatprep.subr.mxu0 0.0
        %392 = vmatpush1.msra.mxu0 0.0
        %393 = vmatprep.subr.mxu0 0.0
        %394 = vmatpush1.msra.mxu0 0.0
        %395 = vmatprep.subr.mxu0 0.0
        %396 = vmatpush1.msra.mxu0 0.0
        %397 = vmatprep.subr.mxu0 0.0
        %398 = vmatpush1.msra.mxu0 0.0
        %399 = vmatprep.subr.mxu0 0.0
        %400 = vmatpush1.msra.mxu0 0.0
        %401 = vmatprep.subr.mxu0 0.0
        %402 = vmatpush1.msra.mxu0 0.0
        %403 = vmatprep.subr.mxu0 0.0
        %404 = vmatpush1.msra.mxu0 0.0
        %405 = vmatprep.subr.mxu0 0.0
        %406 = vmatpush1.msra.mxu0 0.0
        %407 = vmatprep.subr.mxu0 0.0
        %408 = vmatpush1.msra.mxu0 0.0
        %409 = vmatprep.subr.mxu0 0.0
        %410 = vmatpush1.msra.mxu0 0.0
        %411 = vmatprep.subr.mxu0 0.0
        %412 = vmatpush1.msra.mxu0 0.0
        %413 = vmatprep.subr.mxu0 0.0
        %414 = vmatpush1.msra.mxu0 0.0
        %415 = vmatprep.subr.mxu0 0.0
        %416 = vmatpush1.msra.mxu0 0.0
        %417 = vmatprep.subr.mxu0 0.0
        %418 = vmatpush1.msra.mxu0 0.0
        %419 = vmatprep.subr.mxu0 0.0
        %420 = vmatpush1.msra.mxu0 0.0
        %421 = vmatprep.mubr.f32.mxu0 0.0
        %422 = vmatmul.mubr.f32.gmra.mrb[0].mxu0 %v257
        %v423 = vpop.f32.mrb[0].mxu0
        %v424 = vadd.f32 0.0, %v423
        %v425 = vpop.f32.mrb[0].mxu0
        %v426 = vadd.f32 0.0, %v425
        %427 = vmatprep.mubr.f32.mxu0 0.0
        %428 = vmatmul.mubr.f32.gmra.mrb[0].mxu0 %v260
        %v429 = vpop.f32.mrb[0].mxu0
        %v430 = vadd.f32 0.0, %v429
        %v431 = vpop.f32.mrb[0].mxu0
        %v432 = vadd.f32 0.0, %v431
        %433 = vmatprep.mubr.f32.mxu0 0.0
        %434 = vmatmul.mubr.f32.gmra.mrb[0].mxu0 %v263
        %v435 = vpop.f32.mrb[0].mxu0
        %v436 = vadd.f32 0.0, %v435
        %v437 = vpop.f32.mrb[0].mxu0
        %v438 = vadd.f32 0.0, %v437
        %439 = vmatprep.mubr.f32.mxu0 0.0
        %440 = vmatmul.mubr.f32.gmra.mrb[0].mxu0 %v266
        %v441 = vpop.f32.mrb[0].mxu0
        %v442 = vadd.f32 0.0, %v441
        %v443 = vpop.f32.mrb[0].mxu0
        %v444 = vadd.f32 0.0, %v443
        %445 = vdwg.mxu0
        %446 = vmatprep.subr.mxu0 %v248
        %447 = vmatpush1.msra.mxu0 %v247
        %448 = vmatprep.subr.mxu0 0.0
        %449 = vmatpush1.msra.mxu0 0.0
        %450 = vmatprep.subr.mxu0 0.0
        %451 = vmatpush1.msra.mxu0 0.0
        %452 = vmatprep.subr.mxu0 0.0
        %453 = vmatpush1.msra.mxu0 0.0
        %454 = vmatprep.subr.mxu0 0.0
        %455 = vmatpush1.msra.mxu0 0.0
        %456 = vmatprep.subr.mxu0 0.0
        %457 = vmatpush1.msra.mxu0 0.0
        %458 = vmatprep.subr.mxu0 0.0
        %459 = vmatpush1.msra.mxu0 0.0
        %460 = vmatprep.subr.mxu0 0.0
        %461 = vmatpush1.msra.mxu0 0.0
        %462 = vmatprep.subr.mxu0 0.0
        %463 = vmatpush1.msra.mxu0 0.0
        %464 = vmatprep.subr.mxu0 0.0
        %465 = vmatpush1.msra.mxu0 0.0
        %466 = vmatprep.subr.mxu0 0.0
        %467 = vmatpush1.msra.mxu0 0.0
        %468 = vmatprep.subr.mxu0 0.0
        %469 = vmatpush1.msra.mxu0 0.0
        %470 = vmatprep.subr.mxu0 0.0
        %471 = vmatpush1.msra.mxu0 0.0
        %472 = vmatprep.subr.mxu0 0.0
        %473 = vmatpush1.msra.mxu0 0.0
        %474 = vmatprep.subr.mxu0 0.0
        %475 = vmatpush1.msra.mxu0 0.0
        %476 = vmatprep.subr.mxu0 0.0
        %477 = vmatpush1.msra.mxu0 0.0
        %478 = vmatprep.subr.mxu0 0.0
        %479 = vmatpush1.msra.mxu0 0.0
        %480 = vmatprep.subr.mxu0 0.0
        %481 = vmatpush1.msra.mxu0 0.0
        %482 = vmatprep.subr.mxu0 0.0
        %483 = vmatpush1.msra.mxu0 0.0
        %484 = vmatprep.subr.mxu0 0.0
        %485 = vmatpush1.msra.mxu0 0.0
        %486 = vmatprep.subr.mxu0 0.0
        %487 = vmatpush1.msra.mxu0 0.0
        %488 = vmatprep.subr.mxu0 0.0
        %489 = vmatpush1.msra.mxu0 0.0
        %490 = vmatprep.subr.mxu0 0.0
        %491 = vmatpush1.msra.mxu0 0.0
        %492 = vmatprep.subr.mxu0 0.0
        %493 = vmatpush1.msra.mxu0 0.0
        %494 = vmatprep.subr.mxu0 0.0
        %495 = vmatpush1.msra.mxu0 0.0
        %496 = vmatprep.subr.mxu0 0.0
        %497 = vmatpush1.msra.mxu0 0.0
        %498 = vmatprep.subr.mxu0 0.0
        %499 = vmatpush1.msra.mxu0 0.0
        %500 = vmatprep.subr.mxu0 0.0
        %501 = vmatpush1.msra.mxu0 0.0
        %502 = vmatprep.subr.mxu0 0.0
        %503 = vmatpush1.msra.mxu0 0.0
        %504 = vmatprep.subr.mxu0 0.0
        %505 = vmatpush1.msra.mxu0 0.0
        %506 = vmatprep.subr.mxu0 0.0
        %507 = vmatpush1.msra.mxu0 0.0
        %508 = vmatprep.subr.mxu0 0.0
        %509 = vmatpush1.msra.mxu0 0.0
        %510 = vmatprep.mubr.f32.mxu0 0.0
        %511 = vmatmul.mubr.f32.gmra.mrb[0].mxu0 %v257
        %v512 = vpop.f32.mrb[0].mxu0
        %v513 = vadd.f32 0.0, %v512
        %v514 = vpop.f32.mrb[0].mxu0
        %v515 = vadd.f32 0.0, %v514
        %516 = vmatprep.mubr.f32.mxu0 0.0
        %517 = vmatmul.mubr.f32.gmra.mrb[0].mxu0 %v260
        %v518 = vpop.f32.mrb[0].mxu0
        %v519 = vadd.f32 0.0, %v518
        %v520 = vpop.f32.mrb[0].mxu0
        %v521 = vadd.f32 0.0, %v520
        %522 = vmatprep.mubr.f32.mxu0 0.0
        %523 = vmatmul.mubr.f32.gmra.mrb[0].mxu0 %v263
        %v524 = vpop.f32.mrb[0].mxu0
        %v525 = vadd.f32 0.0, %v524
        %v526 = vpop.f32.mrb[0].mxu0
        %v527 = vadd.f32 0.0, %v526
        %528 = vmatprep.mubr.f32.mxu0 0.0
        %529 = vmatmul.mubr.f32.gmra.mrb[0].mxu0 %v266
        %v530 = vpop.f32.mrb[0].mxu0
        %v531 = vadd.f32 0.0, %v530
        %v532 = vpop.f32.mrb[0].mxu0
        %v533 = vadd.f32 0.0, %v532
        %534 = vdwg.mxu0
        %535 = vmatprep.subr.mxu0 %v250
        %536 = vmatpush1.msra.mxu0 %v249
        %537 = vmatprep.subr.mxu0 0.0
        %538 = vmatpush1.msra.mxu0 0.0
        %539 = vmatprep.subr.mxu0 0.0
        %540 = vmatpush1.msra.mxu0 0.0
        %541 = vmatprep.subr.mxu0 0.0
        %542 = vmatpush1.msra.mxu0 0.0
        %543 = vmatprep.subr.mxu0 0.0
        %544 = vmatpush1.msra.mxu0 0.0
        %545 = vmatprep.subr.mxu0 0.0
        %546 = vmatpush1.msra.mxu0 0.0
        %547 = vmatprep.subr.mxu0 0.0
        %548 = vmatpush1.msra.mxu0 0.0
        %549 = vmatprep.subr.mxu0 0.0
        %550 = vmatpush1.msra.mxu0 0.0
        %551 = vmatprep.subr.mxu0 0.0
        %552 = vmatpush1.msra.mxu0 0.0
        %553 = vmatprep.subr.mxu0 0.0
        %554 = vmatpush1.msra.mxu0 0.0
        %555 = vmatprep.subr.mxu0 0.0
        %556 = vmatpush1.msra.mxu0 0.0
        %557 = vmatprep.subr.mxu0 0.0
        %558 = vmatpush1.msra.mxu0 0.0
        %559 = vmatprep.subr.mxu0 0.0
        %560 = vmatpush1.msra.mxu0 0.0
        %561 = vmatprep.subr.mxu0 0.0
        %562 = vmatpush1.msra.mxu0 0.0
        %563 = vmatprep.subr.mxu0 0.0
        %564 = vmatpush1.msra.mxu0 0.0
        %565 = vmatprep.subr.mxu0 0.0
        %566 = vmatpush1.msra.mxu0 0.0
        %567 = vmatprep.subr.mxu0 0.0
        %568 = vmatpush1.msra.mxu0 0.0
        %569 = vmatprep.subr.mxu0 0.0
        %570 = vmatpush1.msra.mxu0 0.0
        %571 = vmatprep.subr.mxu0 0.0
        %572 = vmatpush1.msra.mxu0 0.0
        %573 = vmatprep.subr.mxu0 0.0
        %574 = vmatpush1.msra.mxu0 0.0
        %575 = vmatprep.subr.mxu0 0.0
        %576 = vmatpush1.msra.mxu0 0.0
        %577 = vmatprep.subr.mxu0 0.0
        %578 = vmatpush1.msra.mxu0 0.0
        %579 = vmatprep.subr.mxu0 0.0
        %580 = vmatpush1.msra.mxu0 0.0
        %581 = vmatprep.subr.mxu0 0.0
        %582 = vmatpush1.msra.mxu0 0.0
        %583 = vmatprep.subr.mxu0 0.0
        %584 = vmatpush1.msra.mxu0 0.0
        %585 = vmatprep.subr.mxu0 0.0
        %586 = vmatpush1.msra.mxu0 0.0
        %587 = vmatprep.subr.mxu0 0.0
        %588 = vmatpush1.msra.mxu0 0.0
        %589 = vmatprep.subr.mxu0 0.0
        %590 = vmatpush1.msra.mxu0 0.0
        %591 = vmatprep.subr.mxu0 0.0
        %592 = vmatpush1.msra.mxu0 0.0
        %593 = vmatprep.subr.mxu0 0.0
        %594 = vmatpush1.msra.mxu0 0.0
        %595 = vmatprep.subr.mxu0 0.0
        %596 = vmatpush1.msra.mxu0 0.0
        %597 = vmatprep.subr.mxu0 0.0
        %598 = vmatpush1.msra.mxu0 0.0
        %599 = vmatprep.mubr.f32.mxu0 0.0
        %600 = vmatmul.mubr.f32.gmra.mrb[0].mxu0 %v257
        %v601 = vpop.f32.mrb[0].mxu0
        %v602 = vadd.f32 0.0, %v601
        %v603 = vpop.f32.mrb[0].mxu0
        %v604 = vadd.f32 0.0, %v603
        %605 = vmatprep.mubr.f32.mxu0 0.0
        %606 = vmatmul.mubr.f32.gmra.mrb[0].mxu0 %v260
        %v607 = vpop.f32.mrb[0].mxu0
        %v608 = vadd.f32 0.0, %v607
        %v609 = vpop.f32.mrb[0].mxu0
        %v610 = vadd.f32 0.0, %v609
        %611 = vmatprep.mubr.f32.mxu0 0.0
        %612 = vmatmul.mubr.f32.gmra.mrb[0].mxu0 %v263
        %v613 = vpop.f32.mrb[0].mxu0
        %v614 = vadd.f32 0.0, %v613
        %v615 = vpop.f32.mrb[0].mxu0
        %v616 = vadd.f32 0.0, %v615
        %617 = vmatprep.mubr.f32.mxu0 0.0
        %618 = vmatmul.mubr.f32.gmra.mrb[0].mxu0 %v266
        %v619 = vpop.f32.mrb[0].mxu0
        %v620 = vadd.f32 0.0, %v619
        %v621 = vpop.f32.mrb[0].mxu0
        %v622 = vadd.f32 0.0, %v621
        %623 = vdwg.mxu0
        %v624 = vmax.f32 %v335, 0.0
        %v625 = vmax.f32 %v337, 0.0
        %v626 = vmax.f32 %v424, 0.0
        %v627 = vmax.f32 %v426, 0.0
        %v628 = vmax.f32 %v513, 0.0
        %v629 = vmax.f32 %v515, 0.0
        %v630 = vmax.f32 %v602, 0.0
        %v631 = vmax.f32 %v604, 0.0
        %v632 = vmax.f32 %v341, 0.0
        %v633 = vmax.f32 %v343, 0.0
        %v634 = vmax.f32 %v430, 0.0
        %v635 = vmax.f32 %v432, 0.0
        %v636 = vmax.f32 %v519, 0.0
        %v637 = vmax.f32 %v521, 0.0
        %v638 = vmax.f32 %v608, 0.0
        %v639 = vmax.f32 %v610, 0.0
        %v640 = vmax.f32 %v347, 0.0
        %v641 = vmax.f32 %v349, 0.0
        %v642 = vmax.f32 %v436, 0.0
        %v643 = vmax.f32 %v438, 0.0
        %v644 = vmax.f32 %v525, 0.0
        %v645 = vmax.f32 %v527, 0.0
        %v646 = vmax.f32 %v614, 0.0
        %v647 = vmax.f32 %v616, 0.0
        %v648 = vmax.f32 %v353, 0.0
        %v649 = vmax.f32 %v355, 0.0
        %v650 = vmax.f32 %v442, 0.0
        %v651 = vmax.f32 %v444, 0.0
        %v652 = vmax.f32 %v531, 0.0
        %v653 = vmax.f32 %v533, 0.0
        %v654 = vmax.f32 %v620, 0.0
        %v655 = vmax.f32 %v622, 0.0
        %s656 = scalar_lea.vmem %s1, 32
        %v657 = vld [vmem:[%s656] sm:$0xff]
        %v658 = vld [vmem:[%s656 + $0x8] sm:$0xff]
        %v659 = vld [vmem:[%s656 + $0x10] sm:$0xff]
        %v660 = vld [vmem:[%s656 + $0x18] sm:$0xff]
        %v662 = vsel %vm255, %v657, 0
        %v665 = vsel %vm255, %v658, 0
        %v668 = vsel %vm255, %v659, 0
        %v671 = vsel %vm255, %v660, 0
        %673 = vmatprep.subr.mxu0 %v244
        %674 = vmatpush1.msra.mxu0 %v243
        %675 = vmatprep.subr.mxu0 0.0
        %676 = vmatpush1.msra.mxu0 0.0
        %677 = vmatprep.subr.mxu0 0.0
        %678 = vmatpush1.msra.mxu0 0.0
        %679 = vmatprep.subr.mxu0 0.0
        %680 = vmatpush1.msra.mxu0 0.0
        %681 = vmatprep.subr.mxu0 0.0
        %682 = vmatpush1.msra.mxu0 0.0
        %683 = vmatprep.subr.mxu0 0.0
        %684 = vmatpush1.msra.mxu0 0.0
        %685 = vmatprep.subr.mxu0 0.0
        %686 = vmatpush1.msra.mxu0 0.0
        %687 = vmatprep.subr.mxu0 0.0
        %688 = vmatpush1.msra.mxu0 0.0
        %689 = vmatprep.subr.mxu0 0.0
        %690 = vmatpush1.msra.mxu0 0.0
        %691 = vmatprep.subr.mxu0 0.0
        %692 = vmatpush1.msra.mxu0 0.0
        %693 = vmatprep.subr.mxu0 0.0
        %694 = vmatpush1.msra.mxu0 0.0
        %695 = vmatprep.subr.mxu0 0.0
        %696 = vmatpush1.msra.mxu0 0.0
        %697 = vmatprep.subr.mxu0 0.0
        %698 = vmatpush1.msra.mxu0 0.0
        %699 = vmatprep.subr.mxu0 0.0
        %700 = vmatpush1.msra.mxu0 0.0
        %701 = vmatprep.subr.mxu0 0.0
        %702 = vmatpush1.msra.mxu0 0.0
        %703 = vmatprep.subr.mxu0 0.0
        %704 = vmatpush1.msra.mxu0 0.0
        %705 = vmatprep.subr.mxu0 0.0
        %706 = vmatpush1.msra.mxu0 0.0
        %707 = vmatprep.subr.mxu0 0.0
        %708 = vmatpush1.msra.mxu0 0.0
        %709 = vmatprep.subr.mxu0 0.0
        %710 = vmatpush1.msra.mxu0 0.0
        %711 = vmatprep.subr.mxu0 0.0
        %712 = vmatpush1.msra.mxu0 0.0
        %713 = vmatprep.subr.mxu0 0.0
        %714 = vmatpush1.msra.mxu0 0.0
        %715 = vmatprep.subr.mxu0 0.0
        %716 = vmatpush1.msra.mxu0 0.0
        %717 = vmatprep.subr.mxu0 0.0
        %718 = vmatpush1.msra.mxu0 0.0
        %719 = vmatprep.subr.mxu0 0.0
        %720 = vmatpush1.msra.mxu0 0.0
        %721 = vmatprep.subr.mxu0 0.0
        %722 = vmatpush1.msra.mxu0 0.0
        %723 = vmatprep.subr.mxu0 0.0
        %724 = vmatpush1.msra.mxu0 0.0
        %725 = vmatprep.subr.mxu0 0.0
        %726 = vmatpush1.msra.mxu0 0.0
        %727 = vmatprep.subr.mxu0 0.0
        %728 = vmatpush1.msra.mxu0 0.0
        %729 = vmatprep.subr.mxu0 0.0
        %730 = vmatpush1.msra.mxu0 0.0
        %731 = vmatprep.subr.mxu0 0.0
        %732 = vmatpush1.msra.mxu0 0.0
        %733 = vmatprep.subr.mxu0 0.0
        %734 = vmatpush1.msra.mxu0 0.0
        %735 = vmatprep.subr.mxu0 0.0
        %736 = vmatpush1.msra.mxu0 0.0
        %737 = vmatprep.mubr.f32.mxu0 0.0
        %738 = vmatmul.mubr.f32.gmra.mrb[0].mxu0 %v662
        %v739 = vpop.f32.mrb[0].mxu0
        %v740 = vadd.f32 0.0, %v739
        %v741 = vpop.f32.mrb[0].mxu0
        %v742 = vadd.f32 0.0, %v741
        %743 = vmatprep.mubr.f32.mxu0 0.0
        %744 = vmatmul.mubr.f32.gmra.mrb[0].mxu0 %v665
        %v745 = vpop.f32.mrb[0].mxu0
        %v746 = vadd.f32 0.0, %v745
        %v747 = vpop.f32.mrb[0].mxu0
        %v748 = vadd.f32 0.0, %v747
        %749 = vmatprep.mubr.f32.mxu0 0.0
        %750 = vmatmul.mubr.f32.gmra.mrb[0].mxu0 %v668
        %v751 = vpop.f32.mrb[0].mxu0
        %v752 = vadd.f32 0.0, %v751
        %v753 = vpop.f32.mrb[0].mxu0
        %v754 = vadd.f32 0.0, %v753
        %755 = vmatprep.mubr.f32.mxu0 0.0
        %756 = vmatmul.mubr.f32.gmra.mrb[0].mxu0 %v671
        %v757 = vpop.f32.mrb[0].mxu0
        %v758 = vadd.f32 0.0, %v757
        %v759 = vpop.f32.mrb[0].mxu0
        %v760 = vadd.f32 0.0, %v759
        %761 = vdwg.mxu0
        %762 = vmatprep.subr.mxu0 %v246
        %763 = vmatpush1.msra.mxu0 %v245
        %764 = vmatprep.subr.mxu0 0.0
        %765 = vmatpush1.msra.mxu0 0.0
        %766 = vmatprep.subr.mxu0 0.0
        %767 = vmatpush1.msra.mxu0 0.0
        %768 = vmatprep.subr.mxu0 0.0
        %769 = vmatpush1.msra.mxu0 0.0
        %770 = vmatprep.subr.mxu0 0.0
        %771 = vmatpush1.msra.mxu0 0.0
        %772 = vmatprep.subr.mxu0 0.0
        %773 = vmatpush1.msra.mxu0 0.0
        %774 = vmatprep.subr.mxu0 0.0
        %775 = vmatpush1.msra.mxu0 0.0
        %776 = vmatprep.subr.mxu0 0.0
        %777 = vmatpush1.msra.mxu0 0.0
        %778 = vmatprep.subr.mxu0 0.0
        %779 = vmatpush1.msra.mxu0 0.0
        %780 = vmatprep.subr.mxu0 0.0
        %781 = vmatpush1.msra.mxu0 0.0
        %782 = vmatprep.subr.mxu0 0.0
        %783 = vmatpush1.msra.mxu0 0.0
        %784 = vmatprep.subr.mxu0 0.0
        %785 = vmatpush1.msra.mxu0 0.0
        %786 = vmatprep.subr.mxu0 0.0
        %787 = vmatpush1.msra.mxu0 0.0
        %788 = vmatprep.subr.mxu0 0.0
        %789 = vmatpush1.msra.mxu0 0.0
        %790 = vmatprep.subr.mxu0 0.0
        %791 = vmatpush1.msra.mxu0 0.0
        %792 = vmatprep.subr.mxu0 0.0
        %793 = vmatpush1.msra.mxu0 0.0
        %794 = vmatprep.subr.mxu0 0.0
        %795 = vmatpush1.msra.mxu0 0.0
        %796 = vmatprep.subr.mxu0 0.0
        %797 = vmatpush1.msra.mxu0 0.0
        %798 = vmatprep.subr.mxu0 0.0
        %799 = vmatpush1.msra.mxu0 0.0
        %800 = vmatprep.subr.mxu0 0.0
        %801 = vmatpush1.msra.mxu0 0.0
        %802 = vmatprep.subr.mxu0 0.0
        %803 = vmatpush1.msra.mxu0 0.0
        %804 = vmatprep.subr.mxu0 0.0
        %805 = vmatpush1.msra.mxu0 0.0
        %806 = vmatprep.subr.mxu0 0.0
        %807 = vmatpush1.msra.mxu0 0.0
        %808 = vmatprep.subr.mxu0 0.0
        %809 = vmatpush1.msra.mxu0 0.0
        %810 = vmatprep.subr.mxu0 0.0
        %811 = vmatpush1.msra.mxu0 0.0
        %812 = vmatprep.subr.mxu0 0.0
        %813 = vmatpush1.msra.mxu0 0.0
        %814 = vmatprep.subr.mxu0 0.0
        %815 = vmatpush1.msra.mxu0 0.0
        %816 = vmatprep.subr.mxu0 0.0
        %817 = vmatpush1.msra.mxu0 0.0
        %818 = vmatprep.subr.mxu0 0.0
        %819 = vmatpush1.msra.mxu0 0.0
        %820 = vmatprep.subr.mxu0 0.0
        %821 = vmatpush1.msra.mxu0 0.0
        %822 = vmatprep.subr.mxu0 0.0
        %823 = vmatpush1.msra.mxu0 0.0
        %824 = vmatprep.subr.mxu0 0.0
        %825 = vmatpush1.msra.mxu0 0.0
        %826 = vmatprep.mubr.f32.mxu0 0.0
        %827 = vmatmul.mubr.f32.gmra.mrb[0].mxu0 %v662
        %v828 = vpop.f32.mrb[0].mxu0
        %v829 = vadd.f32 0.0, %v828
        %v830 = vpop.f32.mrb[0].mxu0
        %v831 = vadd.f32 0.0, %v830
        %832 = vmatprep.mubr.f32.mxu0 0.0
        %833 = vmatmul.mubr.f32.gmra.mrb[0].mxu0 %v665
        %v834 = vpop.f32.mrb[0].mxu0
        %v835 = vadd.f32 0.0, %v834
        %v836 = vpop.f32.mrb[0].mxu0
        %v837 = vadd.f32 0.0, %v836
        %838 = vmatprep.mubr.f32.mxu0 0.0
        %839 = vmatmul.mubr.f32.gmra.mrb[0].mxu0 %v668
        %v840 = vpop.f32.mrb[0].mxu0
        %v841 = vadd.f32 0.0, %v840
        %v842 = vpop.f32.mrb[0].mxu0
        %v843 = vadd.f32 0.0, %v842
        %844 = vmatprep.mubr.f32.mxu0 0.0
        %845 = vmatmul.mubr.f32.gmra.mrb[0].mxu0 %v671
        %v846 = vpop.f32.mrb[0].mxu0
        %v847 = vadd.f32 0.0, %v846
        %v848 = vpop.f32.mrb[0].mxu0
        %v849 = vadd.f32 0.0, %v848
        %850 = vdwg.mxu0
        %851 = vmatprep.subr.mxu0 %v248
        %852 = vmatpush1.msra.mxu0 %v247
        %853 = vmatprep.subr.mxu0 0.0
        %854 = vmatpush1.msra.mxu0 0.0
        %855 = vmatprep.subr.mxu0 0.0
        %856 = vmatpush1.msra.mxu0 0.0
        %857 = vmatprep.subr.mxu0 0.0
        %858 = vmatpush1.msra.mxu0 0.0
        %859 = vmatprep.subr.mxu0 0.0
        %860 = vmatpush1.msra.mxu0 0.0
        %861 = vmatprep.subr.mxu0 0.0
        %862 = vmatpush1.msra.mxu0 0.0
        %863 = vmatprep.subr.mxu0 0.0
        %864 = vmatpush1.msra.mxu0 0.0
        %865 = vmatprep.subr.mxu0 0.0
        %866 = vmatpush1.msra.mxu0 0.0
        %867 = vmatprep.subr.mxu0 0.0
        %868 = vmatpush1.msra.mxu0 0.0
        %869 = vmatprep.subr.mxu0 0.0
        %870 = vmatpush1.msra.mxu0 0.0
        %871 = vmatprep.subr.mxu0 0.0
        %872 = vmatpush1.msra.mxu0 0.0
        %873 = vmatprep.subr.mxu0 0.0
        %874 = vmatpush1.msra.mxu0 0.0
        %875 = vmatprep.subr.mxu0 0.0
        %876 = vmatpush1.msra.mxu0 0.0
        %877 = vmatprep.subr.mxu0 0.0
        %878 = vmatpush1.msra.mxu0 0.0
        %879 = vmatprep.subr.mxu0 0.0
        %880 = vmatpush1.msra.mxu0 0.0
        %881 = vmatprep.subr.mxu0 0.0
        %882 = vmatpush1.msra.mxu0 0.0
        %883 = vmatprep.subr.mxu0 0.0
        %884 = vmatpush1.msra.mxu0 0.0
        %885 = vmatprep.subr.mxu0 0.0
        %886 = vmatpush1.msra.mxu0 0.0
        %887 = vmatprep.subr.mxu0 0.0
        %888 = vmatpush1.msra.mxu0 0.0
        %889 = vmatprep.subr.mxu0 0.0
        %890 = vmatpush1.msra.mxu0 0.0
        %891 = vmatprep.subr.mxu0 0.0
        %892 = vmatpush1.msra.mxu0 0.0
        %893 = vmatprep.subr.mxu0 0.0
        %894 = vmatpush1.msra.mxu0 0.0
        %895 = vmatprep.subr.mxu0 0.0
        %896 = vmatpush1.msra.mxu0 0.0
        %897 = vmatprep.subr.mxu0 0.0
        %898 = vmatpush1.msra.mxu0 0.0
        %899 = vmatprep.subr.mxu0 0.0
        %900 = vmatpush1.msra.mxu0 0.0
        %901 = vmatprep.subr.mxu0 0.0
        %902 = vmatpush1.msra.mxu0 0.0
        %903 = vmatprep.subr.mxu0 0.0
        %904 = vmatpush1.msra.mxu0 0.0
        %905 = vmatprep.subr.mxu0 0.0
        %906 = vmatpush1.msra.mxu0 0.0
        %907 = vmatprep.subr.mxu0 0.0
        %908 = vmatpush1.msra.mxu0 0.0
        %909 = vmatprep.subr.mxu0 0.0
        %910 = vmatpush1.msra.mxu0 0.0
        %911 = vmatprep.subr.mxu0 0.0
        %912 = vmatpush1.msra.mxu0 0.0
        %913 = vmatprep.subr.mxu0 0.0
        %914 = vmatpush1.msra.mxu0 0.0
        %915 = vmatprep.mubr.f32.mxu0 0.0
        %916 = vmatmul.mubr.f32.gmra.mrb[0].mxu0 %v662
        %v917 = vpop.f32.mrb[0].mxu0
        %v918 = vadd.f32 0.0, %v917
        %v919 = vpop.f32.mrb[0].mxu0
        %v920 = vadd.f32 0.0, %v919
        %921 = vmatprep.mubr.f32.mxu0 0.0
        %922 = vmatmul.mubr.f32.gmra.mrb[0].mxu0 %v665
        %v923 = vpop.f32.mrb[0].mxu0
        %v924 = vadd.f32 0.0, %v923
        %v925 = vpop.f32.mrb[0].mxu0
        %v926 = vadd.f32 0.0, %v925
        %927 = vmatprep.mubr.f32.mxu0 0.0
        %928 = vmatmul.mubr.f32.gmra.mrb[0].mxu0 %v668
        %v929 = vpop.f32.mrb[0].mxu0
        %v930 = vadd.f32 0.0, %v929
        %v931 = vpop.f32.mrb[0].mxu0
        %v932 = vadd.f32 0.0, %v931
        %933 = vmatprep.mubr.f32.mxu0 0.0
        %934 = vmatmul.mubr.f32.gmra.mrb[0].mxu0 %v671
        %v935 = vpop.f32.mrb[0].mxu0
        %v936 = vadd.f32 0.0, %v935
        %v937 = vpop.f32.mrb[0].mxu0
        %v938 = vadd.f32 0.0, %v937
        %939 = vdwg.mxu0
        %940 = vmatprep.subr.mxu0 %v250
        %941 = vmatpush1.msra.mxu0 %v249
        %942 = vmatprep.subr.mxu0 0.0
        %943 = vmatpush1.msra.mxu0 0.0
        %944 = vmatprep.subr.mxu0 0.0
        %945 = vmatpush1.msra.mxu0 0.0
        %946 = vmatprep.subr.mxu0 0.0
        %947 = vmatpush1.msra.mxu0 0.0
        %948 = vmatprep.subr.mxu0 0.0
        %949 = vmatpush1.msra.mxu0 0.0
        %950 = vmatprep.subr.mxu0 0.0
        %951 = vmatpush1.msra.mxu0 0.0
        %952 = vmatprep.subr.mxu0 0.0
        %953 = vmatpush1.msra.mxu0 0.0
        %954 = vmatprep.subr.mxu0 0.0
        %955 = vmatpush1.msra.mxu0 0.0
        %956 = vmatprep.subr.mxu0 0.0
        %957 = vmatpush1.msra.mxu0 0.0
        %958 = vmatprep.subr.mxu0 0.0
        %959 = vmatpush1.msra.mxu0 0.0
        %960 = vmatprep.subr.mxu0 0.0
        %961 = vmatpush1.msra.mxu0 0.0
        %962 = vmatprep.subr.mxu0 0.0
        %963 = vmatpush1.msra.mxu0 0.0
        %964 = vmatprep.subr.mxu0 0.0
        %965 = vmatpush1.msra.mxu0 0.0
        %966 = vmatprep.subr.mxu0 0.0
        %967 = vmatpush1.msra.mxu0 0.0
        %968 = vmatprep.subr.mxu0 0.0
        %969 = vmatpush1.msra.mxu0 0.0
        %970 = vmatprep.subr.mxu0 0.0
        %971 = vmatpush1.msra.mxu0 0.0
        %972 = vmatprep.subr.mxu0 0.0
        %973 = vmatpush1.msra.mxu0 0.0
        %974 = vmatprep.subr.mxu0 0.0
        %975 = vmatpush1.msra.mxu0 0.0
        %976 = vmatprep.subr.mxu0 0.0
        %977 = vmatpush1.msra.mxu0 0.0
        %978 = vmatprep.subr.mxu0 0.0
        %979 = vmatpush1.msra.mxu0 0.0
        %980 = vmatprep.subr.mxu0 0.0
        %981 = vmatpush1.msra.mxu0 0.0
        %982 = vmatprep.subr.mxu0 0.0
        %983 = vmatpush1.msra.mxu0 0.0
        %984 = vmatprep.subr.mxu0 0.0
        %985 = vmatpush1.msra.mxu0 0.0
        %986 = vmatprep.subr.mxu0 0.0
        %987 = vmatpush1.msra.mxu0 0.0
        %988 = vmatprep.subr.mxu0 0.0
        %989 = vmatpush1.msra.mxu0 0.0
        %990 = vmatprep.subr.mxu0 0.0
        %991 = vmatpush1.msra.mxu0 0.0
        %992 = vmatprep.subr.mxu0 0.0
        %993 = vmatpush1.msra.mxu0 0.0
        %994 = vmatprep.subr.mxu0 0.0
        %995 = vmatpush1.msra.mxu0 0.0
        %996 = vmatprep.subr.mxu0 0.0
        %997 = vmatpush1.msra.mxu0 0.0
        %998 = vmatprep.subr.mxu0 0.0
        %999 = vmatpush1.msra.mxu0 0.0
        %1000 = vmatprep.subr.mxu0 0.0
        %1001 = vmatpush1.msra.mxu0 0.0
        %1002 = vmatprep.subr.mxu0 0.0
        %1003 = vmatpush1.msra.mxu0 0.0
        %1004 = vmatprep.mubr.f32.mxu0 0.0
        %1005 = vmatmul.mubr.f32.gmra.mrb[0].mxu0 %v662
        %v1006 = vpop.f32.mrb[0].mxu0
        %v1007 = vadd.f32 0.0, %v1006
        %v1008 = vpop.f32.mrb[0].mxu0
        %v1009 = vadd.f32 0.0, %v1008
        %1010 = vmatprep.mubr.f32.mxu0 0.0
        %1011 = vmatmul.mubr.f32.gmra.mrb[0].mxu0 %v665
        %v1012 = vpop.f32.mrb[0].mxu0
        %v1013 = vadd.f32 0.0, %v1012
        %v1014 = vpop.f32.mrb[0].mxu0
        %v1015 = vadd.f32 0.0, %v1014
        %1016 = vmatprep.mubr.f32.mxu0 0.0
        %1017 = vmatmul.mubr.f32.gmra.mrb[0].mxu0 %v668
        %v1018 = vpop.f32.mrb[0].mxu0
        %v1019 = vadd.f32 0.0, %v1018
        %v1020 = vpop.f32.mrb[0].mxu0
        %v1021 = vadd.f32 0.0, %v1020
        %1022 = vmatprep.mubr.f32.mxu0 0.0
        %1023 = vmatmul.mubr.f32.gmra.mrb[0].mxu0 %v671
        %v1024 = vpop.f32.mrb[0].mxu0
        %v1025 = vadd.f32 0.0, %v1024
        %v1026 = vpop.f32.mrb[0].mxu0
        %v1027 = vadd.f32 0.0, %v1026
        %1028 = vdwg.mxu0
        %v1029 = vld [vmem:[%s2] sm:$0xff]
        %v1030 = vld [vmem:[%s2 + $0x8] sm:$0xff]
        %v1031 = vld [vmem:[%s2 + $0x10] sm:$0xff]
        %v1032 = vld [vmem:[%s2 + $0x18] sm:$0xff]
        %vm1033 = vcmask 261120
        %v1035 = vsel %vm1033, %v1029, 0
        %v1038 = vsel %vm1033, %v1030, 0
        %v1041 = vsel %vm1033, %v1031, 0
        %v1044 = vsel %vm1033, %v1032, 0
        %1046 = vmatprep.subr.mxu0 %v625
        %1047 = vmatpush1.msra.mxu0 %v624
        %1048 = vmatprep.subr.mxu0 %v633
        %1049 = vmatpush1.msra.mxu0 %v632
        %1050 = vmatprep.subr.mxu0 %v641
        %1051 = vmatpush1.msra.mxu0 %v640
        %1052 = vmatprep.subr.mxu0 %v649
        %1053 = vmatpush1.msra.mxu0 %v648
        %1054 = vmatprep.subr.mxu0 0.0
        %1055 = vmatpush1.msra.mxu0 0.0
        %1056 = vmatprep.subr.mxu0 0.0
        %1057 = vmatpush1.msra.mxu0 0.0
        %1058 = vmatprep.subr.mxu0 0.0
        %1059 = vmatpush1.msra.mxu0 0.0
        %1060 = vmatprep.subr.mxu0 0.0
        %1061 = vmatpush1.msra.mxu0 0.0
        %1062 = vmatprep.subr.mxu0 0.0
        %1063 = vmatpush1.msra.mxu0 0.0
        %1064 = vmatprep.subr.mxu0 0.0
        %1065 = vmatpush1.msra.mxu0 0.0
        %1066 = vmatprep.subr.mxu0 0.0
        %1067 = vmatpush1.msra.mxu0 0.0
        %1068 = vmatprep.subr.mxu0 0.0
        %1069 = vmatpush1.msra.mxu0 0.0
        %1070 = vmatprep.subr.mxu0 0.0
        %1071 = vmatpush1.msra.mxu0 0.0
        %1072 = vmatprep.subr.mxu0 0.0
        %1073 = vmatpush1.msra.mxu0 0.0
        %1074 = vmatprep.subr.mxu0 0.0
        %1075 = vmatpush1.msra.mxu0 0.0
        %1076 = vmatprep.subr.mxu0 0.0
        %1077 = vmatpush1.msra.mxu0 0.0
        %1078 = vmatprep.subr.mxu0 0.0
        %1079 = vmatpush1.msra.mxu0 0.0
        %1080 = vmatprep.subr.mxu0 0.0
        %1081 = vmatpush1.msra.mxu0 0.0
        %1082 = vmatprep.subr.mxu0 0.0
        %1083 = vmatpush1.msra.mxu0 0.0
        %1084 = vmatprep.subr.mxu0 0.0
        %1085 = vmatpush1.msra.mxu0 0.0
        %1086 = vmatprep.subr.mxu0 0.0
        %1087 = vmatpush1.msra.mxu0 0.0
        %1088 = vmatprep.subr.mxu0 0.0
        %1089 = vmatpush1.msra.mxu0 0.0
        %1090 = vmatprep.subr.mxu0 0.0
        %1091 = vmatpush1.msra.mxu0 0.0
        %1092 = vmatprep.subr.mxu0 0.0
        %1093 = vmatpush1.msra.mxu0 0.0
        %1094 = vmatprep.subr.mxu0 0.0
        %1095 = vmatpush1.msra.mxu0 0.0
        %1096 = vmatprep.subr.mxu0 0.0
        %1097 = vmatpush1.msra.mxu0 0.0
        %1098 = vmatprep.subr.mxu0 0.0
        %1099 = vmatpush1.msra.mxu0 0.0
        %1100 = vmatprep.subr.mxu0 0.0
        %1101 = vmatpush1.msra.mxu0 0.0
        %1102 = vmatprep.subr.mxu0 0.0
        %1103 = vmatpush1.msra.mxu0 0.0
        %1104 = vmatprep.subr.mxu0 0.0
        %1105 = vmatpush1.msra.mxu0 0.0
        %1106 = vmatprep.subr.mxu0 0.0
        %1107 = vmatpush1.msra.mxu0 0.0
        %1108 = vmatprep.subr.mxu0 0.0
        %1109 = vmatpush1.msra.mxu0 0.0
        %1110 = vmatprep.mubr.f32.mxu0 0.0
        %1111 = vmatmul.mubr.f32.gmra.mrb[0].mxu0 %v1035
        %v1112 = vpop.f32.mrb[0].mxu0
        %v1113 = vadd.f32 %v740, %v1112
        %v1114 = vpop.f32.mrb[0].mxu0
        %v1115 = vadd.f32 %v742, %v1114
        %1116 = vmatprep.mubr.f32.mxu0 0.0
        %1117 = vmatmul.mubr.f32.gmra.mrb[0].mxu0 %v1038
        %v1118 = vpop.f32.mrb[0].mxu0
        %v1119 = vadd.f32 %v746, %v1118
        %v1120 = vpop.f32.mrb[0].mxu0
        %v1121 = vadd.f32 %v748, %v1120
        %1122 = vmatprep.mubr.f32.mxu0 0.0
        %1123 = vmatmul.mubr.f32.gmra.mrb[0].mxu0 %v1041
        %v1124 = vpop.f32.mrb[0].mxu0
        %v1125 = vadd.f32 %v752, %v1124
        %v1126 = vpop.f32.mrb[0].mxu0
        %v1127 = vadd.f32 %v754, %v1126
        %1128 = vmatprep.mubr.f32.mxu0 0.0
        %1129 = vmatmul.mubr.f32.gmra.mrb[0].mxu0 %v1044
        %v1130 = vpop.f32.mrb[0].mxu0
        %v1131 = vadd.f32 %v758, %v1130
        %v1132 = vpop.f32.mrb[0].mxu0
        %v1133 = vadd.f32 %v760, %v1132
        %1134 = vdwg.mxu0
        %1135 = vmatprep.subr.mxu0 %v627
        %1136 = vmatpush1.msra.mxu0 %v626
        %1137 = vmatprep.subr.mxu0 %v635
        %1138 = vmatpush1.msra.mxu0 %v634
        %1139 = vmatprep.subr.mxu0 %v643
        %1140 = vmatpush1.msra.mxu0 %v642
        %1141 = vmatprep.subr.mxu0 %v651
        %1142 = vmatpush1.msra.mxu0 %v650
        %1143 = vmatprep.subr.mxu0 0.0
        %1144 = vmatpush1.msra.mxu0 0.0
        %1145 = vmatprep.subr.mxu0 0.0
        %1146 = vmatpush1.msra.mxu0 0.0
        %1147 = vmatprep.subr.mxu0 0.0
        %1148 = vmatpush1.msra.mxu0 0.0
        %1149 = vmatprep.subr.mxu0 0.0
        %1150 = vmatpush1.msra.mxu0 0.0
        %1151 = vmatprep.subr.mxu0 0.0
        %1152 = vmatpush1.msra.mxu0 0.0
        %1153 = vmatprep.subr.mxu0 0.0
        %1154 = vmatpush1.msra.mxu0 0.0
        %1155 = vmatprep.subr.mxu0 0.0
        %1156 = vmatpush1.msra.mxu0 0.0
        %1157 = vmatprep.subr.mxu0 0.0
        %1158 = vmatpush1.msra.mxu0 0.0
        %1159 = vmatprep.subr.mxu0 0.0
        %1160 = vmatpush1.msra.mxu0 0.0
        %1161 = vmatprep.subr.mxu0 0.0
        %1162 = vmatpush1.msra.mxu0 0.0
        %1163 = vmatprep.subr.mxu0 0.0
        %1164 = vmatpush1.msra.mxu0 0.0
        %1165 = vmatprep.subr.mxu0 0.0
        %1166 = vmatpush1.msra.mxu0 0.0
        %1167 = vmatprep.subr.mxu0 0.0
        %1168 = vmatpush1.msra.mxu0 0.0
        %1169 = vmatprep.subr.mxu0 0.0
        %1170 = vmatpush1.msra.mxu0 0.0
        %1171 = vmatprep.subr.mxu0 0.0
        %1172 = vmatpush1.msra.mxu0 0.0
        %1173 = vmatprep.subr.mxu0 0.0
        %1174 = vmatpush1.msra.mxu0 0.0
        %1175 = vmatprep.subr.mxu0 0.0
        %1176 = vmatpush1.msra.mxu0 0.0
        %1177 = vmatprep.subr.mxu0 0.0
        %1178 = vmatpush1.msra.mxu0 0.0
        %1179 = vmatprep.subr.mxu0 0.0
        %1180 = vmatpush1.msra.mxu0 0.0
        %1181 = vmatprep.subr.mxu0 0.0
        %1182 = vmatpush1.msra.mxu0 0.0
        %1183 = vmatprep.subr.mxu0 0.0
        %1184 = vmatpush1.msra.mxu0 0.0
        %1185 = vmatprep.subr.mxu0 0.0
        %1186 = vmatpush1.msra.mxu0 0.0
        %1187 = vmatprep.subr.mxu0 0.0
        %1188 = vmatpush1.msra.mxu0 0.0
        %1189 = vmatprep.subr.mxu0 0.0
        %1190 = vmatpush1.msra.mxu0 0.0
        %1191 = vmatprep.subr.mxu0 0.0
        %1192 = vmatpush1.msra.mxu0 0.0
        %1193 = vmatprep.subr.mxu0 0.0
        %1194 = vmatpush1.msra.mxu0 0.0
        %1195 = vmatprep.subr.mxu0 0.0
        %1196 = vmatpush1.msra.mxu0 0.0
        %1197 = vmatprep.subr.mxu0 0.0
        %1198 = vmatpush1.msra.mxu0 0.0
        %1199 = vmatprep.mubr.f32.mxu0 0.0
        %1200 = vmatmul.mubr.f32.gmra.mrb[0].mxu0 %v1035
        %v1201 = vpop.f32.mrb[0].mxu0
        %v1202 = vadd.f32 %v829, %v1201
        %v1203 = vpop.f32.mrb[0].mxu0
        %v1204 = vadd.f32 %v831, %v1203
        %1205 = vmatprep.mubr.f32.mxu0 0.0
        %1206 = vmatmul.mubr.f32.gmra.mrb[0].mxu0 %v1038
        %v1207 = vpop.f32.mrb[0].mxu0
        %v1208 = vadd.f32 %v835, %v1207
        %v1209 = vpop.f32.mrb[0].mxu0
        %v1210 = vadd.f32 %v837, %v1209
        %1211 = vmatprep.mubr.f32.mxu0 0.0
        %1212 = vmatmul.mubr.f32.gmra.mrb[0].mxu0 %v1041
        %v1213 = vpop.f32.mrb[0].mxu0
        %v1214 = vadd.f32 %v841, %v1213
        %v1215 = vpop.f32.mrb[0].mxu0
        %v1216 = vadd.f32 %v843, %v1215
        %1217 = vmatprep.mubr.f32.mxu0 0.0
        %1218 = vmatmul.mubr.f32.gmra.mrb[0].mxu0 %v1044
        %v1219 = vpop.f32.mrb[0].mxu0
        %v1220 = vadd.f32 %v847, %v1219
        %v1221 = vpop.f32.mrb[0].mxu0
        %v1222 = vadd.f32 %v849, %v1221
        %1223 = vdwg.mxu0
        %1224 = vmatprep.subr.mxu0 %v629
        %1225 = vmatpush1.msra.mxu0 %v628
        %1226 = vmatprep.subr.mxu0 %v637
        %1227 = vmatpush1.msra.mxu0 %v636
        %1228 = vmatprep.subr.mxu0 %v645
        %1229 = vmatpush1.msra.mxu0 %v644
        %1230 = vmatprep.subr.mxu0 %v653
        %1231 = vmatpush1.msra.mxu0 %v652
        %1232 = vmatprep.subr.mxu0 0.0
        %1233 = vmatpush1.msra.mxu0 0.0
        %1234 = vmatprep.subr.mxu0 0.0
        %1235 = vmatpush1.msra.mxu0 0.0
        %1236 = vmatprep.subr.mxu0 0.0
        %1237 = vmatpush1.msra.mxu0 0.0
        %1238 = vmatprep.subr.mxu0 0.0
        %1239 = vmatpush1.msra.mxu0 0.0
        %1240 = vmatprep.subr.mxu0 0.0
        %1241 = vmatpush1.msra.mxu0 0.0
        %1242 = vmatprep.subr.mxu0 0.0
        %1243 = vmatpush1.msra.mxu0 0.0
        %1244 = vmatprep.subr.mxu0 0.0
        %1245 = vmatpush1.msra.mxu0 0.0
        %1246 = vmatprep.subr.mxu0 0.0
        %1247 = vmatpush1.msra.mxu0 0.0
        %1248 = vmatprep.subr.mxu0 0.0
        %1249 = vmatpush1.msra.mxu0 0.0
        %1250 = vmatprep.subr.mxu0 0.0
        %1251 = vmatpush1.msra.mxu0 0.0
        %1252 = vmatprep.subr.mxu0 0.0
        %1253 = vmatpush1.msra.mxu0 0.0
        %1254 = vmatprep.subr.mxu0 0.0
        %1255 = vmatpush1.msra.mxu0 0.0
        %1256 = vmatprep.subr.mxu0 0.0
        %1257 = vmatpush1.msra.mxu0 0.0
        %1258 = vmatprep.subr.mxu0 0.0
        %1259 = vmatpush1.msra.mxu0 0.0
        %1260 = vmatprep.subr.mxu0 0.0
        %1261 = vmatpush1.msra.mxu0 0.0
        %1262 = vmatprep.subr.mxu0 0.0
        %1263 = vmatpush1.msra.mxu0 0.0
        %1264 = vmatprep.subr.mxu0 0.0
        %1265 = vmatpush1.msra.mxu0 0.0
        %1266 = vmatprep.subr.mxu0 0.0
        %1267 = vmatpush1.msra.mxu0 0.0
        %1268 = vmatprep.subr.mxu0 0.0
        %1269 = vmatpush1.msra.mxu0 0.0
        %1270 = vmatprep.subr.mxu0 0.0
        %1271 = vmatpush1.msra.mxu0 0.0
        %1272 = vmatprep.subr.mxu0 0.0
        %1273 = vmatpush1.msra.mxu0 0.0
        %1274 = vmatprep.subr.mxu0 0.0
        %1275 = vmatpush1.msra.mxu0 0.0
        %1276 = vmatprep.subr.mxu0 0.0
        %1277 = vmatpush1.msra.mxu0 0.0
        %1278 = vmatprep.subr.mxu0 0.0
        %1279 = vmatpush1.msra.mxu0 0.0
        %1280 = vmatprep.subr.mxu0 0.0
        %1281 = vmatpush1.msra.mxu0 0.0
        %1282 = vmatprep.subr.mxu0 0.0
        %1283 = vmatpush1.msra.mxu0 0.0
        %1284 = vmatprep.subr.mxu0 0.0
        %1285 = vmatpush1.msra.mxu0 0.0
        %1286 = vmatprep.subr.mxu0 0.0
        %1287 = vmatpush1.msra.mxu0 0.0
        %1288 = vmatprep.mubr.f32.mxu0 0.0
        %1289 = vmatmul.mubr.f32.gmra.mrb[0].mxu0 %v1035
        %v1290 = vpop.f32.mrb[0].mxu0
        %v1291 = vadd.f32 %v918, %v1290
        %v1292 = vpop.f32.mrb[0].mxu0
        %v1293 = vadd.f32 %v920, %v1292
        %1294 = vmatprep.mubr.f32.mxu0 0.0
        %1295 = vmatmul.mubr.f32.gmra.mrb[0].mxu0 %v1038
        %v1296 = vpop.f32.mrb[0].mxu0
        %v1297 = vadd.f32 %v924, %v1296
        %v1298 = vpop.f32.mrb[0].mxu0
        %v1299 = vadd.f32 %v926, %v1298
        %1300 = vmatprep.mubr.f32.mxu0 0.0
        %1301 = vmatmul.mubr.f32.gmra.mrb[0].mxu0 %v1041
        %v1302 = vpop.f32.mrb[0].mxu0
        %v1303 = vadd.f32 %v930, %v1302
        %v1304 = vpop.f32.mrb[0].mxu0
        %v1305 = vadd.f32 %v932, %v1304
        %1306 = vmatprep.mubr.f32.mxu0 0.0
        %1307 = vmatmul.mubr.f32.gmra.mrb[0].mxu0 %v1044
        %v1308 = vpop.f32.mrb[0].mxu0
        %v1309 = vadd.f32 %v936, %v1308
        %v1310 = vpop.f32.mrb[0].mxu0
        %v1311 = vadd.f32 %v938, %v1310
        %1312 = vdwg.mxu0
        %1313 = vmatprep.subr.mxu0 %v631
        %1314 = vmatpush1.msra.mxu0 %v630
        %1315 = vmatprep.subr.mxu0 %v639
        %1316 = vmatpush1.msra.mxu0 %v638
        %1317 = vmatprep.subr.mxu0 %v647
        %1318 = vmatpush1.msra.mxu0 %v646
        %1319 = vmatprep.subr.mxu0 %v655
        %1320 = vmatpush1.msra.mxu0 %v654
        %1321 = vmatprep.subr.mxu0 0.0
        %1322 = vmatpush1.msra.mxu0 0.0
        %1323 = vmatprep.subr.mxu0 0.0
        %1324 = vmatpush1.msra.mxu0 0.0
        %1325 = vmatprep.subr.mxu0 0.0
        %1326 = vmatpush1.msra.mxu0 0.0
        %1327 = vmatprep.subr.mxu0 0.0
        %1328 = vmatpush1.msra.mxu0 0.0
        %1329 = vmatprep.subr.mxu0 0.0
        %1330 = vmatpush1.msra.mxu0 0.0
        %1331 = vmatprep.subr.mxu0 0.0
        %1332 = vmatpush1.msra.mxu0 0.0
        %1333 = vmatprep.subr.mxu0 0.0
        %1334 = vmatpush1.msra.mxu0 0.0
        %1335 = vmatprep.subr.mxu0 0.0
        %1336 = vmatpush1.msra.mxu0 0.0
        %1337 = vmatprep.subr.mxu0 0.0
        %1338 = vmatpush1.msra.mxu0 0.0
        %1339 = vmatprep.subr.mxu0 0.0
        %1340 = vmatpush1.msra.mxu0 0.0
        %1341 = vmatprep.subr.mxu0 0.0
        %1342 = vmatpush1.msra.mxu0 0.0
        %1343 = vmatprep.subr.mxu0 0.0
        %1344 = vmatpush1.msra.mxu0 0.0
        %1345 = vmatprep.subr.mxu0 0.0
        %1346 = vmatpush1.msra.mxu0 0.0
        %1347 = vmatprep.subr.mxu0 0.0
        %1348 = vmatpush1.msra.mxu0 0.0
        %1349 = vmatprep.subr.mxu0 0.0
        %1350 = vmatpush1.msra.mxu0 0.0
        %1351 = vmatprep.subr.mxu0 0.0
        %1352 = vmatpush1.msra.mxu0 0.0
        %1353 = vmatprep.subr.mxu0 0.0
        %1354 = vmatpush1.msra.mxu0 0.0
        %1355 = vmatprep.subr.mxu0 0.0
        %1356 = vmatpush1.msra.mxu0 0.0
        %1357 = vmatprep.subr.mxu0 0.0
        %1358 = vmatpush1.msra.mxu0 0.0
        %1359 = vmatprep.subr.mxu0 0.0
        %1360 = vmatpush1.msra.mxu0 0.0
        %1361 = vmatprep.subr.mxu0 0.0
        %1362 = vmatpush1.msra.mxu0 0.0
        %1363 = vmatprep.subr.mxu0 0.0
        %1364 = vmatpush1.msra.mxu0 0.0
        %1365 = vmatprep.subr.mxu0 0.0
        %1366 = vmatpush1.msra.mxu0 0.0
        %1367 = vmatprep.subr.mxu0 0.0
        %1368 = vmatpush1.msra.mxu0 0.0
        %1369 = vmatprep.subr.mxu0 0.0
        %1370 = vmatpush1.msra.mxu0 0.0
        %1371 = vmatprep.subr.mxu0 0.0
        %1372 = vmatpush1.msra.mxu0 0.0
        %1373 = vmatprep.subr.mxu0 0.0
        %1374 = vmatpush1.msra.mxu0 0.0
        %1375 = vmatprep.subr.mxu0 0.0
        %1376 = vmatpush1.msra.mxu0 0.0
        %1377 = vmatprep.mubr.f32.mxu0 0.0
        %1378 = vmatmul.mubr.f32.gmra.mrb[0].mxu0 %v1035
        %v1379 = vpop.f32.mrb[0].mxu0
        %v1380 = vadd.f32 %v1007, %v1379
        %v1381 = vpop.f32.mrb[0].mxu0
        %v1382 = vadd.f32 %v1009, %v1381
        %1383 = vmatprep.mubr.f32.mxu0 0.0
        %1384 = vmatmul.mubr.f32.gmra.mrb[0].mxu0 %v1038
        %v1385 = vpop.f32.mrb[0].mxu0
        %v1386 = vadd.f32 %v1013, %v1385
        %v1387 = vpop.f32.mrb[0].mxu0
        %v1388 = vadd.f32 %v1015, %v1387
        %1389 = vmatprep.mubr.f32.mxu0 0.0
        %1390 = vmatmul.mubr.f32.gmra.mrb[0].mxu0 %v1041
        %v1391 = vpop.f32.mrb[0].mxu0
        %v1392 = vadd.f32 %v1019, %v1391
        %v1393 = vpop.f32.mrb[0].mxu0
        %v1394 = vadd.f32 %v1021, %v1393
        %1395 = vmatprep.mubr.f32.mxu0 0.0
        %1396 = vmatmul.mubr.f32.gmra.mrb[0].mxu0 %v1044
        %v1397 = vpop.f32.mrb[0].mxu0
        %v1398 = vadd.f32 %v1025, %v1397
        %v1399 = vpop.f32.mrb[0].mxu0
        %v1400 = vadd.f32 %v1027, %v1399
        %1401 = vdwg.mxu0
        %v1402 = vmax.f32 %v1113, 0.0
        %v1403 = vmax.f32 %v1115, 0.0
        %v1404 = vmax.f32 %v1202, 0.0
        %v1405 = vmax.f32 %v1204, 0.0
        %v1406 = vmax.f32 %v1291, 0.0
        %v1407 = vmax.f32 %v1293, 0.0
        %v1408 = vmax.f32 %v1380, 0.0
        %v1409 = vmax.f32 %v1382, 0.0
        %v1410 = vmax.f32 %v1119, 0.0
        %v1411 = vmax.f32 %v1121, 0.0
        %v1412 = vmax.f32 %v1208, 0.0
        %v1413 = vmax.f32 %v1210, 0.0
        %v1414 = vmax.f32 %v1297, 0.0
        %v1415 = vmax.f32 %v1299, 0.0
        %v1416 = vmax.f32 %v1386, 0.0
        %v1417 = vmax.f32 %v1388, 0.0
        %v1418 = vmax.f32 %v1125, 0.0
        %v1419 = vmax.f32 %v1127, 0.0
        %v1420 = vmax.f32 %v1214, 0.0
        %v1421 = vmax.f32 %v1216, 0.0
        %v1422 = vmax.f32 %v1303, 0.0
        %v1423 = vmax.f32 %v1305, 0.0
        %v1424 = vmax.f32 %v1392, 0.0
        %v1425 = vmax.f32 %v1394, 0.0
        %v1426 = vmax.f32 %v1131, 0.0
        %v1427 = vmax.f32 %v1133, 0.0
        %v1428 = vmax.f32 %v1220, 0.0
        %v1429 = vmax.f32 %v1222, 0.0
        %v1430 = vmax.f32 %v1309, 0.0
        %v1431 = vmax.f32 %v1311, 0.0
        %v1432 = vmax.f32 %v1398, 0.0
        %v1433 = vmax.f32 %v1400, 0.0
        %s1434 = scalar_lea.vmem %s1, 64
        %v1435 = vld [vmem:[%s1434] sm:$0xff]
        %v1436 = vld [vmem:[%s1434 + $0x8] sm:$0xff]
        %v1437 = vld [vmem:[%s1434 + $0x10] sm:$0xff]
        %v1438 = vld [vmem:[%s1434 + $0x18] sm:$0xff]
        %v1440 = vsel %vm255, %v1435, 0
        %v1443 = vsel %vm255, %v1436, 0
        %v1446 = vsel %vm255, %v1437, 0
        %v1449 = vsel %vm255, %v1438, 0
        %1451 = vmatprep.subr.mxu0 %v244
        %1452 = vmatpush1.msra.mxu0 %v243
        %1453 = vmatprep.subr.mxu0 0.0
        %1454 = vmatpush1.msra.mxu0 0.0
        %1455 = vmatprep.subr.mxu0 0.0
        %1456 = vmatpush1.msra.mxu0 0.0
        %1457 = vmatprep.subr.mxu0 0.0
        %1458 = vmatpush1.msra.mxu0 0.0
        %1459 = vmatprep.subr.mxu0 0.0
        %1460 = vmatpush1.msra.mxu0 0.0
        %1461 = vmatprep.subr.mxu0 0.0
        %1462 = vmatpush1.msra.mxu0 0.0
        %1463 = vmatprep.subr.mxu0 0.0
        %1464 = vmatpush1.msra.mxu0 0.0
        %1465 = vmatprep.subr.mxu0 0.0
        %1466 = vmatpush1.msra.mxu0 0.0
        %1467 = vmatprep.subr.mxu0 0.0
        %1468 = vmatpush1.msra.mxu0 0.0
        %1469 = vmatprep.subr.mxu0 0.0
        %1470 = vmatpush1.msra.mxu0 0.0
        %1471 = vmatprep.subr.mxu0 0.0
        %1472 = vmatpush1.msra.mxu0 0.0
        %1473 = vmatprep.subr.mxu0 0.0
        %1474 = vmatpush1.msra.mxu0 0.0
        %1475 = vmatprep.subr.mxu0 0.0
        %1476 = vmatpush1.msra.mxu0 0.0
        %1477 = vmatprep.subr.mxu0 0.0
        %1478 = vmatpush1.msra.mxu0 0.0
        %1479 = vmatprep.subr.mxu0 0.0
        %1480 = vmatpush1.msra.mxu0 0.0
        %1481 = vmatprep.subr.mxu0 0.0
        %1482 = vmatpush1.msra.mxu0 0.0
        %1483 = vmatprep.subr.mxu0 0.0
        %1484 = vmatpush1.msra.mxu0 0.0
        %1485 = vmatprep.subr.mxu0 0.0
        %1486 = vmatpush1.msra.mxu0 0.0
        %1487 = vmatprep.subr.mxu0 0.0
        %1488 = vmatpush1.msra.mxu0 0.0
        %1489 = vmatprep.subr.mxu0 0.0
        %1490 = vmatpush1.msra.mxu0 0.0
        %1491 = vmatprep.subr.mxu0 0.0
        %1492 = vmatpush1.msra.mxu0 0.0
        %1493 = vmatprep.subr.mxu0 0.0
        %1494 = vmatpush1.msra.mxu0 0.0
        %1495 = vmatprep.subr.mxu0 0.0
        %1496 = vmatpush1.msra.mxu0 0.0
        %1497 = vmatprep.subr.mxu0 0.0
        %1498 = vmatpush1.msra.mxu0 0.0
        %1499 = vmatprep.subr.mxu0 0.0
        %1500 = vmatpush1.msra.mxu0 0.0
        %1501 = vmatprep.subr.mxu0 0.0
        %1502 = vmatpush1.msra.mxu0 0.0
        %1503 = vmatprep.subr.mxu0 0.0
        %1504 = vmatpush1.msra.mxu0 0.0
        %1505 = vmatprep.subr.mxu0 0.0
        %1506 = vmatpush1.msra.mxu0 0.0
        %1507 = vmatprep.subr.mxu0 0.0
        %1508 = vmatpush1.msra.mxu0 0.0
        %1509 = vmatprep.subr.mxu0 0.0
        %1510 = vmatpush1.msra.mxu0 0.0
        %1511 = vmatprep.subr.mxu0 0.0
        %1512 = vmatpush1.msra.mxu0 0.0
        %1513 = vmatprep.subr.mxu0 0.0
        %1514 = vmatpush1.msra.mxu0 0.0
        %1515 = vmatprep.mubr.f32.mxu0 0.0
        %1516 = vmatmul.mubr.f32.gmra.mrb[0].mxu0 %v1440
        %v1517 = vpop.f32.mrb[0].mxu0
        %v1518 = vadd.f32 0.0, %v1517
        %v1519 = vpop.f32.mrb[0].mxu0
        %v1520 = vadd.f32 0.0, %v1519
        %1521 = vmatprep.mubr.f32.mxu0 0.0
        %1522 = vmatmul.mubr.f32.gmra.mrb[0].mxu0 %v1443
        %v1523 = vpop.f32.mrb[0].mxu0
        %v1524 = vadd.f32 0.0, %v1523
        %v1525 = vpop.f32.mrb[0].mxu0
        %v1526 = vadd.f32 0.0, %v1525
        %1527 = vmatprep.mubr.f32.mxu0 0.0
        %1528 = vmatmul.mubr.f32.gmra.mrb[0].mxu0 %v1446
        %v1529 = vpop.f32.mrb[0].mxu0
        %v1530 = vadd.f32 0.0, %v1529
        %v1531 = vpop.f32.mrb[0].mxu0
        %v1532 = vadd.f32 0.0, %v1531
        %1533 = vmatprep.mubr.f32.mxu0 0.0
        %1534 = vmatmul.mubr.f32.gmra.mrb[0].mxu0 %v1449
        %v1535 = vpop.f32.mrb[0].mxu0
        %v1536 = vadd.f32 0.0, %v1535
        %v1537 = vpop.f32.mrb[0].mxu0
        %v1538 = vadd.f32 0.0, %v1537
        %1539 = vdwg.mxu0
        %1540 = vmatprep.subr.mxu0 %v246
        %1541 = vmatpush1.msra.mxu0 %v245
        %1542 = vmatprep.subr.mxu0 0.0
        %1543 = vmatpush1.msra.mxu0 0.0
        %1544 = vmatprep.subr.mxu0 0.0
        %1545 = vmatpush1.msra.mxu0 0.0
        %1546 = vmatprep.subr.mxu0 0.0
        %1547 = vmatpush1.msra.mxu0 0.0
        %1548 = vmatprep.subr.mxu0 0.0
        %1549 = vmatpush1.msra.mxu0 0.0
        %1550 = vmatprep.subr.mxu0 0.0
        %1551 = vmatpush1.msra.mxu0 0.0
        %1552 = vmatprep.subr.mxu0 0.0
        %1553 = vmatpush1.msra.mxu0 0.0
        %1554 = vmatprep.subr.mxu0 0.0
        %1555 = vmatpush1.msra.mxu0 0.0
        %1556 = vmatprep.subr.mxu0 0.0
        %1557 = vmatpush1.msra.mxu0 0.0
        %1558 = vmatprep.subr.mxu0 0.0
        %1559 = vmatpush1.msra.mxu0 0.0
        %1560 = vmatprep.subr.mxu0 0.0
        %1561 = vmatpush1.msra.mxu0 0.0
        %1562 = vmatprep.subr.mxu0 0.0
        %1563 = vmatpush1.msra.mxu0 0.0
        %1564 = vmatprep.subr.mxu0 0.0
        %1565 = vmatpush1.msra.mxu0 0.0
        %1566 = vmatprep.subr.mxu0 0.0
        %1567 = vmatpush1.msra.mxu0 0.0
        %1568 = vmatprep.subr.mxu0 0.0
        %1569 = vmatpush1.msra.mxu0 0.0
        %1570 = vmatprep.subr.mxu0 0.0
        %1571 = vmatpush1.msra.mxu0 0.0
        %1572 = vmatprep.subr.mxu0 0.0
        %1573 = vmatpush1.msra.mxu0 0.0
        %1574 = vmatprep.subr.mxu0 0.0
        %1575 = vmatpush1.msra.mxu0 0.0
        %1576 = vmatprep.subr.mxu0 0.0
        %1577 = vmatpush1.msra.mxu0 0.0
        %1578 = vmatprep.subr.mxu0 0.0
        %1579 = vmatpush1.msra.mxu0 0.0
        %1580 = vmatprep.subr.mxu0 0.0
        %1581 = vmatpush1.msra.mxu0 0.0
        %1582 = vmatprep.subr.mxu0 0.0
        %1583 = vmatpush1.msra.mxu0 0.0
        %1584 = vmatprep.subr.mxu0 0.0
        %1585 = vmatpush1.msra.mxu0 0.0
        %1586 = vmatprep.subr.mxu0 0.0
        %1587 = vmatpush1.msra.mxu0 0.0
        %1588 = vmatprep.subr.mxu0 0.0
        %1589 = vmatpush1.msra.mxu0 0.0
        %1590 = vmatprep.subr.mxu0 0.0
        %1591 = vmatpush1.msra.mxu0 0.0
        %1592 = vmatprep.subr.mxu0 0.0
        %1593 = vmatpush1.msra.mxu0 0.0
        %1594 = vmatprep.subr.mxu0 0.0
        %1595 = vmatpush1.msra.mxu0 0.0
        %1596 = vmatprep.subr.mxu0 0.0
        %1597 = vmatpush1.msra.mxu0 0.0
        %1598 = vmatprep.subr.mxu0 0.0
        %1599 = vmatpush1.msra.mxu0 0.0
        %1600 = vmatprep.subr.mxu0 0.0
        %1601 = vmatpush1.msra.mxu0 0.0
        %1602 = vmatprep.subr.mxu0 0.0
        %1603 = vmatpush1.msra.mxu0 0.0
        %1604 = vmatprep.mubr.f32.mxu0 0.0
        %1605 = vmatmul.mubr.f32.gmra.mrb[0].mxu0 %v1440
        %v1606 = vpop.f32.mrb[0].mxu0
        %v1607 = vadd.f32 0.0, %v1606
        %v1608 = vpop.f32.mrb[0].mxu0
        %v1609 = vadd.f32 0.0, %v1608
        %1610 = vmatprep.mubr.f32.mxu0 0.0
        %1611 = vmatmul.mubr.f32.gmra.mrb[0].mxu0 %v1443
        %v1612 = vpop.f32.mrb[0].mxu0
        %v1613 = vadd.f32 0.0, %v1612
        %v1614 = vpop.f32.mrb[0].mxu0
        %v1615 = vadd.f32 0.0, %v1614
        %1616 = vmatprep.mubr.f32.mxu0 0.0
        %1617 = vmatmul.mubr.f32.gmra.mrb[0].mxu0 %v1446
        %v1618 = vpop.f32.mrb[0].mxu0
        %v1619 = vadd.f32 0.0, %v1618
        %v1620 = vpop.f32.mrb[0].mxu0
        %v1621 = vadd.f32 0.0, %v1620
        %1622 = vmatprep.mubr.f32.mxu0 0.0
        %1623 = vmatmul.mubr.f32.gmra.mrb[0].mxu0 %v1449
        %v1624 = vpop.f32.mrb[0].mxu0
        %v1625 = vadd.f32 0.0, %v1624
        %v1626 = vpop.f32.mrb[0].mxu0
        %v1627 = vadd.f32 0.0, %v1626
        %1628 = vdwg.mxu0
        %1629 = vmatprep.subr.mxu0 %v248
        %1630 = vmatpush1.msra.mxu0 %v247
        %1631 = vmatprep.subr.mxu0 0.0
        %1632 = vmatpush1.msra.mxu0 0.0
        %1633 = vmatprep.subr.mxu0 0.0
        %1634 = vmatpush1.msra.mxu0 0.0
        %1635 = vmatprep.subr.mxu0 0.0
        %1636 = vmatpush1.msra.mxu0 0.0
        %1637 = vmatprep.subr.mxu0 0.0
        %1638 = vmatpush1.msra.mxu0 0.0
        %1639 = vmatprep.subr.mxu0 0.0
        %1640 = vmatpush1.msra.mxu0 0.0
        %1641 = vmatprep.subr.mxu0 0.0
        %1642 = vmatpush1.msra.mxu0 0.0
        %1643 = vmatprep.subr.mxu0 0.0
        %1644 = vmatpush1.msra.mxu0 0.0
        %1645 = vmatprep.subr.mxu0 0.0
        %1646 = vmatpush1.msra.mxu0 0.0
        %1647 = vmatprep.subr.mxu0 0.0
        %1648 = vmatpush1.msra.mxu0 0.0
        %1649 = vmatprep.subr.mxu0 0.0
        %1650 = vmatpush1.msra.mxu0 0.0
        %1651 = vmatprep.subr.mxu0 0.0
        %1652 = vmatpush1.msra.mxu0 0.0
        %1653 = vmatprep.subr.mxu0 0.0
        %1654 = vmatpush1.msra.mxu0 0.0
        %1655 = vmatprep.subr.mxu0 0.0
        %1656 = vmatpush1.msra.mxu0 0.0
        %1657 = vmatprep.subr.mxu0 0.0
        %1658 = vmatpush1.msra.mxu0 0.0
        %1659 = vmatprep.subr.mxu0 0.0
        %1660 = vmatpush1.msra.mxu0 0.0
        %1661 = vmatprep.subr.mxu0 0.0
        %1662 = vmatpush1.msra.mxu0 0.0
        %1663 = vmatprep.subr.mxu0 0.0
        %1664 = vmatpush1.msra.mxu0 0.0
        %1665 = vmatprep.subr.mxu0 0.0
        %1666 = vmatpush1.msra.mxu0 0.0
        %1667 = vmatprep.subr.mxu0 0.0
        %1668 = vmatpush1.msra.mxu0 0.0
        %1669 = vmatprep.subr.mxu0 0.0
        %1670 = vmatpush1.msra.mxu0 0.0
        %1671 = vmatprep.subr.mxu0 0.0
        %1672 = vmatpush1.msra.mxu0 0.0
        %1673 = vmatprep.subr.mxu0 0.0
        %1674 = vmatpush1.msra.mxu0 0.0
        %1675 = vmatprep.subr.mxu0 0.0
        %1676 = vmatpush1.msra.mxu0 0.0
        %1677 = vmatprep.subr.mxu0 0.0
        %1678 = vmatpush1.msra.mxu0 0.0
        %1679 = vmatprep.subr.mxu0 0.0
        %1680 = vmatpush1.msra.mxu0 0.0
        %1681 = vmatprep.subr.mxu0 0.0
        %1682 = vmatpush1.msra.mxu0 0.0
        %1683 = vmatprep.subr.mxu0 0.0
        %1684 = vmatpush1.msra.mxu0 0.0
        %1685 = vmatprep.subr.mxu0 0.0
        %1686 = vmatpush1.msra.mxu0 0.0
        %1687 = vmatprep.subr.mxu0 0.0
        %1688 = vmatpush1.msra.mxu0 0.0
        %1689 = vmatprep.subr.mxu0 0.0
        %1690 = vmatpush1.msra.mxu0 0.0
        %1691 = vmatprep.subr.mxu0 0.0
        %1692 = vmatpush1.msra.mxu0 0.0
        %1693 = vmatprep.mubr.f32.mxu0 0.0
        %1694 = vmatmul.mubr.f32.gmra.mrb[0].mxu0 %v1440
        %v1695 = vpop.f32.mrb[0].mxu0
        %v1696 = vadd.f32 0.0, %v1695
        %v1697 = vpop.f32.mrb[0].mxu0
        %v1698 = vadd.f32 0.0, %v1697
        %1699 = vmatprep.mubr.f32.mxu0 0.0
        %1700 = vmatmul.mubr.f32.gmra.mrb[0].mxu0 %v1443
        %v1701 = vpop.f32.mrb[0].mxu0
        %v1702 = vadd.f32 0.0, %v1701
        %v1703 = vpop.f32.mrb[0].mxu0
        %v1704 = vadd.f32 0.0, %v1703
        %1705 = vmatprep.mubr.f32.mxu0 0.0
        %1706 = vmatmul.mubr.f32.gmra.mrb[0].mxu0 %v1446
        %v1707 = vpop.f32.mrb[0].mxu0
        %v1708 = vadd.f32 0.0, %v1707
        %v1709 = vpop.f32.mrb[0].mxu0
        %v1710 = vadd.f32 0.0, %v1709
        %1711 = vmatprep.mubr.f32.mxu0 0.0
        %1712 = vmatmul.mubr.f32.gmra.mrb[0].mxu0 %v1449
        %v1713 = vpop.f32.mrb[0].mxu0
        %v1714 = vadd.f32 0.0, %v1713
        %v1715 = vpop.f32.mrb[0].mxu0
        %v1716 = vadd.f32 0.0, %v1715
        %1717 = vdwg.mxu0
        %1718 = vmatprep.subr.mxu0 %v250
        %1719 = vmatpush1.msra.mxu0 %v249
        %1720 = vmatprep.subr.mxu0 0.0
        %1721 = vmatpush1.msra.mxu0 0.0
        %1722 = vmatprep.subr.mxu0 0.0
        %1723 = vmatpush1.msra.mxu0 0.0
        %1724 = vmatprep.subr.mxu0 0.0
        %1725 = vmatpush1.msra.mxu0 0.0
        %1726 = vmatprep.subr.mxu0 0.0
        %1727 = vmatpush1.msra.mxu0 0.0
        %1728 = vmatprep.subr.mxu0 0.0
        %1729 = vmatpush1.msra.mxu0 0.0
        %1730 = vmatprep.subr.mxu0 0.0
        %1731 = vmatpush1.msra.mxu0 0.0
        %1732 = vmatprep.subr.mxu0 0.0
        %1733 = vmatpush1.msra.mxu0 0.0
        %1734 = vmatprep.subr.mxu0 0.0
        %1735 = vmatpush1.msra.mxu0 0.0
        %1736 = vmatprep.subr.mxu0 0.0
        %1737 = vmatpush1.msra.mxu0 0.0
        %1738 = vmatprep.subr.mxu0 0.0
        %1739 = vmatpush1.msra.mxu0 0.0
        %1740 = vmatprep.subr.mxu0 0.0
        %1741 = vmatpush1.msra.mxu0 0.0
        %1742 = vmatprep.subr.mxu0 0.0
        %1743 = vmatpush1.msra.mxu0 0.0
        %1744 = vmatprep.subr.mxu0 0.0
        %1745 = vmatpush1.msra.mxu0 0.0
        %1746 = vmatprep.subr.mxu0 0.0
        %1747 = vmatpush1.msra.mxu0 0.0
        %1748 = vmatprep.subr.mxu0 0.0
        %1749 = vmatpush1.msra.mxu0 0.0
        %1750 = vmatprep.subr.mxu0 0.0
        %1751 = vmatpush1.msra.mxu0 0.0
        %1752 = vmatprep.subr.mxu0 0.0
        %1753 = vmatpush1.msra.mxu0 0.0
        %1754 = vmatprep.subr.mxu0 0.0
        %1755 = vmatpush1.msra.mxu0 0.0
        %1756 = vmatprep.subr.mxu0 0.0
        %1757 = vmatpush1.msra.mxu0 0.0
        %1758 = vmatprep.subr.mxu0 0.0
        %1759 = vmatpush1.msra.mxu0 0.0
        %1760 = vmatprep.subr.mxu0 0.0
        %1761 = vmatpush1.msra.mxu0 0.0
        %1762 = vmatprep.subr.mxu0 0.0
        %1763 = vmatpush1.msra.mxu0 0.0
        %1764 = vmatprep.subr.mxu0 0.0
        %1765 = vmatpush1.msra.mxu0 0.0
        %1766 = vmatprep.subr.mxu0 0.0
        %1767 = vmatpush1.msra.mxu0 0.0
        %1768 = vmatprep.subr.mxu0 0.0
        %1769 = vmatpush1.msra.mxu0 0.0
        %1770 = vmatprep.subr.mxu0 0.0
        %1771 = vmatpush1.msra.mxu0 0.0
        %1772 = vmatprep.subr.mxu0 0.0
        %1773 = vmatpush1.msra.mxu0 0.0
        %1774 = vmatprep.subr.mxu0 0.0
        %1775 = vmatpush1.msra.mxu0 0.0
        %1776 = vmatprep.subr.mxu0 0.0
        %1777 = vmatpush1.msra.mxu0 0.0
        %1778 = vmatprep.subr.mxu0 0.0
        %1779 = vmatpush1.msra.mxu0 0.0
        %1780 = vmatprep.subr.mxu0 0.0
        %1781 = vmatpush1.msra.mxu0 0.0
        %1782 = vmatprep.mubr.f32.mxu0 0.0
        %1783 = vmatmul.mubr.f32.gmra.mrb[0].mxu0 %v1440
        %v1784 = vpop.f32.mrb[0].mxu0
        %v1785 = vadd.f32 0.0, %v1784
        %v1786 = vpop.f32.mrb[0].mxu0
        %v1787 = vadd.f32 0.0, %v1786
        %1788 = vmatprep.mubr.f32.mxu0 0.0
        %1789 = vmatmul.mubr.f32.gmra.mrb[0].mxu0 %v1443
        %v1790 = vpop.f32.mrb[0].mxu0
        %v1791 = vadd.f32 0.0, %v1790
        %v1792 = vpop.f32.mrb[0].mxu0
        %v1793 = vadd.f32 0.0, %v1792
        %1794 = vmatprep.mubr.f32.mxu0 0.0
        %1795 = vmatmul.mubr.f32.gmra.mrb[0].mxu0 %v1446
        %v1796 = vpop.f32.mrb[0].mxu0
        %v1797 = vadd.f32 0.0, %v1796
        %v1798 = vpop.f32.mrb[0].mxu0
        %v1799 = vadd.f32 0.0, %v1798
        %1800 = vmatprep.mubr.f32.mxu0 0.0
        %1801 = vmatmul.mubr.f32.gmra.mrb[0].mxu0 %v1449
        %v1802 = vpop.f32.mrb[0].mxu0
        %v1803 = vadd.f32 0.0, %v1802
        %v1804 = vpop.f32.mrb[0].mxu0
        %v1805 = vadd.f32 0.0, %v1804
        %1806 = vdwg.mxu0
        %s1807 = scalar_lea.vmem %s2, 32
        %v1808 = vld [vmem:[%s1807] sm:$0xff]
        %v1809 = vld [vmem:[%s1807 + $0x8] sm:$0xff]
        %v1810 = vld [vmem:[%s1807 + $0x10] sm:$0xff]
        %v1811 = vld [vmem:[%s1807 + $0x18] sm:$0xff]
        %v1813 = vsel %vm1033, %v1808, 0
        %v1816 = vsel %vm1033, %v1809, 0
        %v1819 = vsel %vm1033, %v1810, 0
        %v1822 = vsel %vm1033, %v1811, 0
        %1824 = vmatprep.subr.mxu0 %v1403
        %1825 = vmatpush1.msra.mxu0 %v1402
        %1826 = vmatprep.subr.mxu0 %v1411
        %1827 = vmatpush1.msra.mxu0 %v1410
        %1828 = vmatprep.subr.mxu0 %v1419
        %1829 = vmatpush1.msra.mxu0 %v1418
        %1830 = vmatprep.subr.mxu0 %v1427
        %1831 = vmatpush1.msra.mxu0 %v1426
        %1832 = vmatprep.subr.mxu0 0.0
        %1833 = vmatpush1.msra.mxu0 0.0
        %1834 = vmatprep.subr.mxu0 0.0
        %1835 = vmatpush1.msra.mxu0 0.0
        %1836 = vmatprep.subr.mxu0 0.0
        %1837 = vmatpush1.msra.mxu0 0.0
        %1838 = vmatprep.subr.mxu0 0.0
        %1839 = vmatpush1.msra.mxu0 0.0
        %1840 = vmatprep.subr.mxu0 0.0
        %1841 = vmatpush1.msra.mxu0 0.0
        %1842 = vmatprep.subr.mxu0 0.0
        %1843 = vmatpush1.msra.mxu0 0.0
        %1844 = vmatprep.subr.mxu0 0.0
        %1845 = vmatpush1.msra.mxu0 0.0
        %1846 = vmatprep.subr.mxu0 0.0
        %1847 = vmatpush1.msra.mxu0 0.0
        %1848 = vmatprep.subr.mxu0 0.0
        %1849 = vmatpush1.msra.mxu0 0.0
        %1850 = vmatprep.subr.mxu0 0.0
        %1851 = vmatpush1.msra.mxu0 0.0
        %1852 = vmatprep.subr.mxu0 0.0
        %1853 = vmatpush1.msra.mxu0 0.0
        %1854 = vmatprep.subr.mxu0 0.0
        %1855 = vmatpush1.msra.mxu0 0.0
        %1856 = vmatprep.subr.mxu0 0.0
        %1857 = vmatpush1.msra.mxu0 0.0
        %1858 = vmatprep.subr.mxu0 0.0
        %1859 = vmatpush1.msra.mxu0 0.0
        %1860 = vmatprep.subr.mxu0 0.0
        %1861 = vmatpush1.msra.mxu0 0.0
        %1862 = vmatprep.subr.mxu0 0.0
        %1863 = vmatpush1.msra.mxu0 0.0
        %1864 = vmatprep.subr.mxu0 0.0
        %1865 = vmatpush1.msra.mxu0 0.0
        %1866 = vmatprep.subr.mxu0 0.0
        %1867 = vmatpush1.msra.mxu0 0.0
        %1868 = vmatprep.subr.mxu0 0.0
        %1869 = vmatpush1.msra.mxu0 0.0
        %1870 = vmatprep.subr.mxu0 0.0
        %1871 = vmatpush1.msra.mxu0 0.0
        %1872 = vmatprep.subr.mxu0 0.0
        %1873 = vmatpush1.msra.mxu0 0.0
        %1874 = vmatprep.subr.mxu0 0.0
        %1875 = vmatpush1.msra.mxu0 0.0
        %1876 = vmatprep.subr.mxu0 0.0
        %1877 = vmatpush1.msra.mxu0 0.0
        %1878 = vmatprep.subr.mxu0 0.0
        %1879 = vmatpush1.msra.mxu0 0.0
        %1880 = vmatprep.subr.mxu0 0.0
        %1881 = vmatpush1.msra.mxu0 0.0
        %1882 = vmatprep.subr.mxu0 0.0
        %1883 = vmatpush1.msra.mxu0 0.0
        %1884 = vmatprep.subr.mxu0 0.0
        %1885 = vmatpush1.msra.mxu0 0.0
        %1886 = vmatprep.subr.mxu0 0.0
        %1887 = vmatpush1.msra.mxu0 0.0
        %1888 = vmatprep.mubr.f32.mxu0 0.0
        %1889 = vmatmul.mubr.f32.gmra.mrb[0].mxu0 %v1813
        %v1890 = vpop.f32.mrb[0].mxu0
        %v1891 = vadd.f32 %v1518, %v1890
        %v1892 = vpop.f32.mrb[0].mxu0
        %v1893 = vadd.f32 %v1520, %v1892
        %1894 = vmatprep.mubr.f32.mxu0 0.0
        %1895 = vmatmul.mubr.f32.gmra.mrb[0].mxu0 %v1816
        %v1896 = vpop.f32.mrb[0].mxu0
        %v1897 = vadd.f32 %v1524, %v1896
        %v1898 = vpop.f32.mrb[0].mxu0
        %v1899 = vadd.f32 %v1526, %v1898
        %1900 = vmatprep.mubr.f32.mxu0 0.0
        %1901 = vmatmul.mubr.f32.gmra.mrb[0].mxu0 %v1819
        %v1902 = vpop.f32.mrb[0].mxu0
        %v1903 = vadd.f32 %v1530, %v1902
        %v1904 = vpop.f32.mrb[0].mxu0
        %v1905 = vadd.f32 %v1532, %v1904
        %1906 = vmatprep.mubr.f32.mxu0 0.0
        %1907 = vmatmul.mubr.f32.gmra.mrb[0].mxu0 %v1822
        %v1908 = vpop.f32.mrb[0].mxu0
        %v1909 = vadd.f32 %v1536, %v1908
        %v1910 = vpop.f32.mrb[0].mxu0
        %v1911 = vadd.f32 %v1538, %v1910
        %1912 = vdwg.mxu0
        %1913 = vmatprep.subr.mxu0 %v1405
        %1914 = vmatpush1.msra.mxu0 %v1404
        %1915 = vmatprep.subr.mxu0 %v1413
        %1916 = vmatpush1.msra.mxu0 %v1412
        %1917 = vmatprep.subr.mxu0 %v1421
        %1918 = vmatpush1.msra.mxu0 %v1420
        %1919 = vmatprep.subr.mxu0 %v1429
        %1920 = vmatpush1.msra.mxu0 %v1428
        %1921 = vmatprep.subr.mxu0 0.0
        %1922 = vmatpush1.msra.mxu0 0.0
        %1923 = vmatprep.subr.mxu0 0.0
        %1924 = vmatpush1.msra.mxu0 0.0
        %1925 = vmatprep.subr.mxu0 0.0
        %1926 = vmatpush1.msra.mxu0 0.0
        %1927 = vmatprep.subr.mxu0 0.0
        %1928 = vmatpush1.msra.mxu0 0.0
        %1929 = vmatprep.subr.mxu0 0.0
        %1930 = vmatpush1.msra.mxu0 0.0
        %1931 = vmatprep.subr.mxu0 0.0
        %1932 = vmatpush1.msra.mxu0 0.0
        %1933 = vmatprep.subr.mxu0 0.0
        %1934 = vmatpush1.msra.mxu0 0.0
        %1935 = vmatprep.subr.mxu0 0.0
        %1936 = vmatpush1.msra.mxu0 0.0
        %1937 = vmatprep.subr.mxu0 0.0
        %1938 = vmatpush1.msra.mxu0 0.0
        %1939 = vmatprep.subr.mxu0 0.0
        %1940 = vmatpush1.msra.mxu0 0.0
        %1941 = vmatprep.subr.mxu0 0.0
        %1942 = vmatpush1.msra.mxu0 0.0
        %1943 = vmatprep.subr.mxu0 0.0
        %1944 = vmatpush1.msra.mxu0 0.0
        %1945 = vmatprep.subr.mxu0 0.0
        %1946 = vmatpush1.msra.mxu0 0.0
        %1947 = vmatprep.subr.mxu0 0.0
        %1948 = vmatpush1.msra.mxu0 0.0
        %1949 = vmatprep.subr.mxu0 0.0
        %1950 = vmatpush1.msra.mxu0 0.0
        %1951 = vmatprep.subr.mxu0 0.0
        %1952 = vmatpush1.msra.mxu0 0.0
        %1953 = vmatprep.subr.mxu0 0.0
        %1954 = vmatpush1.msra.mxu0 0.0
        %1955 = vmatprep.subr.mxu0 0.0
        %1956 = vmatpush1.msra.mxu0 0.0
        %1957 = vmatprep.subr.mxu0 0.0
        %1958 = vmatpush1.msra.mxu0 0.0
        %1959 = vmatprep.subr.mxu0 0.0
        %1960 = vmatpush1.msra.mxu0 0.0
        %1961 = vmatprep.subr.mxu0 0.0
        %1962 = vmatpush1.msra.mxu0 0.0
        %1963 = vmatprep.subr.mxu0 0.0
        %1964 = vmatpush1.msra.mxu0 0.0
        %1965 = vmatprep.subr.mxu0 0.0
        %1966 = vmatpush1.msra.mxu0 0.0
        %1967 = vmatprep.subr.mxu0 0.0
        %1968 = vmatpush1.msra.mxu0 0.0
        %1969 = vmatprep.subr.mxu0 0.0
        %1970 = vmatpush1.msra.mxu0 0.0
        %1971 = vmatprep.subr.mxu0 0.0
        %1972 = vmatpush1.msra.mxu0 0.0
        %1973 = vmatprep.subr.mxu0 0.0
        %1974 = vmatpush1.msra.mxu0 0.0
        %1975 = vmatprep.subr.mxu0 0.0
        %1976 = vmatpush1.msra.mxu0 0.0
        %1977 = vmatprep.mubr.f32.mxu0 0.0
        %1978 = vmatmul.mubr.f32.gmra.mrb[0].mxu0 %v1813
        %v1979 = vpop.f32.mrb[0].mxu0
        %v1980 = vadd.f32 %v1607, %v1979
        %v1981 = vpop.f32.mrb[0].mxu0
        %v1982 = vadd.f32 %v1609, %v1981
        %1983 = vmatprep.mubr.f32.mxu0 0.0
        %1984 = vmatmul.mubr.f32.gmra.mrb[0].mxu0 %v1816
        %v1985 = vpop.f32.mrb[0].mxu0
        %v1986 = vadd.f32 %v1613, %v1985
        %v1987 = vpop.f32.mrb[0].mxu0
        %v1988 = vadd.f32 %v1615, %v1987
        %1989 = vmatprep.mubr.f32.mxu0 0.0
        %1990 = vmatmul.mubr.f32.gmra.mrb[0].mxu0 %v1819
        %v1991 = vpop.f32.mrb[0].mxu0
        %v1992 = vadd.f32 %v1619, %v1991
        %v1993 = vpop.f32.mrb[0].mxu0
        %v1994 = vadd.f32 %v1621, %v1993
        %1995 = vmatprep.mubr.f32.mxu0 0.0
        %1996 = vmatmul.mubr.f32.gmra.mrb[0].mxu0 %v1822
        %v1997 = vpop.f32.mrb[0].mxu0
        %v1998 = vadd.f32 %v1625, %v1997
        %v1999 = vpop.f32.mrb[0].mxu0
        %v2000 = vadd.f32 %v1627, %v1999
        %2001 = vdwg.mxu0
        %2002 = vmatprep.subr.mxu0 %v1407
        %2003 = vmatpush1.msra.mxu0 %v1406
        %2004 = vmatprep.subr.mxu0 %v1415
        %2005 = vmatpush1.msra.mxu0 %v1414
        %2006 = vmatprep.subr.mxu0 %v1423
        %2007 = vmatpush1.msra.mxu0 %v1422
        %2008 = vmatprep.subr.mxu0 %v1431
        %2009 = vmatpush1.msra.mxu0 %v1430
        %2010 = vmatprep.subr.mxu0 0.0
        %2011 = vmatpush1.msra.mxu0 0.0
        %2012 = vmatprep.subr.mxu0 0.0
        %2013 = vmatpush1.msra.mxu0 0.0
        %2014 = vmatprep.subr.mxu0 0.0
        %2015 = vmatpush1.msra.mxu0 0.0
        %2016 = vmatprep.subr.mxu0 0.0
        %2017 = vmatpush1.msra.mxu0 0.0
        %2018 = vmatprep.subr.mxu0 0.0
        %2019 = vmatpush1.msra.mxu0 0.0
        %2020 = vmatprep.subr.mxu0 0.0
        %2021 = vmatpush1.msra.mxu0 0.0
        %2022 = vmatprep.subr.mxu0 0.0
        %2023 = vmatpush1.msra.mxu0 0.0
        %2024 = vmatprep.subr.mxu0 0.0
        %2025 = vmatpush1.msra.mxu0 0.0
        %2026 = vmatprep.subr.mxu0 0.0
        %2027 = vmatpush1.msra.mxu0 0.0
        %2028 = vmatprep.subr.mxu0 0.0
        %2029 = vmatpush1.msra.mxu0 0.0
        %2030 = vmatprep.subr.mxu0 0.0
        %2031 = vmatpush1.msra.mxu0 0.0
        %2032 = vmatprep.subr.mxu0 0.0
        %2033 = vmatpush1.msra.mxu0 0.0
        %2034 = vmatprep.subr.mxu0 0.0
        %2035 = vmatpush1.msra.mxu0 0.0
        %2036 = vmatprep.subr.mxu0 0.0
        %2037 = vmatpush1.msra.mxu0 0.0
        %2038 = vmatprep.subr.mxu0 0.0
        %2039 = vmatpush1.msra.mxu0 0.0
        %2040 = vmatprep.subr.mxu0 0.0
        %2041 = vmatpush1.msra.mxu0 0.0
        %2042 = vmatprep.subr.mxu0 0.0
        %2043 = vmatpush1.msra.mxu0 0.0
        %2044 = vmatprep.subr.mxu0 0.0
        %2045 = vmatpush1.msra.mxu0 0.0
        %2046 = vmatprep.subr.mxu0 0.0
        %2047 = vmatpush1.msra.mxu0 0.0
        %2048 = vmatprep.subr.mxu0 0.0
        %2049 = vmatpush1.msra.mxu0 0.0
        %2050 = vmatprep.subr.mxu0 0.0
        %2051 = vmatpush1.msra.mxu0 0.0
        %2052 = vmatprep.subr.mxu0 0.0
        %2053 = vmatpush1.msra.mxu0 0.0
        %2054 = vmatprep.subr.mxu0 0.0
        %2055 = vmatpush1.msra.mxu0 0.0
        %2056 = vmatprep.subr.mxu0 0.0
        %2057 = vmatpush1.msra.mxu0 0.0
        %2058 = vmatprep.subr.mxu0 0.0
        %2059 = vmatpush1.msra.mxu0 0.0
        %2060 = vmatprep.subr.mxu0 0.0
        %2061 = vmatpush1.msra.mxu0 0.0
        %2062 = vmatprep.subr.mxu0 0.0
        %2063 = vmatpush1.msra.mxu0 0.0
        %2064 = vmatprep.subr.mxu0 0.0
        %2065 = vmatpush1.msra.mxu0 0.0
        %2066 = vmatprep.mubr.f32.mxu0 0.0
        %2067 = vmatmul.mubr.f32.gmra.mrb[0].mxu0 %v1813
        %v2068 = vpop.f32.mrb[0].mxu0
        %v2069 = vadd.f32 %v1696, %v2068
        %v2070 = vpop.f32.mrb[0].mxu0
        %v2071 = vadd.f32 %v1698, %v2070
        %2072 = vmatprep.mubr.f32.mxu0 0.0
        %2073 = vmatmul.mubr.f32.gmra.mrb[0].mxu0 %v1816
        %v2074 = vpop.f32.mrb[0].mxu0
        %v2075 = vadd.f32 %v1702, %v2074
        %v2076 = vpop.f32.mrb[0].mxu0
        %v2077 = vadd.f32 %v1704, %v2076
        %2078 = vmatprep.mubr.f32.mxu0 0.0
        %2079 = vmatmul.mubr.f32.gmra.mrb[0].mxu0 %v1819
        %v2080 = vpop.f32.mrb[0].mxu0
        %v2081 = vadd.f32 %v1708, %v2080
        %v2082 = vpop.f32.mrb[0].mxu0
        %v2083 = vadd.f32 %v1710, %v2082
        %2084 = vmatprep.mubr.f32.mxu0 0.0
        %2085 = vmatmul.mubr.f32.gmra.mrb[0].mxu0 %v1822
        %v2086 = vpop.f32.mrb[0].mxu0
        %v2087 = vadd.f32 %v1714, %v2086
        %v2088 = vpop.f32.mrb[0].mxu0
        %v2089 = vadd.f32 %v1716, %v2088
        %2090 = vdwg.mxu0
        %2091 = vmatprep.subr.mxu0 %v1409
        %2092 = vmatpush1.msra.mxu0 %v1408
        %2093 = vmatprep.subr.mxu0 %v1417
        %2094 = vmatpush1.msra.mxu0 %v1416
        %2095 = vmatprep.subr.mxu0 %v1425
        %2096 = vmatpush1.msra.mxu0 %v1424
        %2097 = vmatprep.subr.mxu0 %v1433
        %2098 = vmatpush1.msra.mxu0 %v1432
        %2099 = vmatprep.subr.mxu0 0.0
        %2100 = vmatpush1.msra.mxu0 0.0
        %2101 = vmatprep.subr.mxu0 0.0
        %2102 = vmatpush1.msra.mxu0 0.0
        %2103 = vmatprep.subr.mxu0 0.0
        %2104 = vmatpush1.msra.mxu0 0.0
        %2105 = vmatprep.subr.mxu0 0.0
        %2106 = vmatpush1.msra.mxu0 0.0
        %2107 = vmatprep.subr.mxu0 0.0
        %2108 = vmatpush1.msra.mxu0 0.0
        %2109 = vmatprep.subr.mxu0 0.0
        %2110 = vmatpush1.msra.mxu0 0.0
        %2111 = vmatprep.subr.mxu0 0.0
        %2112 = vmatpush1.msra.mxu0 0.0
        %2113 = vmatprep.subr.mxu0 0.0
        %2114 = vmatpush1.msra.mxu0 0.0
        %2115 = vmatprep.subr.mxu0 0.0
        %2116 = vmatpush1.msra.mxu0 0.0
        %2117 = vmatprep.subr.mxu0 0.0
        %2118 = vmatpush1.msra.mxu0 0.0
        %2119 = vmatprep.subr.mxu0 0.0
        %2120 = vmatpush1.msra.mxu0 0.0
        %2121 = vmatprep.subr.mxu0 0.0
        %2122 = vmatpush1.msra.mxu0 0.0
        %2123 = vmatprep.subr.mxu0 0.0
        %2124 = vmatpush1.msra.mxu0 0.0
        %2125 = vmatprep.subr.mxu0 0.0
        %2126 = vmatpush1.msra.mxu0 0.0
        %2127 = vmatprep.subr.mxu0 0.0
        %2128 = vmatpush1.msra.mxu0 0.0
        %2129 = vmatprep.subr.mxu0 0.0
        %2130 = vmatpush1.msra.mxu0 0.0
        %2131 = vmatprep.subr.mxu0 0.0
        %2132 = vmatpush1.msra.mxu0 0.0
        %2133 = vmatprep.subr.mxu0 0.0
        %2134 = vmatpush1.msra.mxu0 0.0
        %2135 = vmatprep.subr.mxu0 0.0
        %2136 = vmatpush1.msra.mxu0 0.0
        %2137 = vmatprep.subr.mxu0 0.0
        %2138 = vmatpush1.msra.mxu0 0.0
        %2139 = vmatprep.subr.mxu0 0.0
        %2140 = vmatpush1.msra.mxu0 0.0
        %2141 = vmatprep.subr.mxu0 0.0
        %2142 = vmatpush1.msra.mxu0 0.0
        %2143 = vmatprep.subr.mxu0 0.0
        %2144 = vmatpush1.msra.mxu0 0.0
        %2145 = vmatprep.subr.mxu0 0.0
        %2146 = vmatpush1.msra.mxu0 0.0
        %2147 = vmatprep.subr.mxu0 0.0
        %2148 = vmatpush1.msra.mxu0 0.0
        %2149 = vmatprep.subr.mxu0 0.0
        %2150 = vmatpush1.msra.mxu0 0.0
        %2151 = vmatprep.subr.mxu0 0.0
        %2152 = vmatpush1.msra.mxu0 0.0
        %2153 = vmatprep.subr.mxu0 0.0
        %2154 = vmatpush1.msra.mxu0 0.0
        %2155 = vmatprep.mubr.f32.mxu0 0.0
        %2156 = vmatmul.mubr.f32.gmra.mrb[0].mxu0 %v1813
        %v2157 = vpop.f32.mrb[0].mxu0
        %v2158 = vadd.f32 %v1785, %v2157
        %v2159 = vpop.f32.mrb[0].mxu0
        %v2160 = vadd.f32 %v1787, %v2159
        %2161 = vmatprep.mubr.f32.mxu0 0.0
        %2162 = vmatmul.mubr.f32.gmra.mrb[0].mxu0 %v1816
        %v2163 = vpop.f32.mrb[0].mxu0
        %v2164 = vadd.f32 %v1791, %v2163
        %v2165 = vpop.f32.mrb[0].mxu0
        %v2166 = vadd.f32 %v1793, %v2165
        %2167 = vmatprep.mubr.f32.mxu0 0.0
        %2168 = vmatmul.mubr.f32.gmra.mrb[0].mxu0 %v1819
        %v2169 = vpop.f32.mrb[0].mxu0
        %v2170 = vadd.f32 %v1797, %v2169
        %v2171 = vpop.f32.mrb[0].mxu0
        %v2172 = vadd.f32 %v1799, %v2171
        %2173 = vmatprep.mubr.f32.mxu0 0.0
        %2174 = vmatmul.mubr.f32.gmra.mrb[0].mxu0 %v1822
        %v2175 = vpop.f32.mrb[0].mxu0
        %v2176 = vadd.f32 %v1803, %v2175
        %v2177 = vpop.f32.mrb[0].mxu0
        %v2178 = vadd.f32 %v1805, %v2177
        %2179 = vdwg.mxu0
        %v2180 = vmax.f32 %v1891, 0.0
        %v2181 = vmax.f32 %v1893, 0.0
        %v2182 = vmax.f32 %v1980, 0.0
        %v2183 = vmax.f32 %v1982, 0.0
        %v2184 = vmax.f32 %v2069, 0.0
        %v2185 = vmax.f32 %v2071, 0.0
        %v2186 = vmax.f32 %v2158, 0.0
        %v2187 = vmax.f32 %v2160, 0.0
        %v2188 = vmax.f32 %v1897, 0.0
        %v2189 = vmax.f32 %v1899, 0.0
        %v2190 = vmax.f32 %v1986, 0.0
        %v2191 = vmax.f32 %v1988, 0.0
        %v2192 = vmax.f32 %v2075, 0.0
        %v2193 = vmax.f32 %v2077, 0.0
        %v2194 = vmax.f32 %v2164, 0.0
        %v2195 = vmax.f32 %v2166, 0.0
        %v2196 = vmax.f32 %v1903, 0.0
        %v2197 = vmax.f32 %v1905, 0.0
        %v2198 = vmax.f32 %v1992, 0.0
        %v2199 = vmax.f32 %v1994, 0.0
        %v2200 = vmax.f32 %v2081, 0.0
        %v2201 = vmax.f32 %v2083, 0.0
        %v2202 = vmax.f32 %v2170, 0.0
        %v2203 = vmax.f32 %v2172, 0.0
        %v2204 = vmax.f32 %v1909, 0.0
        %v2205 = vmax.f32 %v1911, 0.0
        %v2206 = vmax.f32 %v1998, 0.0
        %v2207 = vmax.f32 %v2000, 0.0
        %v2208 = vmax.f32 %v2087, 0.0
        %v2209 = vmax.f32 %v2089, 0.0
        %v2210 = vmax.f32 %v2176, 0.0
        %v2211 = vmax.f32 %v2178, 0.0
        %s2212 = scalar_lea.vmem %s1, 96
        %v2213 = vld [vmem:[%s2212] sm:$0xff]
        %v2214 = vld [vmem:[%s2212 + $0x8] sm:$0xff]
        %v2215 = vld [vmem:[%s2212 + $0x10] sm:$0xff]
        %v2216 = vld [vmem:[%s2212 + $0x18] sm:$0xff]
        %v2218 = vsel %vm255, %v2213, 0
        %v2221 = vsel %vm255, %v2214, 0
        %v2224 = vsel %vm255, %v2215, 0
        %v2227 = vsel %vm255, %v2216, 0
        %2229 = vmatprep.subr.mxu0 %v244
        %2230 = vmatpush1.msra.mxu0 %v243
        %2231 = vmatprep.subr.mxu0 0.0
        %2232 = vmatpush1.msra.mxu0 0.0
        %2233 = vmatprep.subr.mxu0 0.0
        %2234 = vmatpush1.msra.mxu0 0.0
        %2235 = vmatprep.subr.mxu0 0.0
        %2236 = vmatpush1.msra.mxu0 0.0
        %2237 = vmatprep.subr.mxu0 0.0
        %2238 = vmatpush1.msra.mxu0 0.0
        %2239 = vmatprep.subr.mxu0 0.0
        %2240 = vmatpush1.msra.mxu0 0.0
        %2241 = vmatprep.subr.mxu0 0.0
        %2242 = vmatpush1.msra.mxu0 0.0
        %2243 = vmatprep.subr.mxu0 0.0
        %2244 = vmatpush1.msra.mxu0 0.0
        %2245 = vmatprep.subr.mxu0 0.0
        %2246 = vmatpush1.msra.mxu0 0.0
        %2247 = vmatprep.subr.mxu0 0.0
        %2248 = vmatpush1.msra.mxu0 0.0
        %2249 = vmatprep.subr.mxu0 0.0
        %2250 = vmatpush1.msra.mxu0 0.0
        %2251 = vmatprep.subr.mxu0 0.0
        %2252 = vmatpush1.msra.mxu0 0.0
        %2253 = vmatprep.subr.mxu0 0.0
        %2254 = vmatpush1.msra.mxu0 0.0
        %2255 = vmatprep.subr.mxu0 0.0
        %2256 = vmatpush1.msra.mxu0 0.0
        %2257 = vmatprep.subr.mxu0 0.0
        %2258 = vmatpush1.msra.mxu0 0.0
        %2259 = vmatprep.subr.mxu0 0.0
        %2260 = vmatpush1.msra.mxu0 0.0
        %2261 = vmatprep.subr.mxu0 0.0
        %2262 = vmatpush1.msra.mxu0 0.0
        %2263 = vmatprep.subr.mxu0 0.0
        %2264 = vmatpush1.msra.mxu0 0.0
        %2265 = vmatprep.subr.mxu0 0.0
        %2266 = vmatpush1.msra.mxu0 0.0
        %2267 = vmatprep.subr.mxu0 0.0
        %2268 = vmatpush1.msra.mxu0 0.0
        %2269 = vmatprep.subr.mxu0 0.0
        %2270 = vmatpush1.msra.mxu0 0.0
        %2271 = vmatprep.subr.mxu0 0.0
        %2272 = vmatpush1.msra.mxu0 0.0
        %2273 = vmatprep.subr.mxu0 0.0
        %2274 = vmatpush1.msra.mxu0 0.0
        %2275 = vmatprep.subr.mxu0 0.0
        %2276 = vmatpush1.msra.mxu0 0.0
        %2277 = vmatprep.subr.mxu0 0.0
        %2278 = vmatpush1.msra.mxu0 0.0
        %2279 = vmatprep.subr.mxu0 0.0
        %2280 = vmatpush1.msra.mxu0 0.0
        %2281 = vmatprep.subr.mxu0 0.0
        %2282 = vmatpush1.msra.mxu0 0.0
        %2283 = vmatprep.subr.mxu0 0.0
        %2284 = vmatpush1.msra.mxu0 0.0
        %2285 = vmatprep.subr.mxu0 0.0
        %2286 = vmatpush1.msra.mxu0 0.0
        %2287 = vmatprep.subr.mxu0 0.0
        %2288 = vmatpush1.msra.mxu0 0.0
        %2289 = vmatprep.subr.mxu0 0.0
        %2290 = vmatpush1.msra.mxu0 0.0
        %2291 = vmatprep.subr.mxu0 0.0
        %2292 = vmatpush1.msra.mxu0 0.0
        %2293 = vmatprep.mubr.f32.mxu0 0.0
        %2294 = vmatmul.mubr.f32.gmra.mrb[0].mxu0 %v2218
        %v2295 = vpop.f32.mrb[0].mxu0
        %v2296 = vadd.f32 0.0, %v2295
        %v2297 = vpop.f32.mrb[0].mxu0
        %v2298 = vadd.f32 0.0, %v2297
        %2299 = vmatprep.mubr.f32.mxu0 0.0
        %2300 = vmatmul.mubr.f32.gmra.mrb[0].mxu0 %v2221
        %v2301 = vpop.f32.mrb[0].mxu0
        %v2302 = vadd.f32 0.0, %v2301
        %v2303 = vpop.f32.mrb[0].mxu0
        %v2304 = vadd.f32 0.0, %v2303
        %2305 = vmatprep.mubr.f32.mxu0 0.0
        %2306 = vmatmul.mubr.f32.gmra.mrb[0].mxu0 %v2224
        %v2307 = vpop.f32.mrb[0].mxu0
        %v2308 = vadd.f32 0.0, %v2307
        %v2309 = vpop.f32.mrb[0].mxu0
        %v2310 = vadd.f32 0.0, %v2309
        %2311 = vmatprep.mubr.f32.mxu0 0.0
        %2312 = vmatmul.mubr.f32.gmra.mrb[0].mxu0 %v2227
        %v2313 = vpop.f32.mrb[0].mxu0
        %v2314 = vadd.f32 0.0, %v2313
        %v2315 = vpop.f32.mrb[0].mxu0
        %v2316 = vadd.f32 0.0, %v2315
        %2317 = vdwg.mxu0
        %2318 = vmatprep.subr.mxu0 %v246
        %2319 = vmatpush1.msra.mxu0 %v245
        %2320 = vmatprep.subr.mxu0 0.0
        %2321 = vmatpush1.msra.mxu0 0.0
        %2322 = vmatprep.subr.mxu0 0.0
        %2323 = vmatpush1.msra.mxu0 0.0
        %2324 = vmatprep.subr.mxu0 0.0
        %2325 = vmatpush1.msra.mxu0 0.0
        %2326 = vmatprep.subr.mxu0 0.0
        %2327 = vmatpush1.msra.mxu0 0.0
        %2328 = vmatprep.subr.mxu0 0.0
        %2329 = vmatpush1.msra.mxu0 0.0
        %2330 = vmatprep.subr.mxu0 0.0
        %2331 = vmatpush1.msra.mxu0 0.0
        %2332 = vmatprep.subr.mxu0 0.0
        %2333 = vmatpush1.msra.mxu0 0.0
        %2334 = vmatprep.subr.mxu0 0.0
        %2335 = vmatpush1.msra.mxu0 0.0
        %2336 = vmatprep.subr.mxu0 0.0
        %2337 = vmatpush1.msra.mxu0 0.0
        %2338 = vmatprep.subr.mxu0 0.0
        %2339 = vmatpush1.msra.mxu0 0.0
        %2340 = vmatprep.subr.mxu0 0.0
        %2341 = vmatpush1.msra.mxu0 0.0
        %2342 = vmatprep.subr.mxu0 0.0
        %2343 = vmatpush1.msra.mxu0 0.0
        %2344 = vmatprep.subr.mxu0 0.0
        %2345 = vmatpush1.msra.mxu0 0.0
        %2346 = vmatprep.subr.mxu0 0.0
        %2347 = vmatpush1.msra.mxu0 0.0
        %2348 = vmatprep.subr.mxu0 0.0
        %2349 = vmatpush1.msra.mxu0 0.0
        %2350 = vmatprep.subr.mxu0 0.0
        %2351 = vmatpush1.msra.mxu0 0.0
        %2352 = vmatprep.subr.mxu0 0.0
        %2353 = vmatpush1.msra.mxu0 0.0
        %2354 = vmatprep.subr.mxu0 0.0
        %2355 = vmatpush1.msra.mxu0 0.0
        %2356 = vmatprep.subr.mxu0 0.0
        %2357 = vmatpush1.msra.mxu0 0.0
        %2358 = vmatprep.subr.mxu0 0.0
        %2359 = vmatpush1.msra.mxu0 0.0
        %2360 = vmatprep.subr.mxu0 0.0
        %2361 = vmatpush1.msra.mxu0 0.0
        %2362 = vmatprep.subr.mxu0 0.0
        %2363 = vmatpush1.msra.mxu0 0.0
        %2364 = vmatprep.subr.mxu0 0.0
        %2365 = vmatpush1.msra.mxu0 0.0
        %2366 = vmatprep.subr.mxu0 0.0
        %2367 = vmatpush1.msra.mxu0 0.0
        %2368 = vmatprep.subr.mxu0 0.0
        %2369 = vmatpush1.msra.mxu0 0.0
        %2370 = vmatprep.subr.mxu0 0.0
        %2371 = vmatpush1.msra.mxu0 0.0
        %2372 = vmatprep.subr.mxu0 0.0
        %2373 = vmatpush1.msra.mxu0 0.0
        %2374 = vmatprep.subr.mxu0 0.0
        %2375 = vmatpush1.msra.mxu0 0.0
        %2376 = vmatprep.subr.mxu0 0.0
        %2377 = vmatpush1.msra.mxu0 0.0
        %2378 = vmatprep.subr.mxu0 0.0
        %2379 = vmatpush1.msra.mxu0 0.0
        %2380 = vmatprep.subr.mxu0 0.0
        %2381 = vmatpush1.msra.mxu0 0.0
        %2382 = vmatprep.mubr.f32.mxu0 0.0
        %2383 = vmatmul.mubr.f32.gmra.mrb[0].mxu0 %v2218
        %v2384 = vpop.f32.mrb[0].mxu0
        %v2385 = vadd.f32 0.0, %v2384
        %v2386 = vpop.f32.mrb[0].mxu0
        %v2387 = vadd.f32 0.0, %v2386
        %2388 = vmatprep.mubr.f32.mxu0 0.0
        %2389 = vmatmul.mubr.f32.gmra.mrb[0].mxu0 %v2221
        %v2390 = vpop.f32.mrb[0].mxu0
        %v2391 = vadd.f32 0.0, %v2390
        %v2392 = vpop.f32.mrb[0].mxu0
        %v2393 = vadd.f32 0.0, %v2392
        %2394 = vmatprep.mubr.f32.mxu0 0.0
        %2395 = vmatmul.mubr.f32.gmra.mrb[0].mxu0 %v2224
        %v2396 = vpop.f32.mrb[0].mxu0
        %v2397 = vadd.f32 0.0, %v2396
        %v2398 = vpop.f32.mrb[0].mxu0
        %v2399 = vadd.f32 0.0, %v2398
        %2400 = vmatprep.mubr.f32.mxu0 0.0
        %2401 = vmatmul.mubr.f32.gmra.mrb[0].mxu0 %v2227
        %v2402 = vpop.f32.mrb[0].mxu0
        %v2403 = vadd.f32 0.0, %v2402
        %v2404 = vpop.f32.mrb[0].mxu0
        %v2405 = vadd.f32 0.0, %v2404
        %2406 = vdwg.mxu0
        %2407 = vmatprep.subr.mxu0 %v248
        %2408 = vmatpush1.msra.mxu0 %v247
        %2409 = vmatprep.subr.mxu0 0.0
        %2410 = vmatpush1.msra.mxu0 0.0
        %2411 = vmatprep.subr.mxu0 0.0
        %2412 = vmatpush1.msra.mxu0 0.0
        %2413 = vmatprep.subr.mxu0 0.0
        %2414 = vmatpush1.msra.mxu0 0.0
        %2415 = vmatprep.subr.mxu0 0.0
        %2416 = vmatpush1.msra.mxu0 0.0
        %2417 = vmatprep.subr.mxu0 0.0
        %2418 = vmatpush1.msra.mxu0 0.0
        %2419 = vmatprep.subr.mxu0 0.0
        %2420 = vmatpush1.msra.mxu0 0.0
        %2421 = vmatprep.subr.mxu0 0.0
        %2422 = vmatpush1.msra.mxu0 0.0
        %2423 = vmatprep.subr.mxu0 0.0
        %2424 = vmatpush1.msra.mxu0 0.0
        %2425 = vmatprep.subr.mxu0 0.0
        %2426 = vmatpush1.msra.mxu0 0.0
        %2427 = vmatprep.subr.mxu0 0.0
        %2428 = vmatpush1.msra.mxu0 0.0
        %2429 = vmatprep.subr.mxu0 0.0
        %2430 = vmatpush1.msra.mxu0 0.0
        %2431 = vmatprep.subr.mxu0 0.0
        %2432 = vmatpush1.msra.mxu0 0.0
        %2433 = vmatprep.subr.mxu0 0.0
        %2434 = vmatpush1.msra.mxu0 0.0
        %2435 = vmatprep.subr.mxu0 0.0
        %2436 = vmatpush1.msra.mxu0 0.0
        %2437 = vmatprep.subr.mxu0 0.0
        %2438 = vmatpush1.msra.mxu0 0.0
        %2439 = vmatprep.subr.mxu0 0.0
        %2440 = vmatpush1.msra.mxu0 0.0
        %2441 = vmatprep.subr.mxu0 0.0
        %2442 = vmatpush1.msra.mxu0 0.0
        %2443 = vmatprep.subr.mxu0 0.0
        %2444 = vmatpush1.msra.mxu0 0.0
        %2445 = vmatprep.subr.mxu0 0.0
        %2446 = vmatpush1.msra.mxu0 0.0
        %2447 = vmatprep.subr.mxu0 0.0
        %2448 = vmatpush1.msra.mxu0 0.0
        %2449 = vmatprep.subr.mxu0 0.0
        %2450 = vmatpush1.msra.mxu0 0.0
        %2451 = vmatprep.subr.mxu0 0.0
        %2452 = vmatpush1.msra.mxu0 0.0
        %2453 = vmatprep.subr.mxu0 0.0
        %2454 = vmatpush1.msra.mxu0 0.0
        %2455 = vmatprep.subr.mxu0 0.0
        %2456 = vmatpush1.msra.mxu0 0.0
        %2457 = vmatprep.subr.mxu0 0.0
        %2458 = vmatpush1.msra.mxu0 0.0
        %2459 = vmatprep.subr.mxu0 0.0
        %2460 = vmatpush1.msra.mxu0 0.0
        %2461 = vmatprep.subr.mxu0 0.0
        %2462 = vmatpush1.msra.mxu0 0.0
        %2463 = vmatprep.subr.mxu0 0.0
        %2464 = vmatpush1.msra.mxu0 0.0
        %2465 = vmatprep.subr.mxu0 0.0
        %2466 = vmatpush1.msra.mxu0 0.0
        %2467 = vmatprep.subr.mxu0 0.0
        %2468 = vmatpush1.msra.mxu0 0.0
        %2469 = vmatprep.subr.mxu0 0.0
        %2470 = vmatpush1.msra.mxu0 0.0
        %2471 = vmatprep.mubr.f32.mxu0 0.0
        %2472 = vmatmul.mubr.f32.gmra.mrb[0].mxu0 %v2218
        %v2473 = vpop.f32.mrb[0].mxu0
        %v2474 = vadd.f32 0.0, %v2473
        %v2475 = vpop.f32.mrb[0].mxu0
        %v2476 = vadd.f32 0.0, %v2475
        %2477 = vmatprep.mubr.f32.mxu0 0.0
        %2478 = vmatmul.mubr.f32.gmra.mrb[0].mxu0 %v2221
        %v2479 = vpop.f32.mrb[0].mxu0
        %v2480 = vadd.f32 0.0, %v2479
        %v2481 = vpop.f32.mrb[0].mxu0
        %v2482 = vadd.f32 0.0, %v2481
        %2483 = vmatprep.mubr.f32.mxu0 0.0
        %2484 = vmatmul.mubr.f32.gmra.mrb[0].mxu0 %v2224
        %v2485 = vpop.f32.mrb[0].mxu0
        %v2486 = vadd.f32 0.0, %v2485
        %v2487 = vpop.f32.mrb[0].mxu0
        %v2488 = vadd.f32 0.0, %v2487
        %2489 = vmatprep.mubr.f32.mxu0 0.0
        %2490 = vmatmul.mubr.f32.gmra.mrb[0].mxu0 %v2227
        %v2491 = vpop.f32.mrb[0].mxu0
        %v2492 = vadd.f32 0.0, %v2491
        %v2493 = vpop.f32.mrb[0].mxu0
        %v2494 = vadd.f32 0.0, %v2493
        %2495 = vdwg.mxu0
        %2496 = vmatprep.subr.mxu0 %v250
        %2497 = vmatpush1.msra.mxu0 %v249
        %2498 = vmatprep.subr.mxu0 0.0
        %2499 = vmatpush1.msra.mxu0 0.0
        %2500 = vmatprep.subr.mxu0 0.0
        %2501 = vmatpush1.msra.mxu0 0.0
        %2502 = vmatprep.subr.mxu0 0.0
        %2503 = vmatpush1.msra.mxu0 0.0
        %2504 = vmatprep.subr.mxu0 0.0
        %2505 = vmatpush1.msra.mxu0 0.0
        %2506 = vmatprep.subr.mxu0 0.0
        %2507 = vmatpush1.msra.mxu0 0.0
        %2508 = vmatprep.subr.mxu0 0.0
        %2509 = vmatpush1.msra.mxu0 0.0
        %2510 = vmatprep.subr.mxu0 0.0
        %2511 = vmatpush1.msra.mxu0 0.0
        %2512 = vmatprep.subr.mxu0 0.0
        %2513 = vmatpush1.msra.mxu0 0.0
        %2514 = vmatprep.subr.mxu0 0.0
        %2515 = vmatpush1.msra.mxu0 0.0
        %2516 = vmatprep.subr.mxu0 0.0
        %2517 = vmatpush1.msra.mxu0 0.0
        %2518 = vmatprep.subr.mxu0 0.0
        %2519 = vmatpush1.msra.mxu0 0.0
        %2520 = vmatprep.subr.mxu0 0.0
        %2521 = vmatpush1.msra.mxu0 0.0
        %2522 = vmatprep.subr.mxu0 0.0
        %2523 = vmatpush1.msra.mxu0 0.0
        %2524 = vmatprep.subr.mxu0 0.0
        %2525 = vmatpush1.msra.mxu0 0.0
        %2526 = vmatprep.subr.mxu0 0.0
        %2527 = vmatpush1.msra.mxu0 0.0
        %2528 = vmatprep.subr.mxu0 0.0
        %2529 = vmatpush1.msra.mxu0 0.0
        %2530 = vmatprep.subr.mxu0 0.0
        %2531 = vmatpush1.msra.mxu0 0.0
        %2532 = vmatprep.subr.mxu0 0.0
        %2533 = vmatpush1.msra.mxu0 0.0
        %2534 = vmatprep.subr.mxu0 0.0
        %2535 = vmatpush1.msra.mxu0 0.0
        %2536 = vmatprep.subr.mxu0 0.0
        %2537 = vmatpush1.msra.mxu0 0.0
        %2538 = vmatprep.subr.mxu0 0.0
        %2539 = vmatpush1.msra.mxu0 0.0
        %2540 = vmatprep.subr.mxu0 0.0
        %2541 = vmatpush1.msra.mxu0 0.0
        %2542 = vmatprep.subr.mxu0 0.0
        %2543 = vmatpush1.msra.mxu0 0.0
        %2544 = vmatprep.subr.mxu0 0.0
        %2545 = vmatpush1.msra.mxu0 0.0
        %2546 = vmatprep.subr.mxu0 0.0
        %2547 = vmatpush1.msra.mxu0 0.0
        %2548 = vmatprep.subr.mxu0 0.0
        %2549 = vmatpush1.msra.mxu0 0.0
        %2550 = vmatprep.subr.mxu0 0.0
        %2551 = vmatpush1.msra.mxu0 0.0
        %2552 = vmatprep.subr.mxu0 0.0
        %2553 = vmatpush1.msra.mxu0 0.0
        %2554 = vmatprep.subr.mxu0 0.0
        %2555 = vmatpush1.msra.mxu0 0.0
        %2556 = vmatprep.subr.mxu0 0.0
        %2557 = vmatpush1.msra.mxu0 0.0
        %2558 = vmatprep.subr.mxu0 0.0
        %2559 = vmatpush1.msra.mxu0 0.0
        %2560 = vmatprep.mubr.f32.mxu0 0.0
        %2561 = vmatmul.mubr.f32.gmra.mrb[0].mxu0 %v2218
        %v2562 = vpop.f32.mrb[0].mxu0
        %v2563 = vadd.f32 0.0, %v2562
        %v2564 = vpop.f32.mrb[0].mxu0
        %v2565 = vadd.f32 0.0, %v2564
        %2566 = vmatprep.mubr.f32.mxu0 0.0
        %2567 = vmatmul.mubr.f32.gmra.mrb[0].mxu0 %v2221
        %v2568 = vpop.f32.mrb[0].mxu0
        %v2569 = vadd.f32 0.0, %v2568
        %v2570 = vpop.f32.mrb[0].mxu0
        %v2571 = vadd.f32 0.0, %v2570
        %2572 = vmatprep.mubr.f32.mxu0 0.0
        %2573 = vmatmul.mubr.f32.gmra.mrb[0].mxu0 %v2224
        %v2574 = vpop.f32.mrb[0].mxu0
        %v2575 = vadd.f32 0.0, %v2574
        %v2576 = vpop.f32.mrb[0].mxu0
        %v2577 = vadd.f32 0.0, %v2576
        %2578 = vmatprep.mubr.f32.mxu0 0.0
        %2579 = vmatmul.mubr.f32.gmra.mrb[0].mxu0 %v2227
        %v2580 = vpop.f32.mrb[0].mxu0
        %v2581 = vadd.f32 0.0, %v2580
        %v2582 = vpop.f32.mrb[0].mxu0
        %v2583 = vadd.f32 0.0, %v2582
        %2584 = vdwg.mxu0
        %s2585 = scalar_lea.vmem %s2, 64
        %v2586 = vld [vmem:[%s2585] sm:$0xff]
        %v2587 = vld [vmem:[%s2585 + $0x8] sm:$0xff]
        %v2588 = vld [vmem:[%s2585 + $0x10] sm:$0xff]
        %v2589 = vld [vmem:[%s2585 + $0x18] sm:$0xff]
        %v2591 = vsel %vm1033, %v2586, 0
        %v2594 = vsel %vm1033, %v2587, 0
        %v2597 = vsel %vm1033, %v2588, 0
        %v2600 = vsel %vm1033, %v2589, 0
        %2602 = vmatprep.subr.mxu0 %v2181
        %2603 = vmatpush1.msra.mxu0 %v2180
        %2604 = vmatprep.subr.mxu0 %v2189
        %2605 = vmatpush1.msra.mxu0 %v2188
        %2606 = vmatprep.subr.mxu0 %v2197
        %2607 = vmatpush1.msra.mxu0 %v2196
        %2608 = vmatprep.subr.mxu0 %v2205
        %2609 = vmatpush1.msra.mxu0 %v2204
        %2610 = vmatprep.subr.mxu0 0.0
        %2611 = vmatpush1.msra.mxu0 0.0
        %2612 = vmatprep.subr.mxu0 0.0
        %2613 = vmatpush1.msra.mxu0 0.0
        %2614 = vmatprep.subr.mxu0 0.0
        %2615 = vmatpush1.msra.mxu0 0.0
        %2616 = vmatprep.subr.mxu0 0.0
        %2617 = vmatpush1.msra.mxu0 0.0
        %2618 = vmatprep.subr.mxu0 0.0
        %2619 = vmatpush1.msra.mxu0 0.0
        %2620 = vmatprep.subr.mxu0 0.0
        %2621 = vmatpush1.msra.mxu0 0.0
        %2622 = vmatprep.subr.mxu0 0.0
        %2623 = vmatpush1.msra.mxu0 0.0
        %2624 = vmatprep.subr.mxu0 0.0
        %2625 = vmatpush1.msra.mxu0 0.0
        %2626 = vmatprep.subr.mxu0 0.0
        %2627 = vmatpush1.msra.mxu0 0.0
        %2628 = vmatprep.subr.mxu0 0.0
        %2629 = vmatpush1.msra.mxu0 0.0
        %2630 = vmatprep.subr.mxu0 0.0
        %2631 = vmatpush1.msra.mxu0 0.0
        %2632 = vmatprep.subr.mxu0 0.0
        %2633 = vmatpush1.msra.mxu0 0.0
        %2634 = vmatprep.subr.mxu0 0.0
        %2635 = vmatpush1.msra.mxu0 0.0
        %2636 = vmatprep.subr.mxu0 0.0
        %2637 = vmatpush1.msra.mxu0 0.0
        %2638 = vmatprep.subr.mxu0 0.0
        %2639 = vmatpush1.msra.mxu0 0.0
        %2640 = vmatprep.subr.mxu0 0.0
        %2641 = vmatpush1.msra.mxu0 0.0
        %2642 = vmatprep.subr.mxu0 0.0
        %2643 = vmatpush1.msra.mxu0 0.0
        %2644 = vmatprep.subr.mxu0 0.0
        %2645 = vmatpush1.msra.mxu0 0.0
        %2646 = vmatprep.subr.mxu0 0.0
        %2647 = vmatpush1.msra.mxu0 0.0
        %2648 = vmatprep.subr.mxu0 0.0
        %2649 = vmatpush1.msra.mxu0 0.0
        %2650 = vmatprep.subr.mxu0 0.0
        %2651 = vmatpush1.msra.mxu0 0.0
        %2652 = vmatprep.subr.mxu0 0.0
        %2653 = vmatpush1.msra.mxu0 0.0
        %2654 = vmatprep.subr.mxu0 0.0
        %2655 = vmatpush1.msra.mxu0 0.0
        %2656 = vmatprep.subr.mxu0 0.0
        %2657 = vmatpush1.msra.mxu0 0.0
        %2658 = vmatprep.subr.mxu0 0.0
        %2659 = vmatpush1.msra.mxu0 0.0
        %2660 = vmatprep.subr.mxu0 0.0
        %2661 = vmatpush1.msra.mxu0 0.0
        %2662 = vmatprep.subr.mxu0 0.0
        %2663 = vmatpush1.msra.mxu0 0.0
        %2664 = vmatprep.subr.mxu0 0.0
        %2665 = vmatpush1.msra.mxu0 0.0
        %2666 = vmatprep.mubr.f32.mxu0 0.0
        %2667 = vmatmul.mubr.f32.gmra.mrb[0].mxu0 %v2591
        %v2668 = vpop.f32.mrb[0].mxu0
        %v2669 = vadd.f32 %v2296, %v2668
        %v2670 = vpop.f32.mrb[0].mxu0
        %v2671 = vadd.f32 %v2298, %v2670
        %2672 = vmatprep.mubr.f32.mxu0 0.0
        %2673 = vmatmul.mubr.f32.gmra.mrb[0].mxu0 %v2594
        %v2674 = vpop.f32.mrb[0].mxu0
        %v2675 = vadd.f32 %v2302, %v2674
        %v2676 = vpop.f32.mrb[0].mxu0
        %v2677 = vadd.f32 %v2304, %v2676
        %2678 = vmatprep.mubr.f32.mxu0 0.0
        %2679 = vmatmul.mubr.f32.gmra.mrb[0].mxu0 %v2597
        %v2680 = vpop.f32.mrb[0].mxu0
        %v2681 = vadd.f32 %v2308, %v2680
        %v2682 = vpop.f32.mrb[0].mxu0
        %v2683 = vadd.f32 %v2310, %v2682
        %2684 = vmatprep.mubr.f32.mxu0 0.0
        %2685 = vmatmul.mubr.f32.gmra.mrb[0].mxu0 %v2600
        %v2686 = vpop.f32.mrb[0].mxu0
        %v2687 = vadd.f32 %v2314, %v2686
        %v2688 = vpop.f32.mrb[0].mxu0
        %v2689 = vadd.f32 %v2316, %v2688
        %2690 = vdwg.mxu0
        %2691 = vmatprep.subr.mxu0 %v2183
        %2692 = vmatpush1.msra.mxu0 %v2182
        %2693 = vmatprep.subr.mxu0 %v2191
        %2694 = vmatpush1.msra.mxu0 %v2190
        %2695 = vmatprep.subr.mxu0 %v2199
        %2696 = vmatpush1.msra.mxu0 %v2198
        %2697 = vmatprep.subr.mxu0 %v2207
        %2698 = vmatpush1.msra.mxu0 %v2206
        %2699 = vmatprep.subr.mxu0 0.0
        %2700 = vmatpush1.msra.mxu0 0.0
        %2701 = vmatprep.subr.mxu0 0.0
        %2702 = vmatpush1.msra.mxu0 0.0
        %2703 = vmatprep.subr.mxu0 0.0
        %2704 = vmatpush1.msra.mxu0 0.0
        %2705 = vmatprep.subr.mxu0 0.0
        %2706 = vmatpush1.msra.mxu0 0.0
        %2707 = vmatprep.subr.mxu0 0.0
        %2708 = vmatpush1.msra.mxu0 0.0
        %2709 = vmatprep.subr.mxu0 0.0
        %2710 = vmatpush1.msra.mxu0 0.0
        %2711 = vmatprep.subr.mxu0 0.0
        %2712 = vmatpush1.msra.mxu0 0.0
        %2713 = vmatprep.subr.mxu0 0.0
        %2714 = vmatpush1.msra.mxu0 0.0
        %2715 = vmatprep.subr.mxu0 0.0
        %2716 = vmatpush1.msra.mxu0 0.0
        %2717 = vmatprep.subr.mxu0 0.0
        %2718 = vmatpush1.msra.mxu0 0.0
        %2719 = vmatprep.subr.mxu0 0.0
        %2720 = vmatpush1.msra.mxu0 0.0
        %2721 = vmatprep.subr.mxu0 0.0
        %2722 = vmatpush1.msra.mxu0 0.0
        %2723 = vmatprep.subr.mxu0 0.0
        %2724 = vmatpush1.msra.mxu0 0.0
        %2725 = vmatprep.subr.mxu0 0.0
        %2726 = vmatpush1.msra.mxu0 0.0
        %2727 = vmatprep.subr.mxu0 0.0
        %2728 = vmatpush1.msra.mxu0 0.0
        %2729 = vmatprep.subr.mxu0 0.0
        %2730 = vmatpush1.msra.mxu0 0.0
        %2731 = vmatprep.subr.mxu0 0.0
        %2732 = vmatpush1.msra.mxu0 0.0
        %2733 = vmatprep.subr.mxu0 0.0
        %2734 = vmatpush1.msra.mxu0 0.0
        %2735 = vmatprep.subr.mxu0 0.0
        %2736 = vmatpush1.msra.mxu0 0.0
        %2737 = vmatprep.subr.mxu0 0.0
        %2738 = vmatpush1.msra.mxu0 0.0
        %2739 = vmatprep.subr.mxu0 0.0
        %2740 = vmatpush1.msra.mxu0 0.0
        %2741 = vmatprep.subr.mxu0 0.0
        %2742 = vmatpush1.msra.mxu0 0.0
        %2743 = vmatprep.subr.mxu0 0.0
        %2744 = vmatpush1.msra.mxu0 0.0
        %2745 = vmatprep.subr.mxu0 0.0
        %2746 = vmatpush1.msra.mxu0 0.0
        %2747 = vmatprep.subr.mxu0 0.0
        %2748 = vmatpush1.msra.mxu0 0.0
        %2749 = vmatprep.subr.mxu0 0.0
        %2750 = vmatpush1.msra.mxu0 0.0
        %2751 = vmatprep.subr.mxu0 0.0
        %2752 = vmatpush1.msra.mxu0 0.0
        %2753 = vmatprep.subr.mxu0 0.0
        %2754 = vmatpush1.msra.mxu0 0.0
        %2755 = vmatprep.mubr.f32.mxu0 0.0
        %2756 = vmatmul.mubr.f32.gmra.mrb[0].mxu0 %v2591
        %v2757 = vpop.f32.mrb[0].mxu0
        %v2758 = vadd.f32 %v2385, %v2757
        %v2759 = vpop.f32.mrb[0].mxu0
        %v2760 = vadd.f32 %v2387, %v2759
        %2761 = vmatprep.mubr.f32.mxu0 0.0
        %2762 = vmatmul.mubr.f32.gmra.mrb[0].mxu0 %v2594
        %v2763 = vpop.f32.mrb[0].mxu0
        %v2764 = vadd.f32 %v2391, %v2763
        %v2765 = vpop.f32.mrb[0].mxu0
        %v2766 = vadd.f32 %v2393, %v2765
        %2767 = vmatprep.mubr.f32.mxu0 0.0
        %2768 = vmatmul.mubr.f32.gmra.mrb[0].mxu0 %v2597
        %v2769 = vpop.f32.mrb[0].mxu0
        %v2770 = vadd.f32 %v2397, %v2769
        %v2771 = vpop.f32.mrb[0].mxu0
        %v2772 = vadd.f32 %v2399, %v2771
        %2773 = vmatprep.mubr.f32.mxu0 0.0
        %2774 = vmatmul.mubr.f32.gmra.mrb[0].mxu0 %v2600
        %v2775 = vpop.f32.mrb[0].mxu0
        %v2776 = vadd.f32 %v2403, %v2775
        %v2777 = vpop.f32.mrb[0].mxu0
        %v2778 = vadd.f32 %v2405, %v2777
        %2779 = vdwg.mxu0
        %2780 = vmatprep.subr.mxu0 %v2185
        %2781 = vmatpush1.msra.mxu0 %v2184
        %2782 = vmatprep.subr.mxu0 %v2193
        %2783 = vmatpush1.msra.mxu0 %v2192
        %2784 = vmatprep.subr.mxu0 %v2201
        %2785 = vmatpush1.msra.mxu0 %v2200
        %2786 = vmatprep.subr.mxu0 %v2209
        %2787 = vmatpush1.msra.mxu0 %v2208
        %2788 = vmatprep.subr.mxu0 0.0
        %2789 = vmatpush1.msra.mxu0 0.0
        %2790 = vmatprep.subr.mxu0 0.0
        %2791 = vmatpush1.msra.mxu0 0.0
        %2792 = vmatprep.subr.mxu0 0.0
        %2793 = vmatpush1.msra.mxu0 0.0
        %2794 = vmatprep.subr.mxu0 0.0
        %2795 = vmatpush1.msra.mxu0 0.0
        %2796 = vmatprep.subr.mxu0 0.0
        %2797 = vmatpush1.msra.mxu0 0.0
        %2798 = vmatprep.subr.mxu0 0.0
        %2799 = vmatpush1.msra.mxu0 0.0
        %2800 = vmatprep.subr.mxu0 0.0
        %2801 = vmatpush1.msra.mxu0 0.0
        %2802 = vmatprep.subr.mxu0 0.0
        %2803 = vmatpush1.msra.mxu0 0.0
        %2804 = vmatprep.subr.mxu0 0.0
        %2805 = vmatpush1.msra.mxu0 0.0
        %2806 = vmatprep.subr.mxu0 0.0
        %2807 = vmatpush1.msra.mxu0 0.0
        %2808 = vmatprep.subr.mxu0 0.0
        %2809 = vmatpush1.msra.mxu0 0.0
        %2810 = vmatprep.subr.mxu0 0.0
        %2811 = vmatpush1.msra.mxu0 0.0
        %2812 = vmatprep.subr.mxu0 0.0
        %2813 = vmatpush1.msra.mxu0 0.0
        %2814 = vmatprep.subr.mxu0 0.0
        %2815 = vmatpush1.msra.mxu0 0.0
        %2816 = vmatprep.subr.mxu0 0.0
        %2817 = vmatpush1.msra.mxu0 0.0
        %2818 = vmatprep.subr.mxu0 0.0
        %2819 = vmatpush1.msra.mxu0 0.0
        %2820 = vmatprep.subr.mxu0 0.0
        %2821 = vmatpush1.msra.mxu0 0.0
        %2822 = vmatprep.subr.mxu0 0.0
        %2823 = vmatpush1.msra.mxu0 0.0
        %2824 = vmatprep.subr.mxu0 0.0
        %2825 = vmatpush1.msra.mxu0 0.0
        %2826 = vmatprep.subr.mxu0 0.0
        %2827 = vmatpush1.msra.mxu0 0.0
        %2828 = vmatprep.subr.mxu0 0.0
        %2829 = vmatpush1.msra.mxu0 0.0
        %2830 = vmatprep.subr.mxu0 0.0
        %2831 = vmatpush1.msra.mxu0 0.0
        %2832 = vmatprep.subr.mxu0 0.0
        %2833 = vmatpush1.msra.mxu0 0.0
        %2834 = vmatprep.subr.mxu0 0.0
        %2835 = vmatpush1.msra.mxu0 0.0
        %2836 = vmatprep.subr.mxu0 0.0
        %2837 = vmatpush1.msra.mxu0 0.0
        %2838 = vmatprep.subr.mxu0 0.0
        %2839 = vmatpush1.msra.mxu0 0.0
        %2840 = vmatprep.subr.mxu0 0.0
        %2841 = vmatpush1.msra.mxu0 0.0
        %2842 = vmatprep.subr.mxu0 0.0
        %2843 = vmatpush1.msra.mxu0 0.0
        %2844 = vmatprep.mubr.f32.mxu0 0.0
        %2845 = vmatmul.mubr.f32.gmra.mrb[0].mxu0 %v2591
        %v2846 = vpop.f32.mrb[0].mxu0
        %v2847 = vadd.f32 %v2474, %v2846
        %v2848 = vpop.f32.mrb[0].mxu0
        %v2849 = vadd.f32 %v2476, %v2848
        %2850 = vmatprep.mubr.f32.mxu0 0.0
        %2851 = vmatmul.mubr.f32.gmra.mrb[0].mxu0 %v2594
        %v2852 = vpop.f32.mrb[0].mxu0
        %v2853 = vadd.f32 %v2480, %v2852
        %v2854 = vpop.f32.mrb[0].mxu0
        %v2855 = vadd.f32 %v2482, %v2854
        %2856 = vmatprep.mubr.f32.mxu0 0.0
        %2857 = vmatmul.mubr.f32.gmra.mrb[0].mxu0 %v2597
        %v2858 = vpop.f32.mrb[0].mxu0
        %v2859 = vadd.f32 %v2486, %v2858
        %v2860 = vpop.f32.mrb[0].mxu0
        %v2861 = vadd.f32 %v2488, %v2860
        %2862 = vmatprep.mubr.f32.mxu0 0.0
        %2863 = vmatmul.mubr.f32.gmra.mrb[0].mxu0 %v2600
        %v2864 = vpop.f32.mrb[0].mxu0
        %v2865 = vadd.f32 %v2492, %v2864
        %v2866 = vpop.f32.mrb[0].mxu0
        %v2867 = vadd.f32 %v2494, %v2866
        %2868 = vdwg.mxu0
        %2869 = vmatprep.subr.mxu0 %v2187
        %2870 = vmatpush1.msra.mxu0 %v2186
        %2871 = vmatprep.subr.mxu0 %v2195
        %2872 = vmatpush1.msra.mxu0 %v2194
        %2873 = vmatprep.subr.mxu0 %v2203
        %2874 = vmatpush1.msra.mxu0 %v2202
        %2875 = vmatprep.subr.mxu0 %v2211
        %2876 = vmatpush1.msra.mxu0 %v2210
        %2877 = vmatprep.subr.mxu0 0.0
        %2878 = vmatpush1.msra.mxu0 0.0
        %2879 = vmatprep.subr.mxu0 0.0
        %2880 = vmatpush1.msra.mxu0 0.0
        %2881 = vmatprep.subr.mxu0 0.0
        %2882 = vmatpush1.msra.mxu0 0.0
        %2883 = vmatprep.subr.mxu0 0.0
        %2884 = vmatpush1.msra.mxu0 0.0
        %2885 = vmatprep.subr.mxu0 0.0
        %2886 = vmatpush1.msra.mxu0 0.0
        %2887 = vmatprep.subr.mxu0 0.0
        %2888 = vmatpush1.msra.mxu0 0.0
        %2889 = vmatprep.subr.mxu0 0.0
        %2890 = vmatpush1.msra.mxu0 0.0
        %2891 = vmatprep.subr.mxu0 0.0
        %2892 = vmatpush1.msra.mxu0 0.0
        %2893 = vmatprep.subr.mxu0 0.0
        %2894 = vmatpush1.msra.mxu0 0.0
        %2895 = vmatprep.subr.mxu0 0.0
        %2896 = vmatpush1.msra.mxu0 0.0
        %2897 = vmatprep.subr.mxu0 0.0
        %2898 = vmatpush1.msra.mxu0 0.0
        %2899 = vmatprep.subr.mxu0 0.0
        %2900 = vmatpush1.msra.mxu0 0.0
        %2901 = vmatprep.subr.mxu0 0.0
        %2902 = vmatpush1.msra.mxu0 0.0
        %2903 = vmatprep.subr.mxu0 0.0
        %2904 = vmatpush1.msra.mxu0 0.0
        %2905 = vmatprep.subr.mxu0 0.0
        %2906 = vmatpush1.msra.mxu0 0.0
        %2907 = vmatprep.subr.mxu0 0.0
        %2908 = vmatpush1.msra.mxu0 0.0
        %2909 = vmatprep.subr.mxu0 0.0
        %2910 = vmatpush1.msra.mxu0 0.0
        %2911 = vmatprep.subr.mxu0 0.0
        %2912 = vmatpush1.msra.mxu0 0.0
        %2913 = vmatprep.subr.mxu0 0.0
        %2914 = vmatpush1.msra.mxu0 0.0
        %2915 = vmatprep.subr.mxu0 0.0
        %2916 = vmatpush1.msra.mxu0 0.0
        %2917 = vmatprep.subr.mxu0 0.0
        %2918 = vmatpush1.msra.mxu0 0.0
        %2919 = vmatprep.subr.mxu0 0.0
        %2920 = vmatpush1.msra.mxu0 0.0
        %2921 = vmatprep.subr.mxu0 0.0
        %2922 = vmatpush1.msra.mxu0 0.0
        %2923 = vmatprep.subr.mxu0 0.0
        %2924 = vmatpush1.msra.mxu0 0.0
        %2925 = vmatprep.subr.mxu0 0.0
        %2926 = vmatpush1.msra.mxu0 0.0
        %2927 = vmatprep.subr.mxu0 0.0
        %2928 = vmatpush1.msra.mxu0 0.0
        %2929 = vmatprep.subr.mxu0 0.0
        %2930 = vmatpush1.msra.mxu0 0.0
        %2931 = vmatprep.subr.mxu0 0.0
        %2932 = vmatpush1.msra.mxu0 0.0
        %2933 = vmatprep.mubr.f32.mxu0 0.0
        %2934 = vmatmul.mubr.f32.gmra.mrb[0].mxu0 %v2591
        %v2935 = vpop.f32.mrb[0].mxu0
        %v2936 = vadd.f32 %v2563, %v2935
        %v2937 = vpop.f32.mrb[0].mxu0
        %v2938 = vadd.f32 %v2565, %v2937
        %2939 = vmatprep.mubr.f32.mxu0 0.0
        %2940 = vmatmul.mubr.f32.gmra.mrb[0].mxu0 %v2594
        %v2941 = vpop.f32.mrb[0].mxu0
        %v2942 = vadd.f32 %v2569, %v2941
        %v2943 = vpop.f32.mrb[0].mxu0
        %v2944 = vadd.f32 %v2571, %v2943
        %2945 = vmatprep.mubr.f32.mxu0 0.0
        %2946 = vmatmul.mubr.f32.gmra.mrb[0].mxu0 %v2597
        %v2947 = vpop.f32.mrb[0].mxu0
        %v2948 = vadd.f32 %v2575, %v2947
        %v2949 = vpop.f32.mrb[0].mxu0
        %v2950 = vadd.f32 %v2577, %v2949
        %2951 = vmatprep.mubr.f32.mxu0 0.0
        %2952 = vmatmul.mubr.f32.gmra.mrb[0].mxu0 %v2600
        %v2953 = vpop.f32.mrb[0].mxu0
        %v2954 = vadd.f32 %v2581, %v2953
        %v2955 = vpop.f32.mrb[0].mxu0
        %v2956 = vadd.f32 %v2583, %v2955
        %2957 = vdwg.mxu0
        %v2958 = vmax.f32 %v2669, 0.0
        %v2959 = vmax.f32 %v2671, 0.0
        %v2960 = vmax.f32 %v2758, 0.0
        %v2961 = vmax.f32 %v2760, 0.0
        %v2962 = vmax.f32 %v2847, 0.0
        %v2963 = vmax.f32 %v2849, 0.0
        %v2964 = vmax.f32 %v2936, 0.0
        %v2965 = vmax.f32 %v2938, 0.0
        %v2966 = vmax.f32 %v2675, 0.0
        %v2967 = vmax.f32 %v2677, 0.0
        %v2968 = vmax.f32 %v2764, 0.0
        %v2969 = vmax.f32 %v2766, 0.0
        %v2970 = vmax.f32 %v2853, 0.0
        %v2971 = vmax.f32 %v2855, 0.0
        %v2972 = vmax.f32 %v2942, 0.0
        %v2973 = vmax.f32 %v2944, 0.0
        %v2974 = vmax.f32 %v2681, 0.0
        %v2975 = vmax.f32 %v2683, 0.0
        %v2976 = vmax.f32 %v2770, 0.0
        %v2977 = vmax.f32 %v2772, 0.0
        %v2978 = vmax.f32 %v2859, 0.0
        %v2979 = vmax.f32 %v2861, 0.0
        %v2980 = vmax.f32 %v2948, 0.0
        %v2981 = vmax.f32 %v2950, 0.0
        %v2982 = vmax.f32 %v2687, 0.0
        %v2983 = vmax.f32 %v2689, 0.0
        %v2984 = vmax.f32 %v2776, 0.0
        %v2985 = vmax.f32 %v2778, 0.0
        %v2986 = vmax.f32 %v2865, 0.0
        %v2987 = vmax.f32 %v2867, 0.0
        %v2988 = vmax.f32 %v2954, 0.0
        %v2989 = vmax.f32 %v2956, 0.0
        %v2990 = vld [vmem:[%s3] sm:$0xff]
        %v2991 = vld [vmem:[%s4] sm:$0xff]
        %v2993 = vsel %vm255, %v2991, 0
        %2995 = vmatprep.subr.mxu0 %v244
        %2996 = vmatpush1.msra.mxu0 %v243
        %2997 = vmatprep.subr.mxu0 0.0
        %2998 = vmatpush1.msra.mxu0 0.0
        %2999 = vmatprep.subr.mxu0 0.0
        %3000 = vmatpush1.msra.mxu0 0.0
        %3001 = vmatprep.subr.mxu0 0.0
        %3002 = vmatpush1.msra.mxu0 0.0
        %3003 = vmatprep.subr.mxu0 0.0
        %3004 = vmatpush1.msra.mxu0 0.0
        %3005 = vmatprep.subr.mxu0 0.0
        %3006 = vmatpush1.msra.mxu0 0.0
        %3007 = vmatprep.subr.mxu0 0.0
        %3008 = vmatpush1.msra.mxu0 0.0
        %3009 = vmatprep.subr.mxu0 0.0
        %3010 = vmatpush1.msra.mxu0 0.0
        %3011 = vmatprep.subr.mxu0 0.0
        %3012 = vmatpush1.msra.mxu0 0.0
        %3013 = vmatprep.subr.mxu0 0.0
        %3014 = vmatpush1.msra.mxu0 0.0
        %3015 = vmatprep.subr.mxu0 0.0
        %3016 = vmatpush1.msra.mxu0 0.0
        %3017 = vmatprep.subr.mxu0 0.0
        %3018 = vmatpush1.msra.mxu0 0.0
        %3019 = vmatprep.subr.mxu0 0.0
        %3020 = vmatpush1.msra.mxu0 0.0
        %3021 = vmatprep.subr.mxu0 0.0
        %3022 = vmatpush1.msra.mxu0 0.0
        %3023 = vmatprep.subr.mxu0 0.0
        %3024 = vmatpush1.msra.mxu0 0.0
        %3025 = vmatprep.subr.mxu0 0.0
        %3026 = vmatpush1.msra.mxu0 0.0
        %3027 = vmatprep.subr.mxu0 0.0
        %3028 = vmatpush1.msra.mxu0 0.0
        %3029 = vmatprep.subr.mxu0 0.0
        %3030 = vmatpush1.msra.mxu0 0.0
        %3031 = vmatprep.subr.mxu0 0.0
        %3032 = vmatpush1.msra.mxu0 0.0
        %3033 = vmatprep.subr.mxu0 0.0
        %3034 = vmatpush1.msra.mxu0 0.0
        %3035 = vmatprep.subr.mxu0 0.0
        %3036 = vmatpush1.msra.mxu0 0.0
        %3037 = vmatprep.subr.mxu0 0.0
        %3038 = vmatpush1.msra.mxu0 0.0
        %3039 = vmatprep.subr.mxu0 0.0
        %3040 = vmatpush1.msra.mxu0 0.0
        %3041 = vmatprep.subr.mxu0 0.0
        %3042 = vmatpush1.msra.mxu0 0.0
        %3043 = vmatprep.subr.mxu0 0.0
        %3044 = vmatpush1.msra.mxu0 0.0
        %3045 = vmatprep.subr.mxu0 0.0
        %3046 = vmatpush1.msra.mxu0 0.0
        %3047 = vmatprep.subr.mxu0 0.0
        %3048 = vmatpush1.msra.mxu0 0.0
        %3049 = vmatprep.subr.mxu0 0.0
        %3050 = vmatpush1.msra.mxu0 0.0
        %3051 = vmatprep.subr.mxu0 0.0
        %3052 = vmatpush1.msra.mxu0 0.0
        %3053 = vmatprep.subr.mxu0 0.0
        %3054 = vmatpush1.msra.mxu0 0.0
        %3055 = vmatprep.subr.mxu0 0.0
        %3056 = vmatpush1.msra.mxu0 0.0
        %3057 = vmatprep.subr.mxu0 0.0
        %3058 = vmatpush1.msra.mxu0 0.0
        %3059 = vmatprep.mubr.f32.mxu0 0.0
        %3060 = vmatmul.mubr.f32.gmra.mrb[0].mxu0 %v2993
        %v3061 = vpop.f32.mrb[0].mxu0
        %v3062 = vadd.f32 0.0, %v3061
        %v3063 = vpop.f32.mrb[0].mxu0
        %v3064 = vadd.f32 0.0, %v3063
        %3065 = vdwg.mxu0
        %3066 = vmatprep.subr.mxu0 %v246
        %3067 = vmatpush1.msra.mxu0 %v245
        %3068 = vmatprep.subr.mxu0 0.0
        %3069 = vmatpush1.msra.mxu0 0.0
        %3070 = vmatprep.subr.mxu0 0.0
        %3071 = vmatpush1.msra.mxu0 0.0
        %3072 = vmatprep.subr.mxu0 0.0
        %3073 = vmatpush1.msra.mxu0 0.0
        %3074 = vmatprep.subr.mxu0 0.0
        %3075 = vmatpush1.msra.mxu0 0.0
        %3076 = vmatprep.subr.mxu0 0.0
        %3077 = vmatpush1.msra.mxu0 0.0
        %3078 = vmatprep.subr.mxu0 0.0
        %3079 = vmatpush1.msra.mxu0 0.0
        %3080 = vmatprep.subr.mxu0 0.0
        %3081 = vmatpush1.msra.mxu0 0.0
        %3082 = vmatprep.subr.mxu0 0.0
        %3083 = vmatpush1.msra.mxu0 0.0
        %3084 = vmatprep.subr.mxu0 0.0
        %3085 = vmatpush1.msra.mxu0 0.0
        %3086 = vmatprep.subr.mxu0 0.0
        %3087 = vmatpush1.msra.mxu0 0.0
        %3088 = vmatprep.subr.mxu0 0.0
        %3089 = vmatpush1.msra.mxu0 0.0
        %3090 = vmatprep.subr.mxu0 0.0
        %3091 = vmatpush1.msra.mxu0 0.0
        %3092 = vmatprep.subr.mxu0 0.0
        %3093 = vmatpush1.msra.mxu0 0.0
        %3094 = vmatprep.subr.mxu0 0.0
        %3095 = vmatpush1.msra.mxu0 0.0
        %3096 = vmatprep.subr.mxu0 0.0
        %3097 = vmatpush1.msra.mxu0 0.0
        %3098 = vmatprep.subr.mxu0 0.0
        %3099 = vmatpush1.msra.mxu0 0.0
        %3100 = vmatprep.subr.mxu0 0.0
        %3101 = vmatpush1.msra.mxu0 0.0
        %3102 = vmatprep.subr.mxu0 0.0
        %3103 = vmatpush1.msra.mxu0 0.0
        %3104 = vmatprep.subr.mxu0 0.0
        %3105 = vmatpush1.msra.mxu0 0.0
        %3106 = vmatprep.subr.mxu0 0.0
        %3107 = vmatpush1.msra.mxu0 0.0
        %3108 = vmatprep.subr.mxu0 0.0
        %3109 = vmatpush1.msra.mxu0 0.0
        %3110 = vmatprep.subr.mxu0 0.0
        %3111 = vmatpush1.msra.mxu0 0.0
        %3112 = vmatprep.subr.mxu0 0.0
        %3113 = vmatpush1.msra.mxu0 0.0
        %3114 = vmatprep.subr.mxu0 0.0
        %3115 = vmatpush1.msra.mxu0 0.0
        %3116 = vmatprep.subr.mxu0 0.0
        %3117 = vmatpush1.msra.mxu0 0.0
        %3118 = vmatprep.subr.mxu0 0.0
        %3119 = vmatpush1.msra.mxu0 0.0
        %3120 = vmatprep.subr.mxu0 0.0
        %3121 = vmatpush1.msra.mxu0 0.0
        %3122 = vmatprep.subr.mxu0 0.0
        %3123 = vmatpush1.msra.mxu0 0.0
        %3124 = vmatprep.subr.mxu0 0.0
        %3125 = vmatpush1.msra.mxu0 0.0
        %3126 = vmatprep.subr.mxu0 0.0
        %3127 = vmatpush1.msra.mxu0 0.0
        %3128 = vmatprep.subr.mxu0 0.0
        %3129 = vmatpush1.msra.mxu0 0.0
        %3130 = vmatprep.mubr.f32.mxu0 0.0
        %3131 = vmatmul.mubr.f32.gmra.mrb[0].mxu0 %v2993
        %v3132 = vpop.f32.mrb[0].mxu0
        %v3133 = vadd.f32 0.0, %v3132
        %v3134 = vpop.f32.mrb[0].mxu0
        %v3135 = vadd.f32 0.0, %v3134
        %3136 = vdwg.mxu0
        %3137 = vmatprep.subr.mxu0 %v248
        %3138 = vmatpush1.msra.mxu0 %v247
        %3139 = vmatprep.subr.mxu0 0.0
        %3140 = vmatpush1.msra.mxu0 0.0
        %3141 = vmatprep.subr.mxu0 0.0
        %3142 = vmatpush1.msra.mxu0 0.0
        %3143 = vmatprep.subr.mxu0 0.0
        %3144 = vmatpush1.msra.mxu0 0.0
        %3145 = vmatprep.subr.mxu0 0.0
        %3146 = vmatpush1.msra.mxu0 0.0
        %3147 = vmatprep.subr.mxu0 0.0
        %3148 = vmatpush1.msra.mxu0 0.0
        %3149 = vmatprep.subr.mxu0 0.0
        %3150 = vmatpush1.msra.mxu0 0.0
        %3151 = vmatprep.subr.mxu0 0.0
        %3152 = vmatpush1.msra.mxu0 0.0
        %3153 = vmatprep.subr.mxu0 0.0
        %3154 = vmatpush1.msra.mxu0 0.0
        %3155 = vmatprep.subr.mxu0 0.0
        %3156 = vmatpush1.msra.mxu0 0.0
        %3157 = vmatprep.subr.mxu0 0.0
        %3158 = vmatpush1.msra.mxu0 0.0
        %3159 = vmatprep.subr.mxu0 0.0
        %3160 = vmatpush1.msra.mxu0 0.0
        %3161 = vmatprep.subr.mxu0 0.0
        %3162 = vmatpush1.msra.mxu0 0.0
        %3163 = vmatprep.subr.mxu0 0.0
        %3164 = vmatpush1.msra.mxu0 0.0
        %3165 = vmatprep.subr.mxu0 0.0
        %3166 = vmatpush1.msra.mxu0 0.0
        %3167 = vmatprep.subr.mxu0 0.0
        %3168 = vmatpush1.msra.mxu0 0.0
        %3169 = vmatprep.subr.mxu0 0.0
        %3170 = vmatpush1.msra.mxu0 0.0
        %3171 = vmatprep.subr.mxu0 0.0
        %3172 = vmatpush1.msra.mxu0 0.0
        %3173 = vmatprep.subr.mxu0 0.0
        %3174 = vmatpush1.msra.mxu0 0.0
        %3175 = vmatprep.subr.mxu0 0.0
        %3176 = vmatpush1.msra.mxu0 0.0
        %3177 = vmatprep.subr.mxu0 0.0
        %3178 = vmatpush1.msra.mxu0 0.0
        %3179 = vmatprep.subr.mxu0 0.0
        %3180 = vmatpush1.msra.mxu0 0.0
        %3181 = vmatprep.subr.mxu0 0.0
        %3182 = vmatpush1.msra.mxu0 0.0
        %3183 = vmatprep.subr.mxu0 0.0
        %3184 = vmatpush1.msra.mxu0 0.0
        %3185 = vmatprep.subr.mxu0 0.0
        %3186 = vmatpush1.msra.mxu0 0.0
        %3187 = vmatprep.subr.mxu0 0.0
        %3188 = vmatpush1.msra.mxu0 0.0
        %3189 = vmatprep.subr.mxu0 0.0
        %3190 = vmatpush1.msra.mxu0 0.0
        %3191 = vmatprep.subr.mxu0 0.0
        %3192 = vmatpush1.msra.mxu0 0.0
        %3193 = vmatprep.subr.mxu0 0.0
        %3194 = vmatpush1.msra.mxu0 0.0
        %3195 = vmatprep.subr.mxu0 0.0
        %3196 = vmatpush1.msra.mxu0 0.0
        %3197 = vmatprep.subr.mxu0 0.0
        %3198 = vmatpush1.msra.mxu0 0.0
        %3199 = vmatprep.subr.mxu0 0.0
        %3200 = vmatpush1.msra.mxu0 0.0
        %3201 = vmatprep.mubr.f32.mxu0 0.0
        %3202 = vmatmul.mubr.f32.gmra.mrb[0].mxu0 %v2993
        %v3203 = vpop.f32.mrb[0].mxu0
        %v3204 = vadd.f32 0.0, %v3203
        %v3205 = vpop.f32.mrb[0].mxu0
        %v3206 = vadd.f32 0.0, %v3205
        %3207 = vdwg.mxu0
        %3208 = vmatprep.subr.mxu0 %v250
        %3209 = vmatpush1.msra.mxu0 %v249
        %3210 = vmatprep.subr.mxu0 0.0
        %3211 = vmatpush1.msra.mxu0 0.0
        %3212 = vmatprep.subr.mxu0 0.0
        %3213 = vmatpush1.msra.mxu0 0.0
        %3214 = vmatprep.subr.mxu0 0.0
        %3215 = vmatpush1.msra.mxu0 0.0
        %3216 = vmatprep.subr.mxu0 0.0
        %3217 = vmatpush1.msra.mxu0 0.0
        %3218 = vmatprep.subr.mxu0 0.0
        %3219 = vmatpush1.msra.mxu0 0.0
        %3220 = vmatprep.subr.mxu0 0.0
        %3221 = vmatpush1.msra.mxu0 0.0
        %3222 = vmatprep.subr.mxu0 0.0
        %3223 = vmatpush1.msra.mxu0 0.0
        %3224 = vmatprep.subr.mxu0 0.0
        %3225 = vmatpush1.msra.mxu0 0.0
        %3226 = vmatprep.subr.mxu0 0.0
        %3227 = vmatpush1.msra.mxu0 0.0
        %3228 = vmatprep.subr.mxu0 0.0
        %3229 = vmatpush1.msra.mxu0 0.0
        %3230 = vmatprep.subr.mxu0 0.0
        %3231 = vmatpush1.msra.mxu0 0.0
        %3232 = vmatprep.subr.mxu0 0.0
        %3233 = vmatpush1.msra.mxu0 0.0
        %3234 = vmatprep.subr.mxu0 0.0
        %3235 = vmatpush1.msra.mxu0 0.0
        %3236 = vmatprep.subr.mxu0 0.0
        %3237 = vmatpush1.msra.mxu0 0.0
        %3238 = vmatprep.subr.mxu0 0.0
        %3239 = vmatpush1.msra.mxu0 0.0
        %3240 = vmatprep.subr.mxu0 0.0
        %3241 = vmatpush1.msra.mxu0 0.0
        %3242 = vmatprep.subr.mxu0 0.0
        %3243 = vmatpush1.msra.mxu0 0.0
        %3244 = vmatprep.subr.mxu0 0.0
        %3245 = vmatpush1.msra.mxu0 0.0
        %3246 = vmatprep.subr.mxu0 0.0
        %3247 = vmatpush1.msra.mxu0 0.0
        %3248 = vmatprep.subr.mxu0 0.0
        %3249 = vmatpush1.msra.mxu0 0.0
        %3250 = vmatprep.subr.mxu0 0.0
        %3251 = vmatpush1.msra.mxu0 0.0
        %3252 = vmatprep.subr.mxu0 0.0
        %3253 = vmatpush1.msra.mxu0 0.0
        %3254 = vmatprep.subr.mxu0 0.0
        %3255 = vmatpush1.msra.mxu0 0.0
        %3256 = vmatprep.subr.mxu0 0.0
        %3257 = vmatpush1.msra.mxu0 0.0
        %3258 = vmatprep.subr.mxu0 0.0
        %3259 = vmatpush1.msra.mxu0 0.0
        %3260 = vmatprep.subr.mxu0 0.0
        %3261 = vmatpush1.msra.mxu0 0.0
        %3262 = vmatprep.subr.mxu0 0.0
        %3263 = vmatpush1.msra.mxu0 0.0
        %3264 = vmatprep.subr.mxu0 0.0
        %3265 = vmatpush1.msra.mxu0 0.0
        %3266 = vmatprep.subr.mxu0 0.0
        %3267 = vmatpush1.msra.mxu0 0.0
        %3268 = vmatprep.subr.mxu0 0.0
        %3269 = vmatpush1.msra.mxu0 0.0
        %3270 = vmatprep.subr.mxu0 0.0
        %3271 = vmatpush1.msra.mxu0 0.0
        %3272 = vmatprep.mubr.f32.mxu0 0.0
        %3273 = vmatmul.mubr.f32.gmra.mrb[0].mxu0 %v2993
        %v3274 = vpop.f32.mrb[0].mxu0
        %v3275 = vadd.f32 0.0, %v3274
        %v3276 = vpop.f32.mrb[0].mxu0
        %v3277 = vadd.f32 0.0, %v3276
        %3278 = vdwg.mxu0
        %v3280 = vsel %vm1033, %v2990, 0
        %3282 = vmatprep.subr.mxu0 %v2959
        %3283 = vmatpush1.msra.mxu0 %v2958
        %3284 = vmatprep.subr.mxu0 %v2967
        %3285 = vmatpush1.msra.mxu0 %v2966
        %3286 = vmatprep.subr.mxu0 %v2975
        %3287 = vmatpush1.msra.mxu0 %v2974
        %3288 = vmatprep.subr.mxu0 %v2983
        %3289 = vmatpush1.msra.mxu0 %v2982
        %3290 = vmatprep.subr.mxu0 0.0
        %3291 = vmatpush1.msra.mxu0 0.0
        %3292 = vmatprep.subr.mxu0 0.0
        %3293 = vmatpush1.msra.mxu0 0.0
        %3294 = vmatprep.subr.mxu0 0.0
        %3295 = vmatpush1.msra.mxu0 0.0
        %3296 = vmatprep.subr.mxu0 0.0
        %3297 = vmatpush1.msra.mxu0 0.0
        %3298 = vmatprep.subr.mxu0 0.0
        %3299 = vmatpush1.msra.mxu0 0.0
        %3300 = vmatprep.subr.mxu0 0.0
        %3301 = vmatpush1.msra.mxu0 0.0
        %3302 = vmatprep.subr.mxu0 0.0
        %3303 = vmatpush1.msra.mxu0 0.0
        %3304 = vmatprep.subr.mxu0 0.0
        %3305 = vmatpush1.msra.mxu0 0.0
        %3306 = vmatprep.subr.mxu0 0.0
        %3307 = vmatpush1.msra.mxu0 0.0
        %3308 = vmatprep.subr.mxu0 0.0
        %3309 = vmatpush1.msra.mxu0 0.0
        %3310 = vmatprep.subr.mxu0 0.0
        %3311 = vmatpush1.msra.mxu0 0.0
        %3312 = vmatprep.subr.mxu0 0.0
        %3313 = vmatpush1.msra.mxu0 0.0
        %3314 = vmatprep.subr.mxu0 0.0
        %3315 = vmatpush1.msra.mxu0 0.0
        %3316 = vmatprep.subr.mxu0 0.0
        %3317 = vmatpush1.msra.mxu0 0.0
        %3318 = vmatprep.subr.mxu0 0.0
        %3319 = vmatpush1.msra.mxu0 0.0
        %3320 = vmatprep.subr.mxu0 0.0
        %3321 = vmatpush1.msra.mxu0 0.0
        %3322 = vmatprep.subr.mxu0 0.0
        %3323 = vmatpush1.msra.mxu0 0.0
        %3324 = vmatprep.subr.mxu0 0.0
        %3325 = vmatpush1.msra.mxu0 0.0
        %3326 = vmatprep.subr.mxu0 0.0
        %3327 = vmatpush1.msra.mxu0 0.0
        %3328 = vmatprep.subr.mxu0 0.0
        %3329 = vmatpush1.msra.mxu0 0.0
        %3330 = vmatprep.subr.mxu0 0.0
        %3331 = vmatpush1.msra.mxu0 0.0
        %3332 = vmatprep.subr.mxu0 0.0
        %3333 = vmatpush1.msra.mxu0 0.0
        %3334 = vmatprep.subr.mxu0 0.0
        %3335 = vmatpush1.msra.mxu0 0.0
        %3336 = vmatprep.subr.mxu0 0.0
        %3337 = vmatpush1.msra.mxu0 0.0
        %3338 = vmatprep.subr.mxu0 0.0
        %3339 = vmatpush1.msra.mxu0 0.0
        %3340 = vmatprep.subr.mxu0 0.0
        %3341 = vmatpush1.msra.mxu0 0.0
        %3342 = vmatprep.subr.mxu0 0.0
        %3343 = vmatpush1.msra.mxu0 0.0
        %3344 = vmatprep.subr.mxu0 0.0
        %3345 = vmatpush1.msra.mxu0 0.0
        %3346 = vmatprep.mubr.f32.mxu0 0.0
        %3347 = vmatmul.mubr.f32.gmra.mrb[0].mxu0 %v3280
        %v3348 = vpop.f32.mrb[0].mxu0
        %v3349 = vadd.f32 %v3062, %v3348
        %v3350 = vpop.f32.mrb[0].mxu0
        %v3351 = vadd.f32 %v3064, %v3350
        %3352 = vdwg.mxu0
        %3353 = vmatprep.subr.mxu0 %v2961
        %3354 = vmatpush1.msra.mxu0 %v2960
        %3355 = vmatprep.subr.mxu0 %v2969
        %3356 = vmatpush1.msra.mxu0 %v2968
        %3357 = vmatprep.subr.mxu0 %v2977
        %3358 = vmatpush1.msra.mxu0 %v2976
        %3359 = vmatprep.subr.mxu0 %v2985
        %3360 = vmatpush1.msra.mxu0 %v2984
        %3361 = vmatprep.subr.mxu0 0.0
        %3362 = vmatpush1.msra.mxu0 0.0
        %3363 = vmatprep.subr.mxu0 0.0
        %3364 = vmatpush1.msra.mxu0 0.0
        %3365 = vmatprep.subr.mxu0 0.0
        %3366 = vmatpush1.msra.mxu0 0.0
        %3367 = vmatprep.subr.mxu0 0.0
        %3368 = vmatpush1.msra.mxu0 0.0
        %3369 = vmatprep.subr.mxu0 0.0
        %3370 = vmatpush1.msra.mxu0 0.0
        %3371 = vmatprep.subr.mxu0 0.0
        %3372 = vmatpush1.msra.mxu0 0.0
        %3373 = vmatprep.subr.mxu0 0.0
        %3374 = vmatpush1.msra.mxu0 0.0
        %3375 = vmatprep.subr.mxu0 0.0
        %3376 = vmatpush1.msra.mxu0 0.0
        %3377 = vmatprep.subr.mxu0 0.0
        %3378 = vmatpush1.msra.mxu0 0.0
        %3379 = vmatprep.subr.mxu0 0.0
        %3380 = vmatpush1.msra.mxu0 0.0
        %3381 = vmatprep.subr.mxu0 0.0
        %3382 = vmatpush1.msra.mxu0 0.0
        %3383 = vmatprep.subr.mxu0 0.0
        %3384 = vmatpush1.msra.mxu0 0.0
        %3385 = vmatprep.subr.mxu0 0.0
        %3386 = vmatpush1.msra.mxu0 0.0
        %3387 = vmatprep.subr.mxu0 0.0
        %3388 = vmatpush1.msra.mxu0 0.0
        %3389 = vmatprep.subr.mxu0 0.0
        %3390 = vmatpush1.msra.mxu0 0.0
        %3391 = vmatprep.subr.mxu0 0.0
        %3392 = vmatpush1.msra.mxu0 0.0
        %3393 = vmatprep.subr.mxu0 0.0
        %3394 = vmatpush1.msra.mxu0 0.0
        %3395 = vmatprep.subr.mxu0 0.0
        %3396 = vmatpush1.msra.mxu0 0.0
        %3397 = vmatprep.subr.mxu0 0.0
        %3398 = vmatpush1.msra.mxu0 0.0
        %3399 = vmatprep.subr.mxu0 0.0
        %3400 = vmatpush1.msra.mxu0 0.0
        %3401 = vmatprep.subr.mxu0 0.0
        %3402 = vmatpush1.msra.mxu0 0.0
        %3403 = vmatprep.subr.mxu0 0.0
        %3404 = vmatpush1.msra.mxu0 0.0
        %3405 = vmatprep.subr.mxu0 0.0
        %3406 = vmatpush1.msra.mxu0 0.0
        %3407 = vmatprep.subr.mxu0 0.0
        %3408 = vmatpush1.msra.mxu0 0.0
        %3409 = vmatprep.subr.mxu0 0.0
        %3410 = vmatpush1.msra.mxu0 0.0
        %3411 = vmatprep.subr.mxu0 0.0
        %3412 = vmatpush1.msra.mxu0 0.0
        %3413 = vmatprep.subr.mxu0 0.0
        %3414 = vmatpush1.msra.mxu0 0.0
        %3415 = vmatprep.subr.mxu0 0.0
        %3416 = vmatpush1.msra.mxu0 0.0
        %3417 = vmatprep.mubr.f32.mxu0 0.0
        %3418 = vmatmul.mubr.f32.gmra.mrb[0].mxu0 %v3280
        %v3419 = vpop.f32.mrb[0].mxu0
        %v3420 = vadd.f32 %v3133, %v3419
        %v3421 = vpop.f32.mrb[0].mxu0
        %v3422 = vadd.f32 %v3135, %v3421
        %3423 = vdwg.mxu0
        %3424 = vmatprep.subr.mxu0 %v2963
        %3425 = vmatpush1.msra.mxu0 %v2962
        %3426 = vmatprep.subr.mxu0 %v2971
        %3427 = vmatpush1.msra.mxu0 %v2970
        %3428 = vmatprep.subr.mxu0 %v2979
        %3429 = vmatpush1.msra.mxu0 %v2978
        %3430 = vmatprep.subr.mxu0 %v2987
        %3431 = vmatpush1.msra.mxu0 %v2986
        %3432 = vmatprep.subr.mxu0 0.0
        %3433 = vmatpush1.msra.mxu0 0.0
        %3434 = vmatprep.subr.mxu0 0.0
        %3435 = vmatpush1.msra.mxu0 0.0
        %3436 = vmatprep.subr.mxu0 0.0
        %3437 = vmatpush1.msra.mxu0 0.0
        %3438 = vmatprep.subr.mxu0 0.0
        %3439 = vmatpush1.msra.mxu0 0.0
        %3440 = vmatprep.subr.mxu0 0.0
        %3441 = vmatpush1.msra.mxu0 0.0
        %3442 = vmatprep.subr.mxu0 0.0
        %3443 = vmatpush1.msra.mxu0 0.0
        %3444 = vmatprep.subr.mxu0 0.0
        %3445 = vmatpush1.msra.mxu0 0.0
        %3446 = vmatprep.subr.mxu0 0.0
        %3447 = vmatpush1.msra.mxu0 0.0
        %3448 = vmatprep.subr.mxu0 0.0
        %3449 = vmatpush1.msra.mxu0 0.0
        %3450 = vmatprep.subr.mxu0 0.0
        %3451 = vmatpush1.msra.mxu0 0.0
        %3452 = vmatprep.subr.mxu0 0.0
        %3453 = vmatpush1.msra.mxu0 0.0
        %3454 = vmatprep.subr.mxu0 0.0
        %3455 = vmatpush1.msra.mxu0 0.0
        %3456 = vmatprep.subr.mxu0 0.0
        %3457 = vmatpush1.msra.mxu0 0.0
        %3458 = vmatprep.subr.mxu0 0.0
        %3459 = vmatpush1.msra.mxu0 0.0
        %3460 = vmatprep.subr.mxu0 0.0
        %3461 = vmatpush1.msra.mxu0 0.0
        %3462 = vmatprep.subr.mxu0 0.0
        %3463 = vmatpush1.msra.mxu0 0.0
        %3464 = vmatprep.subr.mxu0 0.0
        %3465 = vmatpush1.msra.mxu0 0.0
        %3466 = vmatprep.subr.mxu0 0.0
        %3467 = vmatpush1.msra.mxu0 0.0
        %3468 = vmatprep.subr.mxu0 0.0
        %3469 = vmatpush1.msra.mxu0 0.0
        %3470 = vmatprep.subr.mxu0 0.0
        %3471 = vmatpush1.msra.mxu0 0.0
        %3472 = vmatprep.subr.mxu0 0.0
        %3473 = vmatpush1.msra.mxu0 0.0
        %3474 = vmatprep.subr.mxu0 0.0
        %3475 = vmatpush1.msra.mxu0 0.0
        %3476 = vmatprep.subr.mxu0 0.0
        %3477 = vmatpush1.msra.mxu0 0.0
        %3478 = vmatprep.subr.mxu0 0.0
        %3479 = vmatpush1.msra.mxu0 0.0
        %3480 = vmatprep.subr.mxu0 0.0
        %3481 = vmatpush1.msra.mxu0 0.0
        %3482 = vmatprep.subr.mxu0 0.0
        %3483 = vmatpush1.msra.mxu0 0.0
        %3484 = vmatprep.subr.mxu0 0.0
        %3485 = vmatpush1.msra.mxu0 0.0
        %3486 = vmatprep.subr.mxu0 0.0
        %3487 = vmatpush1.msra.mxu0 0.0
        %3488 = vmatprep.mubr.f32.mxu0 0.0
        %3489 = vmatmul.mubr.f32.gmra.mrb[0].mxu0 %v3280
        %v3490 = vpop.f32.mrb[0].mxu0
        %v3491 = vadd.f32 %v3204, %v3490
        %v3492 = vpop.f32.mrb[0].mxu0
        %v3493 = vadd.f32 %v3206, %v3492
        %3494 = vdwg.mxu0
        %3495 = vmatprep.subr.mxu0 %v2965
        %3496 = vmatpush1.msra.mxu0 %v2964
        %3497 = vmatprep.subr.mxu0 %v2973
        %3498 = vmatpush1.msra.mxu0 %v2972
        %3499 = vmatprep.subr.mxu0 %v2981
        %3500 = vmatpush1.msra.mxu0 %v2980
        %3501 = vmatprep.subr.mxu0 %v2989
        %3502 = vmatpush1.msra.mxu0 %v2988
        %3503 = vmatprep.subr.mxu0 0.0
        %3504 = vmatpush1.msra.mxu0 0.0
        %3505 = vmatprep.subr.mxu0 0.0
        %3506 = vmatpush1.msra.mxu0 0.0
        %3507 = vmatprep.subr.mxu0 0.0
        %3508 = vmatpush1.msra.mxu0 0.0
        %3509 = vmatprep.subr.mxu0 0.0
        %3510 = vmatpush1.msra.mxu0 0.0
        %3511 = vmatprep.subr.mxu0 0.0
        %3512 = vmatpush1.msra.mxu0 0.0
        %3513 = vmatprep.subr.mxu0 0.0
        %3514 = vmatpush1.msra.mxu0 0.0
        %3515 = vmatprep.subr.mxu0 0.0
        %3516 = vmatpush1.msra.mxu0 0.0
        %3517 = vmatprep.subr.mxu0 0.0
        %3518 = vmatpush1.msra.mxu0 0.0
        %3519 = vmatprep.subr.mxu0 0.0
        %3520 = vmatpush1.msra.mxu0 0.0
        %3521 = vmatprep.subr.mxu0 0.0
        %3522 = vmatpush1.msra.mxu0 0.0
        %3523 = vmatprep.subr.mxu0 0.0
        %3524 = vmatpush1.msra.mxu0 0.0
        %3525 = vmatprep.subr.mxu0 0.0
        %3526 = vmatpush1.msra.mxu0 0.0
        %3527 = vmatprep.subr.mxu0 0.0
        %3528 = vmatpush1.msra.mxu0 0.0
        %3529 = vmatprep.subr.mxu0 0.0
        %3530 = vmatpush1.msra.mxu0 0.0
        %3531 = vmatprep.subr.mxu0 0.0
        %3532 = vmatpush1.msra.mxu0 0.0
        %3533 = vmatprep.subr.mxu0 0.0
        %3534 = vmatpush1.msra.mxu0 0.0
        %3535 = vmatprep.subr.mxu0 0.0
        %3536 = vmatpush1.msra.mxu0 0.0
        %3537 = vmatprep.subr.mxu0 0.0
        %3538 = vmatpush1.msra.mxu0 0.0
        %3539 = vmatprep.subr.mxu0 0.0
        %3540 = vmatpush1.msra.mxu0 0.0
        %3541 = vmatprep.subr.mxu0 0.0
        %3542 = vmatpush1.msra.mxu0 0.0
        %3543 = vmatprep.subr.mxu0 0.0
        %3544 = vmatpush1.msra.mxu0 0.0
        %3545 = vmatprep.subr.mxu0 0.0
        %3546 = vmatpush1.msra.mxu0 0.0
        %3547 = vmatprep.subr.mxu0 0.0
        %3548 = vmatpush1.msra.mxu0 0.0
        %3549 = vmatprep.subr.mxu0 0.0
        %3550 = vmatpush1.msra.mxu0 0.0
        %3551 = vmatprep.subr.mxu0 0.0
        %3552 = vmatpush1.msra.mxu0 0.0
        %3553 = vmatprep.subr.mxu0 0.0
        %3554 = vmatpush1.msra.mxu0 0.0
        %3555 = vmatprep.subr.mxu0 0.0
        %3556 = vmatpush1.msra.mxu0 0.0
        %3557 = vmatprep.subr.mxu0 0.0
        %3558 = vmatpush1.msra.mxu0 0.0
        %3559 = vmatprep.mubr.f32.mxu0 0.0
        %3560 = vmatmul.mubr.f32.gmra.mrb[0].mxu0 %v3280
        %v3561 = vpop.f32.mrb[0].mxu0
        %v3562 = vadd.f32 %v3275, %v3561
        %v3563 = vpop.f32.mrb[0].mxu0
        %v3564 = vadd.f32 %v3277, %v3563
        %3565 = vdwg.mxu0
        %v3574 = vcombine.low %v3349, %v3351
        %v3575 = vcombine.low %v3420, %v3422
        %v3576 = vcombine.low %v3491, %v3493
        %v3577 = vcombine.low %v3562, %v3564
        %v3579 = vunpack.c.l.s4 1966171168
        %v3580 = vunpack.c.0.s8 %v3579
        %v3581 = vlaneseq
        %v3582 = vshrl.u32 %v3581, 7
        %v3583 = vsub.s32 %v3580, %v3582
        %v3584 = vrot.slane %v3574, %v3583
        %v3586 = vunpack.c.l.s4 1966171168
        %v3587 = vunpack.c.0.s8 %v3586
        %v3588 = vlaneseq
        %v3589 = vshrl.u32 %v3588, 7
        %v3590 = vsub.s32 %v3587, %v3589
        %v3591 = vrot.slane %v3575, %v3590
        %v3593 = vunpack.c.l.s4 1966171168
        %v3594 = vunpack.c.0.s8 %v3593
        %v3595 = vlaneseq
        %v3596 = vshrl.u32 %v3595, 7
        %v3597 = vsub.s32 %v3594, %v3596
        %v3598 = vrot.slane %v3576, %v3597
        %v3600 = vunpack.c.l.s4 1966171168
        %v3601 = vunpack.c.0.s8 %v3600
        %v3602 = vlaneseq
        %v3603 = vshrl.u32 %v3602, 7
        %v3604 = vsub.s32 %v3601, %v3603
        %v3605 = vrot.slane %v3577, %v3604
        %v3606 = vcombine.low %v3584, %v3591
        %v3607 = vcombine.low %v3598, %v3605
        %v3609 = vunpack.c.l.s4 1966171168
        %v3610 = vunpack.c.0.s8 %v3609
        %v3611 = vlaneseq
        %v3612 = vshrl.u32 %v3611, 7
        %v3613 = vsub.s32 %v3610, %v3612
        %v3614 = vrot.slane %v3606, %v3613
        %v3616 = vunpack.c.l.s4 1966171168
        %v3617 = vunpack.c.0.s8 %v3616
        %v3618 = vlaneseq
        %v3619 = vshrl.u32 %v3618, 7
        %v3620 = vsub.s32 %v3617, %v3619
        %v3621 = vrot.slane %v3607, %v3620
        %v3622 = vcombine.low %v3614, %v3621
        %3624 = vst [vmem:[%s240] sm:$0xff] %v3622
        %s3625 = sand.u32 %s140, 1
        %s3626 = scalar_lea.sflag [#allocation4], %s3625
        %s3627 = sand.u32 %s140, 1
        %s3628 = smul.addr %s3627, 8
        %s3629 = scalar_lea.vmem [#allocation5], %s3628
        // Predicated region
        $region45: #{tpu_custom_call.1} parent=39 // pred_check
          %p3630 = pneg %p150
        $region46: #{tpu_custom_call.1} parent=39 // pred_check_branch
          %3632 = sbr.rel (%p3630) target = $region48
        $region47: #{tpu_custom_call.1} parent=39 // pred_region
          %s3633 = smul.u32 8, %s22
          %s3635 = ssub.s32 128, 128
          %3636 = vsyncadd %s3626, %s3635
          %s3637 = smul.addr %s3633, 16
          %s3638 = scalar_lea.hbm %s5, %s3637
          %s3640 = sshll.u32 %s3629, 4
          %s3641 = int_to_ptr.vmem [resolvable:$true] %s3640
          %3643 = dma.vmem_to_hbm [thread:$0]  %s3641, 128, %s3638, %s3626
        $region48: #{tpu_custom_call.1} parent=39 // pred_fallthru
          _
      $region40: #{tpu_custom_call.1} parent=5 // pred_fallthru
        _
      %p3644 = scmp.le.s32.totalorder 2, %s17
      // Predicated region
      $region49: #{tpu_custom_call.1} parent=5 // pred_check
        %p3645 = pneg %p3644
      $region50: #{tpu_custom_call.1} parent=5 // pred_check_branch
        %3647 = sbr.rel (%p3645) target = $region52
      $region51: #{tpu_custom_call.1} parent=5 // pred_region
        %s3648 = ssub.s32 %s17, 2
        // Predicated region
        $region53: #{tpu_custom_call.1} parent=51 // pred_check
          %p3649 = pneg %p156
        $region54: #{tpu_custom_call.1} parent=51 // pred_check_branch
          %3651 = sbr.rel (%p3649) target = $region56
        $region55: #{tpu_custom_call.1} parent=51 // pred_region
          %s3652 = sand.u32 %s141, 1
          %s3653 = scalar_lea.sflag [#allocation4], %s3652
          %s3654 = sand.u32 %s141, 1
          %s3655 = smul.addr %s3654, 8
          %s3656 = scalar_lea.vmem [#allocation5], %s3655
          %3657 = dma.done %s3653, 128
        $region56: #{tpu_custom_call.1} parent=51 // pred_fallthru
          _
      $region52: #{tpu_custom_call.1} parent=5 // pred_fallthru
        _
    $region6: #{tpu_custom_call.1} parent=1 // loop_footer
      %s21 = sadd.s32 1, %s17
    $region7: #{tpu_custom_call.1} parent=1 // loop_footer_branch
      %16 = sbr.rel target = $region3
    $region8: #{tpu_custom_call.1} parent=1 // loop_exit
      _
    %3658 = vsyncpa [#allocation3], 1
    %s3659 = scalar_lea.sflag [#allocation3], 1
    %3660 = vsyncpa %s3659, 1
    %3661 = vsyncpa [#allocation4], 1
    %s3662 = scalar_lea.sflag [#allocation4], 1
    %3663 = vsyncpa %s3662, 1

</llo_original>
